<compile_context>
chip_gen: v7x
topology: tpu7x:2x2x1
jax: 0.10.0
libtpu: 0.0.40
codegen_flags: <defaults>
</compile_context>

<pallas_src>
import jax
import jax.numpy as jnp
from jax.experimental import pallas as pl
from jax.experimental.pallas import tpu as pltpu


def _tensorcores_per_chip():
    """Best-effort TC-per-chip detection: 2 on v7x, else 1 (collapsed grid)."""
    try:
        kind = jax.devices()[0].device_kind.lower()
        if "v7" in kind:
            return 2
    except Exception:
        pass
    return 1


# ---------------------------------------------------------------------------
# Fused forward: conv(3x3, pad 1) + bias + ReLU -> global-avg-pool + FC head
# ---------------------------------------------------------------------------
def cam_forward(x_nchw, params):
    N, C_in, H, W = x_nchw.shape
    HW = H * W
    C_feat = params["conv_w"].shape[-1]
    n_cls = params["fc_w"].shape[-1]

    WCI = W * C_in            # per-tap contraction depth (64 <= 128 MXU pass)
    WCF = W * C_feat          # lane-dense conv-output row width (512 = 4*128)
    Hp, Wp = H + 2, W + 2

    assert WCF % 128 == 0, "lane packing assumes (W * C_feat) % 128 == 0"

    # grid: 1 step on 1-TC chips (v5e/v6e), N steps (1 image each) on v7x.
    num_steps = _tensorcores_per_chip()
    if N % num_steps != 0:
        num_steps = 1
    IMG = N // num_steps

    # --- host-side prep: transpose + pad + contiguous reshape only ----------
    x_nhwc = jnp.transpose(x_nchw, (0, 2, 3, 1))                   # (N,H,W,Cin)
    xp = jnp.pad(x_nhwc, ((0, 0), (1, 1), (1, 1), (0, 0)))         # (N,H+2,W+2,Cin)
    xp2d = xp.reshape(N, Hp, Wp * C_in)                            # (N,18,72) f32

    # Per-tap block-diagonal conv weight: W copies of the (C_in,C_feat) tap
    # weight on the diagonal -> lane-dense output rows without in-kernel relayout.
    conv_w = params["conv_w"]                                      # (9*Cin, Cfeat)
    eye_w = jnp.eye(W, dtype=conv_w.dtype)
    wc_big = jnp.stack(
        [jnp.kron(eye_w, conv_w[t * C_in:(t + 1) * C_in, :]) for t in range(9)]
    ).astype(jnp.bfloat16)                                         # (9, WCI, WCF)
    bc_big = jnp.tile(params["conv_b"], (1, W))                    # (1, WCF) f32
    wf_big = jnp.tile(params["fc_w"], (W, 1)) / HW                 # (WCF, n_cls), 1/HW folded
    fc_b = params["fc_b"]                                          # (1, n_cls)

    def kernel(xp_ref, wc_ref, bc_ref, wf_ref, bf_ref, feat_ref, logit_ref):
        # xp_ref   : (IMG, H+2, (W+2)*C_in) f32   padded image(s)
        # wc_ref   : (9, W*C_in, W*C_feat)  bf16  per-tap block-diag conv weight
        # bc_ref   : (1, W*C_feat)          f32   conv bias tiled W x
        # wf_ref   : (W*C_feat, n_cls)      f32   FC weight tiled W x, /HW folded
        # bf_ref   : (1, n_cls)             f32   FC bias
        # feat_ref : (IMG, H, W*C_feat)     bf16  hooked activations (lane-dense)
        # logit_ref: (IMG, 1, n_cls)        f32   logits
        for img in range(IMG):                      # static unroll (<= 2)
            tile = xp_ref[img]                      # (H+2, (W+2)*C_in)
            acc = None
            for dy in range(3):                     # 9 shifted-window dots
                for dx in range(3):
                    win = tile[dy:dy + H, dx * C_in:dx * C_in + WCI]   # (H, WCI)
                    d = jnp.dot(win.astype(jnp.bfloat16),
                                wc_ref[dy * 3 + dx],
                                preferred_element_type=jnp.float32)    # (H, WCF)
                    acc = d if acc is None else acc + d
            acc = jnp.maximum(acc + bc_ref[...], 0.0)                  # ReLU, f32
            feat_ref[img] = acc.astype(feat_ref.dtype)   # unmasked 512-lane bf16 store
            # Global average pool as a sublane sum (XLU/VPU, overlaps the store);
            # the 1/HW scale and the x-group fold are absorbed into wf_ref.
            pooled = jnp.sum(acc, axis=0, keepdims=True)               # (1, WCF)
            logits = jnp.dot(pooled, wf_ref[...],
                             preferred_element_type=jnp.float32) + bf_ref[...]
            logit_ref[img] = logits                                    # (1, n_cls)

    conv_flops = 2 * N * 9 * H * WCI * WCF          # includes block-diag zero MACs
    head_flops = 2 * N * WCF * n_cls + N * H * WCF
    bytes_accessed = (xp2d.size * 4 + wc_big.size * 2 + bc_big.size * 4 +
                      wf_big.size * 4 + fc_b.size * 4 +
                      N * H * WCF * 2 + N * n_cls * 4)

    feat_slab, logits3 = pl.pallas_call(
        kernel,
        out_shape=(
            jax.ShapeDtypeStruct((N, H, WCF), jnp.bfloat16),   # hooked activations
            jax.ShapeDtypeStruct((N, 1, n_cls), jnp.float32),  # logits
        ),
        grid=(num_steps,),
        in_specs=[
            pl.BlockSpec((IMG, Hp, Wp * C_in), lambda i: (i, 0, 0)),
            pl.BlockSpec((9, WCI, WCF), lambda i: (0, 0, 0)),
            pl.BlockSpec((1, WCF), lambda i: (0, 0)),
            pl.BlockSpec((WCF, n_cls), lambda i: (0, 0)),
            pl.BlockSpec((1, n_cls), lambda i: (0, 0)),
        ],
        out_specs=(
            pl.BlockSpec((IMG, H, WCF), lambda i: (i, 0, 0)),
            pl.BlockSpec((IMG, 1, n_cls), lambda i: (i, 0, 0)),
        ),
        compiler_params=pltpu.CompilerParams(
            dimension_semantics=("parallel",),      # inert on 1-TC chips
        ),
        cost_estimate=pl.CostEstimate(
            flops=conv_flops + head_flops, transcendentals=0,
            bytes_accessed=bytes_accessed),
    )(xp2d, wc_big, bc_big, wf_big, fc_b)

    # Free (contiguous, row-major) reshapes back to module-native layouts:
    # (N, H, W*C_feat) is element-for-element (N, H*W, C_feat).
    feats = feat_slab.reshape(N, HW, C_feat)        # hooked activations (bf16)
    logits = logits3.reshape(N, n_cls)
    return logits, feats


# ---------------------------------------------------------------------------
# Pure-JAX f32 reference (faithful to the PyTorch module)
# ---------------------------------------------------------------------------
def im2col_3x3(x_nchw):
    N, C, H, W = x_nchw.shape
    x = jnp.transpose(x_nchw, (0, 2, 3, 1))                     # NHWC
    xp = jnp.pad(x, ((0, 0), (1, 1), (1, 1), (0, 0)))
    cols = []
    for dy in range(3):
        for dx in range(3):
            cols.append(xp[:, dy:dy + H, dx:dx + W, :])
    patches = jnp.concatenate(cols, axis=-1)                    # (N, H, W, 9*C)
    return patches.reshape(N * H * W, 9 * C)


def reference_forward(x_nchw, params):
    patches = im2col_3x3(x_nchw)
    h = jnp.maximum(patches @ params["conv_w"] + params["conv_b"], 0.0)
    feats = h.reshape(x_nchw.shape[0], -1, h.shape[-1])
    pooled = feats.mean(axis=1)
    logits = pooled @ params["fc_w"] + params["fc_b"]
    return logits, feats


if __name__ == "__main__":
    key = jax.random.PRNGKey(0)
    k_x, k_cw, k_cb, k_fw, k_fb = jax.random.split(key, 5)

    N, C_in, H, W = 2, 4, 16, 16
    C_feat, N_CLS = 32, 10

    x = jax.random.normal(k_x, (N, C_in, H, W), dtype=jnp.float32)

    # Deterministic synthetic parameters (flattened-patch order: dy, dx, c_in)
    params = {
        "conv_w": (jax.random.normal(k_cw, (3, 3, C_in, C_feat), jnp.float32)
                   * 0.1).reshape(9 * C_in, C_feat),
        "conv_b": jax.random.normal(k_cb, (1, C_feat), jnp.float32) * 0.1,
        "fc_w":   jax.random.normal(k_fw, (C_feat, N_CLS), jnp.float32) * 0.1,
        "fc_b":   jax.random.normal(k_fb, (1, N_CLS), jnp.float32) * 0.1,
    }

    logits, feats = cam_forward(x, params)
    logits = jax.block_until_ready(logits)
    feats = jax.block_until_ready(feats)

    ref_logits, ref_feats = reference_forward(x, params)
    assert logits.shape == (N, N_CLS)
    assert feats.shape == (N, H * W, C_feat)
    # bf16 MXU inputs + bf16 hooked-activation slab vs f32 reference.
    assert jnp.allclose(logits, ref_logits, rtol=1e-2, atol=2e-2)
    assert jnp.allclose(feats.astype(jnp.float32), ref_feats, rtol=1e-2, atol=2e-2)

    print("KERNEL_OK")
</pallas_src>

<mosaic_0001>
module attributes {stable_mosaic.version = 11 : i64} {
  func.func @kernel(%arg0: i32, %arg1: memref<2x18x72xf32, #tpu.memory_space<vmem>>, %arg2: memref<9x64x512xbf16, #tpu.memory_space<vmem>>, %arg3: memref<1x512xf32, #tpu.memory_space<vmem>>, %arg4: memref<512x10xf32, #tpu.memory_space<vmem>>, %arg5: memref<1x10xf32, #tpu.memory_space<vmem>>, %arg6: memref<2x16x512xbf16, #tpu.memory_space<vmem>>, %arg7: memref<2x1x10xf32, #tpu.memory_space<vmem>>) attributes {dimension_semantics = [#tpu.dimension_semantics<parallel>], iteration_bounds = array<i64: 1>, scalar_prefetch = 0 : i64, scratch_operands = 0 : i64, tpu.core_type = #tpu.core_type<tc>, window_params = [{transform_indices = @transform_0, window_bounds = array<i64: 2, 18, 72>}, {pipeline_mode = #tpu.pipeline_mode<synchronous>, transform_indices = @transform_1, window_bounds = array<i64: 9, 64, 512>}, {pipeline_mode = #tpu.pipeline_mode<synchronous>, transform_indices = @transform_2, window_bounds = array<i64: 1, 512>}, {pipeline_mode = #tpu.pipeline_mode<synchronous>, transform_indices = @transform_3, window_bounds = array<i64: 512, 10>}, {pipeline_mode = #tpu.pipeline_mode<synchronous>, transform_indices = @transform_4, window_bounds = array<i64: 1, 10>}, {transform_indices = @transform_5, window_bounds = array<i64: 2, 16, 512>}, {transform_indices = @transform_6, window_bounds = array<i64: 2, 1, 10>}]} {
    %c0 = arith.constant 0 : index
    %c0_0 = arith.constant 0 : index
    %c0_1 = arith.constant 0 : index
    %0 = vector.load %arg1[%c0, %c0_0, %c0_1] : memref<2x18x72xf32, #tpu.memory_space<vmem>>, vector<1x18x72xf32>
    %1 = vector.shape_cast %0 : vector<1x18x72xf32> to vector<18x72xf32>
    %2 = vector.extract_strided_slice %1 {offsets = [0, 0], sizes = [16, 64], strides = [1, 1]} : vector<18x72xf32> to vector<16x64xf32>
    %3 = arith.truncf %2 : vector<16x64xf32> to vector<16x64xbf16>
    %c0_2 = arith.constant 0 : index
    %c0_3 = arith.constant 0 : index
    %c0_4 = arith.constant 0 : index
    %4 = vector.load %arg2[%c0_2, %c0_3, %c0_4] : memref<9x64x512xbf16, #tpu.memory_space<vmem>>, vector<1x64x512xbf16>
    %5 = vector.shape_cast %4 : vector<1x64x512xbf16> to vector<64x512xbf16>
    %cst = arith.constant dense<0.000000e+00> : vector<16x512xf32>
    %6 = tpu.matmul %3, %5, %cst {dimension_numbers = #tpu.dot_dimension_numbers<[1], [0], [0], [1], [0, 0, 1, 1], [], []>} : vector<16x64xbf16>, vector<64x512xbf16>, vector<16x512xf32> -> vector<16x512xf32>
    %7 = vector.extract_strided_slice %1 {offsets = [0, 4], sizes = [16, 64], strides = [1, 1]} : vector<18x72xf32> to vector<16x64xf32>
    %8 = arith.truncf %7 : vector<16x64xf32> to vector<16x64xbf16>
    %c1 = arith.constant 1 : index
    %c0_5 = arith.constant 0 : index
    %c0_6 = arith.constant 0 : index
    %9 = vector.load %arg2[%c1, %c0_5, %c0_6] : memref<9x64x512xbf16, #tpu.memory_space<vmem>>, vector<1x64x512xbf16>
    %10 = vector.shape_cast %9 : vector<1x64x512xbf16> to vector<64x512xbf16>
    %cst_7 = arith.constant dense<0.000000e+00> : vector<16x512xf32>
    %11 = tpu.matmul %8, %10, %cst_7 {dimension_numbers = #tpu.dot_dimension_numbers<[1], [0], [0], [1], [0, 0, 1, 1], [], []>} : vector<16x64xbf16>, vector<64x512xbf16>, vector<16x512xf32> -> vector<16x512xf32>
    %12 = arith.addf %6, %11 : vector<16x512xf32>
    %13 = vector.extract_strided_slice %1 {offsets = [0, 8], sizes = [16, 64], strides = [1, 1]} : vector<18x72xf32> to vector<16x64xf32>
    %14 = arith.truncf %13 : vector<16x64xf32> to vector<16x64xbf16>
    %c2 = arith.constant 2 : index
    %c0_8 = arith.constant 0 : index
    %c0_9 = arith.constant 0 : index
    %15 = vector.load %arg2[%c2, %c0_8, %c0_9] : memref<9x64x512xbf16, #tpu.memory_space<vmem>>, vector<1x64x512xbf16>
    %16 = vector.shape_cast %15 : vector<1x64x512xbf16> to vector<64x512xbf16>
    %cst_10 = arith.constant dense<0.000000e+00> : vector<16x512xf32>
    %17 = tpu.matmul %14, %16, %cst_10 {dimension_numbers = #tpu.dot_dimension_numbers<[1], [0], [0], [1], [0, 0, 1, 1], [], []>} : vector<16x64xbf16>, vector<64x512xbf16>, vector<16x512xf32> -> vector<16x512xf32>
    %18 = arith.addf %12, %17 : vector<16x512xf32>
    %19 = vector.extract_strided_slice %1 {offsets = [1, 0], sizes = [16, 64], strides = [1, 1]} : vector<18x72xf32> to vector<16x64xf32>
    %20 = arith.truncf %19 : vector<16x64xf32> to vector<16x64xbf16>
    %c3 = arith.constant 3 : index
    %c0_11 = arith.constant 0 : index
    %c0_12 = arith.constant 0 : index
    %21 = vector.load %arg2[%c3, %c0_11, %c0_12] : memref<9x64x512xbf16, #tpu.memory_space<vmem>>, vector<1x64x512xbf16>
    %22 = vector.shape_cast %21 : vector<1x64x512xbf16> to vector<64x512xbf16>
    %cst_13 = arith.constant dense<0.000000e+00> : vector<16x512xf32>
    %23 = tpu.matmul %20, %22, %cst_13 {dimension_numbers = #tpu.dot_dimension_numbers<[1], [0], [0], [1], [0, 0, 1, 1], [], []>} : vector<16x64xbf16>, vector<64x512xbf16>, vector<16x512xf32> -> vector<16x512xf32>
    %24 = arith.addf %18, %23 : vector<16x512xf32>
    %25 = vector.extract_strided_slice %1 {offsets = [1, 4], sizes = [16, 64], strides = [1, 1]} : vector<18x72xf32> to vector<16x64xf32>
    %26 = arith.truncf %25 : vector<16x64xf32> to vector<16x64xbf16>
    %c4 = arith.constant 4 : index
    %c0_14 = arith.constant 0 : index
    %c0_15 = arith.constant 0 : index
    %27 = vector.load %arg2[%c4, %c0_14, %c0_15] : memref<9x64x512xbf16, #tpu.memory_space<vmem>>, vector<1x64x512xbf16>
    %28 = vector.shape_cast %27 : vector<1x64x512xbf16> to vector<64x512xbf16>
    %cst_16 = arith.constant dense<0.000000e+00> : vector<16x512xf32>
    %29 = tpu.matmul %26, %28, %cst_16 {dimension_numbers = #tpu.dot_dimension_numbers<[1], [0], [0], [1], [0, 0, 1, 1], [], []>} : vector<16x64xbf16>, vector<64x512xbf16>, vector<16x512xf32> -> vector<16x512xf32>
    %30 = arith.addf %24, %29 : vector<16x512xf32>
    %31 = vector.extract_strided_slice %1 {offsets = [1, 8], sizes = [16, 64], strides = [1, 1]} : vector<18x72xf32> to vector<16x64xf32>
    %32 = arith.truncf %31 : vector<16x64xf32> to vector<16x64xbf16>
    %c5 = arith.constant 5 : index
    %c0_17 = arith.constant 0 : index
    %c0_18 = arith.constant 0 : index
    %33 = vector.load %arg2[%c5, %c0_17, %c0_18] : memref<9x64x512xbf16, #tpu.memory_space<vmem>>, vector<1x64x512xbf16>
    %34 = vector.shape_cast %33 : vector<1x64x512xbf16> to vector<64x512xbf16>
    %cst_19 = arith.constant dense<0.000000e+00> : vector<16x512xf32>
    %35 = tpu.matmul %32, %34, %cst_19 {dimension_numbers = #tpu.dot_dimension_numbers<[1], [0], [0], [1], [0, 0, 1, 1], [], []>} : vector<16x64xbf16>, vector<64x512xbf16>, vector<16x512xf32> -> vector<16x512xf32>
    %36 = arith.addf %30, %35 : vector<16x512xf32>
    %37 = vector.extract_strided_slice %1 {offsets = [2, 0], sizes = [16, 64], strides = [1, 1]} : vector<18x72xf32> to vector<16x64xf32>
    %38 = arith.truncf %37 : vector<16x64xf32> to vector<16x64xbf16>
    %c6 = arith.constant 6 : index
    %c0_20 = arith.constant 0 : index
    %c0_21 = arith.constant 0 : index
    %39 = vector.load %arg2[%c6, %c0_20, %c0_21] : memref<9x64x512xbf16, #tpu.memory_space<vmem>>, vector<1x64x512xbf16>
    %40 = vector.shape_cast %39 : vector<1x64x512xbf16> to vector<64x512xbf16>
    %cst_22 = arith.constant dense<0.000000e+00> : vector<16x512xf32>
    %41 = tpu.matmul %38, %40, %cst_22 {dimension_numbers = #tpu.dot_dimension_numbers<[1], [0], [0], [1], [0, 0, 1, 1], [], []>} : vector<16x64xbf16>, vector<64x512xbf16>, vector<16x512xf32> -> vector<16x512xf32>
    %42 = arith.addf %36, %41 : vector<16x512xf32>
    %43 = vector.extract_strided_slice %1 {offsets = [2, 4], sizes = [16, 64], strides = [1, 1]} : vector<18x72xf32> to vector<16x64xf32>
    %44 = arith.truncf %43 : vector<16x64xf32> to vector<16x64xbf16>
    %c7 = arith.constant 7 : index
    %c0_23 = arith.constant 0 : index
    %c0_24 = arith.constant 0 : index
    %45 = vector.load %arg2[%c7, %c0_23, %c0_24] : memref<9x64x512xbf16, #tpu.memory_space<vmem>>, vector<1x64x512xbf16>
    %46 = vector.shape_cast %45 : vector<1x64x512xbf16> to vector<64x512xbf16>
    %cst_25 = arith.constant dense<0.000000e+00> : vector<16x512xf32>
    %47 = tpu.matmul %44, %46, %cst_25 {dimension_numbers = #tpu.dot_dimension_numbers<[1], [0], [0], [1], [0, 0, 1, 1], [], []>} : vector<16x64xbf16>, vector<64x512xbf16>, vector<16x512xf32> -> vector<16x512xf32>
    %48 = arith.addf %42, %47 : vector<16x512xf32>
    %49 = vector.extract_strided_slice %1 {offsets = [2, 8], sizes = [16, 64], strides = [1, 1]} : vector<18x72xf32> to vector<16x64xf32>
    %50 = arith.truncf %49 : vector<16x64xf32> to vector<16x64xbf16>
    %c8 = arith.constant 8 : index
    %c0_26 = arith.constant 0 : index
    %c0_27 = arith.constant 0 : index
    %51 = vector.load %arg2[%c8, %c0_26, %c0_27] : memref<9x64x512xbf16, #tpu.memory_space<vmem>>, vector<1x64x512xbf16>
    %52 = vector.shape_cast %51 : vector<1x64x512xbf16> to vector<64x512xbf16>
    %cst_28 = arith.constant dense<0.000000e+00> : vector<16x512xf32>
    %53 = tpu.matmul %50, %52, %cst_28 {dimension_numbers = #tpu.dot_dimension_numbers<[1], [0], [0], [1], [0, 0, 1, 1], [], []>} : vector<16x64xbf16>, vector<64x512xbf16>, vector<16x512xf32> -> vector<16x512xf32>
    %54 = arith.addf %48, %53 : vector<16x512xf32>
    %c0_29 = arith.constant 0 : index
    %c0_30 = arith.constant 0 : index
    %55 = vector.load %arg3[%c0_29, %c0_30] : memref<1x512xf32, #tpu.memory_space<vmem>>, vector<1x512xf32>
    %56 = vector.broadcast %55 : vector<1x512xf32> to vector<16x512xf32>
    %57 = arith.addf %54, %56 : vector<16x512xf32>
    %cst_31 = arith.constant 0.000000e+00 : f32
    %58 = vector.broadcast %cst_31 : f32 to vector<16x512xf32>
    %59 = arith.maximumf %57, %58 : vector<16x512xf32>
    %60 = arith.truncf %59 : vector<16x512xf32> to vector<16x512xbf16>
    %c0_32 = arith.constant 0 : index
    %c0_33 = arith.constant 0 : index
    %c0_34 = arith.constant 0 : index
    %61 = vector.load %arg6[%c0_32, %c0_33, %c0_34] : memref<2x16x512xbf16, #tpu.memory_space<vmem>>, vector<1x16x512xbf16>
    %62 = vector.shape_cast %61 : vector<1x16x512xbf16> to vector<16x512xbf16>
    %63 = vector.shape_cast %60 : vector<16x512xbf16> to vector<1x16x512xbf16>
    tpu.vector_store %arg6[%c0_32, %c0_33, %c0_34], %63 {strides = array<i32>} : memref<2x16x512xbf16, #tpu.memory_space<vmem>>, vector<1x16x512xbf16>,
    %cst_35 = arith.constant dense<0.000000e+00> : vector<512xf32>
    %64 = vector.multi_reduction <add>, %59, %cst_35 [0] : vector<16x512xf32> to vector<512xf32>
    %65 = vector.shape_cast %64 : vector<512xf32> to vector<1x512xf32>
    %c0_36 = arith.constant 0 : index
    %c0_37 = arith.constant 0 : index
    %66 = vector.load %arg4[%c0_36, %c0_37] : memref<512x10xf32, #tpu.memory_space<vmem>>, vector<512x10xf32>
    %cst_38 = arith.constant dense<0.000000e+00> : vector<1x10xf32>
    %67 = tpu.matmul %65, %66, %cst_38 {dimension_numbers = #tpu.dot_dimension_numbers<[1], [0], [0], [1], [0, 0, 1, 1], [], []>} : vector<1x512xf32>, vector<512x10xf32>, vector<1x10xf32> -> vector<1x10xf32>
    %c0_39 = arith.constant 0 : index
    %c0_40 = arith.constant 0 : index
    %68 = vector.load %arg5[%c0_39, %c0_40] : memref<1x10xf32, #tpu.memory_space<vmem>>, vector<1x10xf32>
    %69 = arith.addf %67, %68 : vector<1x10xf32>
    %c0_41 = arith.constant 0 : index
    %c0_42 = arith.constant 0 : index
    %c0_43 = arith.constant 0 : index
    %70 = vector.load %arg7[%c0_41, %c0_42, %c0_43] : memref<2x1x10xf32, #tpu.memory_space<vmem>>, vector<1x1x10xf32>
    %71 = vector.shape_cast %70 : vector<1x1x10xf32> to vector<1x10xf32>
    %72 = vector.shape_cast %69 : vector<1x10xf32> to vector<1x1x10xf32>
    tpu.vector_store %arg7[%c0_41, %c0_42, %c0_43], %72 {strides = array<i32>} : memref<2x1x10xf32, #tpu.memory_space<vmem>>, vector<1x1x10xf32>,
    %c1_44 = arith.constant 1 : index
    %c0_45 = arith.constant 0 : index
    %c0_46 = arith.constant 0 : index
    %73 = vector.load %arg1[%c1_44, %c0_45, %c0_46] : memref<2x18x72xf32, #tpu.memory_space<vmem>>, vector<1x18x72xf32>
    %74 = vector.shape_cast %73 : vector<1x18x72xf32> to vector<18x72xf32>
    %75 = vector.extract_strided_slice %74 {offsets = [0, 0], sizes = [16, 64], strides = [1, 1]} : vector<18x72xf32> to vector<16x64xf32>
    %76 = arith.truncf %75 : vector<16x64xf32> to vector<16x64xbf16>
    %c0_47 = arith.constant 0 : index
    %c0_48 = arith.constant 0 : index
    %c0_49 = arith.constant 0 : index
    %77 = vector.load %arg2[%c0_47, %c0_48, %c0_49] : memref<9x64x512xbf16, #tpu.memory_space<vmem>>, vector<1x64x512xbf16>
    %78 = vector.shape_cast %77 : vector<1x64x512xbf16> to vector<64x512xbf16>
    %cst_50 = arith.constant dense<0.000000e+00> : vector<16x512xf32>
    %79 = tpu.matmul %76, %78, %cst_50 {dimension_numbers = #tpu.dot_dimension_numbers<[1], [0], [0], [1], [0, 0, 1, 1], [], []>} : vector<16x64xbf16>, vector<64x512xbf16>, vector<16x512xf32> -> vector<16x512xf32>
    %80 = vector.extract_strided_slice %74 {offsets = [0, 4], sizes = [16, 64], strides = [1, 1]} : vector<18x72xf32> to vector<16x64xf32>
    %81 = arith.truncf %80 : vector<16x64xf32> to vector<16x64xbf16>
    %c1_51 = arith.constant 1 : index
    %c0_52 = arith.constant 0 : index
    %c0_53 = arith.constant 0 : index
    %82 = vector.load %arg2[%c1_51, %c0_52, %c0_53] : memref<9x64x512xbf16, #tpu.memory_space<vmem>>, vector<1x64x512xbf16>
    %83 = vector.shape_cast %82 : vector<1x64x512xbf16> to vector<64x512xbf16>
    %cst_54 = arith.constant dense<0.000000e+00> : vector<16x512xf32>
    %84 = tpu.matmul %81, %83, %cst_54 {dimension_numbers = #tpu.dot_dimension_numbers<[1], [0], [0], [1], [0, 0, 1, 1], [], []>} : vector<16x64xbf16>, vector<64x512xbf16>, vector<16x512xf32> -> vector<16x512xf32>
    %85 = arith.addf %79, %84 : vector<16x512xf32>
    %86 = vector.extract_strided_slice %74 {offsets = [0, 8], sizes = [16, 64], strides = [1, 1]} : vector<18x72xf32> to vector<16x64xf32>
    %87 = arith.truncf %86 : vector<16x64xf32> to vector<16x64xbf16>
    %c2_55 = arith.constant 2 : index
    %c0_56 = arith.constant 0 : index
    %c0_57 = arith.constant 0 : index
    %88 = vector.load %arg2[%c2_55, %c0_56, %c0_57] : memref<9x64x512xbf16, #tpu.memory_space<vmem>>, vector<1x64x512xbf16>
    %89 = vector.shape_cast %88 : vector<1x64x512xbf16> to vector<64x512xbf16>
    %cst_58 = arith.constant dense<0.000000e+00> : vector<16x512xf32>
    %90 = tpu.matmul %87, %89, %cst_58 {dimension_numbers = #tpu.dot_dimension_numbers<[1], [0], [0], [1], [0, 0, 1, 1], [], []>} : vector<16x64xbf16>, vector<64x512xbf16>, vector<16x512xf32> -> vector<16x512xf32>
    %91 = arith.addf %85, %90 : vector<16x512xf32>
    %92 = vector.extract_strided_slice %74 {offsets = [1, 0], sizes = [16, 64], strides = [1, 1]} : vector<18x72xf32> to vector<16x64xf32>
    %93 = arith.truncf %92 : vector<16x64xf32> to vector<16x64xbf16>
    %c3_59 = arith.constant 3 : index
    %c0_60 = arith.constant 0 : index
    %c0_61 = arith.constant 0 : index
    %94 = vector.load %arg2[%c3_59, %c0_60, %c0_61] : memref<9x64x512xbf16, #tpu.memory_space<vmem>>, vector<1x64x512xbf16>
    %95 = vector.shape_cast %94 : vector<1x64x512xbf16> to vector<64x512xbf16>
    %cst_62 = arith.constant dense<0.000000e+00> : vector<16x512xf32>
    %96 = tpu.matmul %93, %95, %cst_62 {dimension_numbers = #tpu.dot_dimension_numbers<[1], [0], [0], [1], [0, 0, 1, 1], [], []>} : vector<16x64xbf16>, vector<64x512xbf16>, vector<16x512xf32> -> vector<16x512xf32>
    %97 = arith.addf %91, %96 : vector<16x512xf32>
    %98 = vector.extract_strided_slice %74 {offsets = [1, 4], sizes = [16, 64], strides = [1, 1]} : vector<18x72xf32> to vector<16x64xf32>
    %99 = arith.truncf %98 : vector<16x64xf32> to vector<16x64xbf16>
    %c4_63 = arith.constant 4 : index
    %c0_64 = arith.constant 0 : index
    %c0_65 = arith.constant 0 : index
    %100 = vector.load %arg2[%c4_63, %c0_64, %c0_65] : memref<9x64x512xbf16, #tpu.memory_space<vmem>>, vector<1x64x512xbf16>
    %101 = vector.shape_cast %100 : vector<1x64x512xbf16> to vector<64x512xbf16>
    %cst_66 = arith.constant dense<0.000000e+00> : vector<16x512xf32>
    %102 = tpu.matmul %99, %101, %cst_66 {dimension_numbers = #tpu.dot_dimension_numbers<[1], [0], [0], [1], [0, 0, 1, 1], [], []>} : vector<16x64xbf16>, vector<64x512xbf16>, vector<16x512xf32> -> vector<16x512xf32>
    %103 = arith.addf %97, %102 : vector<16x512xf32>
    %104 = vector.extract_strided_slice %74 {offsets = [1, 8], sizes = [16, 64], strides = [1, 1]} : vector<18x72xf32> to vector<16x64xf32>
    %105 = arith.truncf %104 : vector<16x64xf32> to vector<16x64xbf16>
    %c5_67 = arith.constant 5 : index
    %c0_68 = arith.constant 0 : index
    %c0_69 = arith.constant 0 : index
    %106 = vector.load %arg2[%c5_67, %c0_68, %c0_69] : memref<9x64x512xbf16, #tpu.memory_space<vmem>>, vector<1x64x512xbf16>
    %107 = vector.shape_cast %106 : vector<1x64x512xbf16> to vector<64x512xbf16>
    %cst_70 = arith.constant dense<0.000000e+00> : vector<16x512xf32>
    %108 = tpu.matmul %105, %107, %cst_70 {dimension_numbers = #tpu.dot_dimension_numbers<[1], [0], [0], [1], [0, 0, 1, 1], [], []>} : vector<16x64xbf16>, vector<64x512xbf16>, vector<16x512xf32> -> vector<16x512xf32>
    %109 = arith.addf %103, %108 : vector<16x512xf32>
    %110 = vector.extract_strided_slice %74 {offsets = [2, 0], sizes = [16, 64], strides = [1, 1]} : vector<18x72xf32> to vector<16x64xf32>
    %111 = arith.truncf %110 : vector<16x64xf32> to vector<16x64xbf16>
    %c6_71 = arith.constant 6 : index
    %c0_72 = arith.constant 0 : index
    %c0_73 = arith.constant 0 : index
    %112 = vector.load %arg2[%c6_71, %c0_72, %c0_73] : memref<9x64x512xbf16, #tpu.memory_space<vmem>>, vector<1x64x512xbf16>
    %113 = vector.shape_cast %112 : vector<1x64x512xbf16> to vector<64x512xbf16>
    %cst_74 = arith.constant dense<0.000000e+00> : vector<16x512xf32>
    %114 = tpu.matmul %111, %113, %cst_74 {dimension_numbers = #tpu.dot_dimension_numbers<[1], [0], [0], [1], [0, 0, 1, 1], [], []>} : vector<16x64xbf16>, vector<64x512xbf16>, vector<16x512xf32> -> vector<16x512xf32>
    %115 = arith.addf %109, %114 : vector<16x512xf32>
    %116 = vector.extract_strided_slice %74 {offsets = [2, 4], sizes = [16, 64], strides = [1, 1]} : vector<18x72xf32> to vector<16x64xf32>
    %117 = arith.truncf %116 : vector<16x64xf32> to vector<16x64xbf16>
    %c7_75 = arith.constant 7 : index
    %c0_76 = arith.constant 0 : index
    %c0_77 = arith.constant 0 : index
    %118 = vector.load %arg2[%c7_75, %c0_76, %c0_77] : memref<9x64x512xbf16, #tpu.memory_space<vmem>>, vector<1x64x512xbf16>
    %119 = vector.shape_cast %118 : vector<1x64x512xbf16> to vector<64x512xbf16>
    %cst_78 = arith.constant dense<0.000000e+00> : vector<16x512xf32>
    %120 = tpu.matmul %117, %119, %cst_78 {dimension_numbers = #tpu.dot_dimension_numbers<[1], [0], [0], [1], [0, 0, 1, 1], [], []>} : vector<16x64xbf16>, vector<64x512xbf16>, vector<16x512xf32> -> vector<16x512xf32>
    %121 = arith.addf %115, %120 : vector<16x512xf32>
    %122 = vector.extract_strided_slice %74 {offsets = [2, 8], sizes = [16, 64], strides = [1, 1]} : vector<18x72xf32> to vector<16x64xf32>
    %123 = arith.truncf %122 : vector<16x64xf32> to vector<16x64xbf16>
    %c8_79 = arith.constant 8 : index
    %c0_80 = arith.constant 0 : index
    %c0_81 = arith.constant 0 : index
    %124 = vector.load %arg2[%c8_79, %c0_80, %c0_81] : memref<9x64x512xbf16, #tpu.memory_space<vmem>>, vector<1x64x512xbf16>
    %125 = vector.shape_cast %124 : vector<1x64x512xbf16> to vector<64x512xbf16>
    %cst_82 = arith.constant dense<0.000000e+00> : vector<16x512xf32>
    %126 = tpu.matmul %123, %125, %cst_82 {dimension_numbers = #tpu.dot_dimension_numbers<[1], [0], [0], [1], [0, 0, 1, 1], [], []>} : vector<16x64xbf16>, vector<64x512xbf16>, vector<16x512xf32> -> vector<16x512xf32>
    %127 = arith.addf %121, %126 : vector<16x512xf32>
    %c0_83 = arith.constant 0 : index
    %c0_84 = arith.constant 0 : index
    %128 = vector.load %arg3[%c0_83, %c0_84] : memref<1x512xf32, #tpu.memory_space<vmem>>, vector<1x512xf32>
    %129 = vector.broadcast %128 : vector<1x512xf32> to vector<16x512xf32>
    %130 = arith.addf %127, %129 : vector<16x512xf32>
    %cst_85 = arith.constant 0.000000e+00 : f32
    %131 = vector.broadcast %cst_85 : f32 to vector<16x512xf32>
    %132 = arith.maximumf %130, %131 : vector<16x512xf32>
    %133 = arith.truncf %132 : vector<16x512xf32> to vector<16x512xbf16>
    %c1_86 = arith.constant 1 : index
    %c0_87 = arith.constant 0 : index
    %c0_88 = arith.constant 0 : index
    %134 = vector.load %arg6[%c1_86, %c0_87, %c0_88] : memref<2x16x512xbf16, #tpu.memory_space<vmem>>, vector<1x16x512xbf16>
    %135 = vector.shape_cast %134 : vector<1x16x512xbf16> to vector<16x512xbf16>
    %136 = vector.shape_cast %133 : vector<16x512xbf16> to vector<1x16x512xbf16>
    tpu.vector_store %arg6[%c1_86, %c0_87, %c0_88], %136 {strides = array<i32>} : memref<2x16x512xbf16, #tpu.memory_space<vmem>>, vector<1x16x512xbf16>,
    %cst_89 = arith.constant dense<0.000000e+00> : vector<512xf32>
    %137 = vector.multi_reduction <add>, %132, %cst_89 [0] : vector<16x512xf32> to vector<512xf32>
    %138 = vector.shape_cast %137 : vector<512xf32> to vector<1x512xf32>
    %c0_90 = arith.constant 0 : index
    %c0_91 = arith.constant 0 : index
    %139 = vector.load %arg4[%c0_90, %c0_91] : memref<512x10xf32, #tpu.memory_space<vmem>>, vector<512x10xf32>
    %cst_92 = arith.constant dense<0.000000e+00> : vector<1x10xf32>
    %140 = tpu.matmul %138, %139, %cst_92 {dimension_numbers = #tpu.dot_dimension_numbers<[1], [0], [0], [1], [0, 0, 1, 1], [], []>} : vector<1x512xf32>, vector<512x10xf32>, vector<1x10xf32> -> vector<1x10xf32>
    %c0_93 = arith.constant 0 : index
    %c0_94 = arith.constant 0 : index
    %141 = vector.load %arg5[%c0_93, %c0_94] : memref<1x10xf32, #tpu.memory_space<vmem>>, vector<1x10xf32>
    %142 = arith.addf %140, %141 : vector<1x10xf32>
    %c1_95 = arith.constant 1 : index
    %c0_96 = arith.constant 0 : index
    %c0_97 = arith.constant 0 : index
    %143 = vector.load %arg7[%c1_95, %c0_96, %c0_97] : memref<2x1x10xf32, #tpu.memory_space<vmem>>, vector<1x1x10xf32>
    %144 = vector.shape_cast %143 : vector<1x1x10xf32> to vector<1x10xf32>
    %145 = vector.shape_cast %142 : vector<1x10xf32> to vector<1x1x10xf32>
    tpu.vector_store %arg7[%c1_95, %c0_96, %c0_97], %145 {strides = array<i32>} : memref<2x1x10xf32, #tpu.memory_space<vmem>>, vector<1x1x10xf32>,
    return
  }
  func.func @transform_0(%arg0: i32) -> (i32, i32, i32) {
    %c0_i32 = arith.constant 0 : i32
    %c0_i32_0 = arith.constant 0 : i32
    %c0_i32_1 = arith.constant 0 : i32
    return %arg0, %c0_i32, %c0_i32_0 : i32, i32, i32
  }
  func.func @transform_1(%arg0: i32) -> (i32, i32, i32) {
    %c0_i32 = arith.constant 0 : i32
    %c0_i32_0 = arith.constant 0 : i32
    %c0_i32_1 = arith.constant 0 : i32
    %c0_i32_2 = arith.constant 0 : i32
    return %c0_i32, %c0_i32_0, %c0_i32_1 : i32, i32, i32
  }
  func.func @transform_2(%arg0: i32) -> (i32, i32) {
    %c0_i32 = arith.constant 0 : i32
    %c0_i32_0 = arith.constant 0 : i32
    %c0_i32_1 = arith.constant 0 : i32
    return %c0_i32, %c0_i32_0 : i32, i32
  }
  func.func @transform_3(%arg0: i32) -> (i32, i32) {
    %c0_i32 = arith.constant 0 : i32
    %c0_i32_0 = arith.constant 0 : i32
    %c0_i32_1 = arith.constant 0 : i32
    return %c0_i32, %c0_i32_0 : i32, i32
  }
  func.func @transform_4(%arg0: i32) -> (i32, i32) {
    %c0_i32 = arith.constant 0 : i32
    %c0_i32_0 = arith.constant 0 : i32
    %c0_i32_1 = arith.constant 0 : i32
    return %c0_i32, %c0_i32_0 : i32, i32
  }
  func.func @transform_5(%arg0: i32) -> (i32, i32, i32) {
    %c0_i32 = arith.constant 0 : i32
    %c0_i32_0 = arith.constant 0 : i32
    %c0_i32_1 = arith.constant 0 : i32
    return %arg0, %c0_i32, %c0_i32_0 : i32, i32, i32
  }
  func.func @transform_6(%arg0: i32) -> (i32, i32, i32) {
    %c0_i32 = arith.constant 0 : i32
    %c0_i32_0 = arith.constant 0 : i32
    %c0_i32_1 = arith.constant 0 : i32
    return %arg0, %c0_i32, %c0_i32_0 : i32, i32, i32
  }
}

</mosaic_0001>

<llo_original>
// kernel: tpu_custom_call.1
$region0: #{tpu_custom_call.1}
  #allocation0 [shape = 'u32[]', space=smem, size = 0x4, offset = 0x4, fixed_abs, tag = 'smem constant byte address 0x4 - core index']
  #allocation1 [shape = 'u32[144,128]{1,0:T(1,128)}', space=vmem, size = 0x12000, scoped, tag = 'internal scratch']
  %s0 = inlined_call_operand.vmem [shape: f32[2,18,72], index: 0, kind: input, shape index: {}]
  %s1 = inlined_call_operand.hbm [shape: bf16[9,64,512], index: 1, kind: input, shape index: {}]
  %s2 = inlined_call_operand.vmem [shape: f32[1,512], index: 2, kind: input, shape index: {}]
  %s3 = inlined_call_operand.vmem [shape: f32[512,10], index: 3, kind: input, shape index: {}]
  %s4 = inlined_call_operand.vmem [shape: f32[1,10], index: 4, kind: input, shape index: {}]
  %s5 = inlined_call_operand.hbm [shape: bf16[2,16,512], index: 5, kind: output, shape index: {0}]
  %s6 = inlined_call_operand.hbm [shape: f32[2,1,10], index: 6, kind: output, shape index: {1}]
  %7 = xla_tuple %s5, %s6
  %s8 = sld [smem:[#allocation0]]
  $region42: #{tpu_custom_call.1} parent=0
    _
  %s10 = ssub.s32 1, %s8
  %s11 = scalar_select 0, %s10, %s8
  $region1: #{tpu_custom_call.1} parent=0
    #allocation2 [shape = 'u8[589824]{0}', space=vmem, size = 0x90000, scoped, tag = 'input window, operand 1, single buffered']
    #allocation3 [shape = 's32[1]{0}', space=sflag, size = 0x4, scoped, tag = 'scoped memory for tpu_custom_call.1']
    #allocation4 [shape = 's32[1]{0}', space=sflag, size = 0x4, scoped, tag = 'scoped memory for tpu_custom_call.1']
    #allocation5 [shape = 'u8[32768]{0}', space=vmem, size = 0x8000, scoped, tag = 'output window, operand 0, single buffered']
    #allocation6 [shape = 'u8[1024]{0}', space=vmem, size = 0x400, scoped, tag = 'output window, operand 1, single buffered']
    #allocation7 [shape = 's32[1]{0}', space=sflag, size = 0x4, scoped, tag = 'scoped memory for tpu_custom_call.1']
    %12 = vsyncpa [#allocation3], 0
    %13 = vsyncpa [#allocation4], 0
    %14 = vsyncpa [#allocation7], 0
    // Predicated region
    $region2: #{tpu_custom_call.1} parent=1 // pred_check
      _
    $region3: #{tpu_custom_call.1} parent=1 // pred_check_branch
      %16 = sbr.rel (0) target = $region5
    $region4: #{tpu_custom_call.1} parent=1 // pred_region
      _
    $region5: #{tpu_custom_call.1} parent=1 // pred_fallthru
      _
    // Predicated region
    $region6: #{tpu_custom_call.1} parent=1 // pred_check
      _
    $region7: #{tpu_custom_call.1} parent=1 // pred_check_branch
      %18 = sbr.rel (0) target = $region9
    $region8: #{tpu_custom_call.1} parent=1 // pred_region
      %s20 = ssub.s32 18432, 18432
      %21 = vsyncadd [#allocation3], %s20
      %s22 = sshll.u32 [#allocation2], 4
      %s23 = int_to_ptr.vmem [resolvable:$true] %s22
      %28 = dma.hbm_to_vmem [thread:$0]  %s1, 18432, %s23, [#allocation3], 256, 256, 16
    $region9: #{tpu_custom_call.1} parent=1 // pred_fallthru
      _
    // Predicated region
    $region10: #{tpu_custom_call.1} parent=1 // pred_check
      _
    $region11: #{tpu_custom_call.1} parent=1 // pred_check_branch
      %30 = sbr.rel (0) target = $region13
    $region12: #{tpu_custom_call.1} parent=1 // pred_region
      _
    $region13: #{tpu_custom_call.1} parent=1 // pred_fallthru
      _
    // Predicated region
    $region14: #{tpu_custom_call.1} parent=1 // pred_check
      _
    $region15: #{tpu_custom_call.1} parent=1 // pred_check_branch
      %32 = sbr.rel (0) target = $region17
    $region16: #{tpu_custom_call.1} parent=1 // pred_region
      _
    $region17: #{tpu_custom_call.1} parent=1 // pred_fallthru
      _
    // Predicated region
    $region18: #{tpu_custom_call.1} parent=1 // pred_check
      _
    $region19: #{tpu_custom_call.1} parent=1 // pred_check_branch
      %34 = sbr.rel (0) target = $region21
    $region20: #{tpu_custom_call.1} parent=1 // pred_region
      _
    $region21: #{tpu_custom_call.1} parent=1 // pred_fallthru
      _
    // Predicated region
    $region22: #{tpu_custom_call.1} parent=1 // pred_check
      _
    $region23: #{tpu_custom_call.1} parent=1 // pred_check_branch
      %36 = sbr.rel (0) target = $region25
    $region24: #{tpu_custom_call.1} parent=1 // pred_region
      %37 = dma.done [#allocation3], 18432
    $region25: #{tpu_custom_call.1} parent=1 // pred_fallthru
      _
    %v39 = vld [vmem:[%s0] sm:$0xff]
    %v40 = vld [vmem:[%s0 + $0x8] sm:$0xff]
    %v41 = vld [vmem:[%s0 + $0x10] sm:$0x3]
    %v42 = vpack.c.bf16 %v40, %v39
    %v43 = vld [vmem:[#allocation2] sm:$0xff]
    %v44 = vld [vmem:[#allocation2 + $0x8] sm:$0xff]
    %v45 = vld [vmem:[#allocation2 + $0x10] sm:$0xff]
    %v46 = vld [vmem:[#allocation2 + $0x18] sm:$0xff]
    %v47 = vld [vmem:[#allocation2 + $0x20] sm:$0xff]
    %v48 = vld [vmem:[#allocation2 + $0x28] sm:$0xff]
    %v49 = vld [vmem:[#allocation2 + $0x30] sm:$0xff]
    %v50 = vld [vmem:[#allocation2 + $0x38] sm:$0xff]
    %v51 = vld [vmem:[#allocation2 + $0x40] sm:$0xff]
    %v52 = vld [vmem:[#allocation2 + $0x48] sm:$0xff]
    %v53 = vld [vmem:[#allocation2 + $0x50] sm:$0xff]
    %v54 = vld [vmem:[#allocation2 + $0x58] sm:$0xff]
    %v55 = vld [vmem:[#allocation2 + $0x60] sm:$0xff]
    %v56 = vld [vmem:[#allocation2 + $0x68] sm:$0xff]
    %v57 = vld [vmem:[#allocation2 + $0x70] sm:$0xff]
    %v58 = vld [vmem:[#allocation2 + $0x78] sm:$0xff]
    %s59 = scalar_lea.vmem [#allocation2], 128
    %v60 = vld [vmem:[%s59] sm:$0xff]
    %v61 = vld [vmem:[%s59 + $0x8] sm:$0xff]
    %v62 = vld [vmem:[%s59 + $0x10] sm:$0xff]
    %v63 = vld [vmem:[%s59 + $0x18] sm:$0xff]
    %v64 = vld [vmem:[%s59 + $0x20] sm:$0xff]
    %v65 = vld [vmem:[%s59 + $0x28] sm:$0xff]
    %v66 = vld [vmem:[%s59 + $0x30] sm:$0xff]
    %v67 = vld [vmem:[%s59 + $0x38] sm:$0xff]
    %v68 = vld [vmem:[%s59 + $0x40] sm:$0xff]
    %v69 = vld [vmem:[%s59 + $0x48] sm:$0xff]
    %v70 = vld [vmem:[%s59 + $0x50] sm:$0xff]
    %v71 = vld [vmem:[%s59 + $0x58] sm:$0xff]
    %v72 = vld [vmem:[%s59 + $0x60] sm:$0xff]
    %v73 = vld [vmem:[%s59 + $0x68] sm:$0xff]
    %v74 = vld [vmem:[%s59 + $0x70] sm:$0xff]
    %v75 = vld [vmem:[%s59 + $0x78] sm:$0xff]
    %77 = vrot.lane.b32.xlu0 %v42, 124
    %v78 = vpop.permute.xlu0 %77
    %v95 = vunpack.c.l.b16 %v60
    %v96 = vunpack.c.h.b16 %v60
    %v97 = vunpack.c.l.b16 %v61
    %v98 = vunpack.c.h.b16 %v61
    %v99 = vunpack.c.l.b16 %v62
    %v100 = vunpack.c.h.b16 %v62
    %v101 = vunpack.c.l.b16 %v63
    %v102 = vunpack.c.h.b16 %v63
    %v103 = vunpack.c.l.b16 %v64
    %v104 = vunpack.c.h.b16 %v64
    %v105 = vunpack.c.l.b16 %v65
    %v106 = vunpack.c.h.b16 %v65
    %v107 = vunpack.c.l.b16 %v66
    %v108 = vunpack.c.h.b16 %v66
    %v109 = vunpack.c.l.b16 %v67
    %v110 = vunpack.c.h.b16 %v67
    %v111 = vunpack.c.l.b16 %v68
    %v112 = vunpack.c.h.b16 %v68
    %v113 = vunpack.c.l.b16 %v69
    %v114 = vunpack.c.h.b16 %v69
    %v115 = vunpack.c.l.b16 %v70
    %v116 = vunpack.c.h.b16 %v70
    %v117 = vunpack.c.l.b16 %v71
    %v118 = vunpack.c.h.b16 %v71
    %v119 = vunpack.c.l.b16 %v72
    %v120 = vunpack.c.h.b16 %v72
    %v121 = vunpack.c.l.b16 %v73
    %v122 = vunpack.c.h.b16 %v73
    %v123 = vunpack.c.l.b16 %v74
    %v124 = vunpack.c.h.b16 %v74
    %v125 = vunpack.c.l.b16 %v75
    %v126 = vunpack.c.h.b16 %v75
    %v127 = vpack.c.b16 %v99, %v95
    %v128 = vpack.c.b16 %v100, %v96
    %v129 = vpack.c.b16 %v101, %v97
    %v130 = vpack.c.b16 %v102, %v98
    %v131 = vpack.c.b16 %v107, %v103
    %v132 = vpack.c.b16 %v108, %v104
    %v133 = vpack.c.b16 %v109, %v105
    %v134 = vpack.c.b16 %v110, %v106
    %v135 = vpack.c.b16 %v115, %v111
    %v136 = vpack.c.b16 %v116, %v112
    %v137 = vpack.c.b16 %v117, %v113
    %v138 = vpack.c.b16 %v118, %v114
    %v139 = vpack.c.b16 %v123, %v119
    %v140 = vpack.c.b16 %v124, %v120
    %v141 = vpack.c.b16 %v125, %v121
    %v142 = vpack.c.b16 %v126, %v122
    %vm159 = vcmask 523264
    %v161 = vsel %vm159, %v78, 0
    %163 = vmatprep.subr.bf16.mxu0 %v128
    %164 = vmatpush1.bf16.msra.mxu0 %v127
    %165 = vmatprep.subr.bf16.mxu0 %v132
    %166 = vmatpush1.bf16.msra.mxu0 %v131
    %167 = vmatprep.subr.bf16.mxu0 %v136
    %168 = vmatpush1.bf16.msra.mxu0 %v135
    %169 = vmatprep.subr.bf16.mxu0 %v140
    %170 = vmatpush1.bf16.msra.mxu0 %v139
    %171 = vmatprep.subr.bf16.mxu0 0
    %172 = vmatpush1.bf16.msra.mxu0 0
    %173 = vmatprep.subr.bf16.mxu0 0
    %174 = vmatpush1.bf16.msra.mxu0 0
    %175 = vmatprep.subr.bf16.mxu0 0
    %176 = vmatpush1.bf16.msra.mxu0 0
    %177 = vmatprep.subr.bf16.mxu0 0
    %178 = vmatpush1.bf16.msra.mxu0 0
    %179 = vmatprep.subr.bf16.mxu0 0
    %180 = vmatpush1.bf16.msra.mxu0 0
    %181 = vmatprep.subr.bf16.mxu0 0
    %182 = vmatpush1.bf16.msra.mxu0 0
    %183 = vmatprep.subr.bf16.mxu0 0
    %184 = vmatpush1.bf16.msra.mxu0 0
    %185 = vmatprep.subr.bf16.mxu0 0
    %186 = vmatpush1.bf16.msra.mxu0 0
    %187 = vmatprep.subr.bf16.mxu0 0
    %188 = vmatpush1.bf16.msra.mxu0 0
    %189 = vmatprep.subr.bf16.mxu0 0
    %190 = vmatpush1.bf16.msra.mxu0 0
    %191 = vmatprep.subr.bf16.mxu0 0
    %192 = vmatpush1.bf16.msra.mxu0 0
    %193 = vmatprep.subr.bf16.mxu0 0
    %194 = vmatpush1.bf16.msra.mxu0 0
    %195 = vmatprep.mubr.bf16.mxu0 0
    %196 = vmatmul.mubr.bf16.gmra.mrb[0].mxu0 %v161
    %v197 = vpop.f32.mrb[0].mxu0
    %v198 = vadd.f32 0.0, %v197
    %v199 = vpop.f32.mrb[0].mxu0
    %v200 = vadd.f32 0.0, %v199
    %v201 = vpop.f32.mrb[0].mxu0
    %v202 = vadd.f32 0.0, %v201
    %v203 = vpop.f32.mrb[0].mxu0
    %v204 = vadd.f32 0.0, %v203
    %205 = vdwg.mxu0
    %206 = vmatprep.subr.bf16.mxu0 %v130
    %207 = vmatpush1.bf16.msra.mxu0 %v129
    %208 = vmatprep.subr.bf16.mxu0 %v134
    %209 = vmatpush1.bf16.msra.mxu0 %v133
    %210 = vmatprep.subr.bf16.mxu0 %v138
    %211 = vmatpush1.bf16.msra.mxu0 %v137
    %212 = vmatprep.subr.bf16.mxu0 %v142
    %213 = vmatpush1.bf16.msra.mxu0 %v141
    %214 = vmatprep.subr.bf16.mxu0 0
    %215 = vmatpush1.bf16.msra.mxu0 0
    %216 = vmatprep.subr.bf16.mxu0 0
    %217 = vmatpush1.bf16.msra.mxu0 0
    %218 = vmatprep.subr.bf16.mxu0 0
    %219 = vmatpush1.bf16.msra.mxu0 0
    %220 = vmatprep.subr.bf16.mxu0 0
    %221 = vmatpush1.bf16.msra.mxu0 0
    %222 = vmatprep.subr.bf16.mxu0 0
    %223 = vmatpush1.bf16.msra.mxu0 0
    %224 = vmatprep.subr.bf16.mxu0 0
    %225 = vmatpush1.bf16.msra.mxu0 0
    %226 = vmatprep.subr.bf16.mxu0 0
    %227 = vmatpush1.bf16.msra.mxu0 0
    %228 = vmatprep.subr.bf16.mxu0 0
    %229 = vmatpush1.bf16.msra.mxu0 0
    %230 = vmatprep.subr.bf16.mxu0 0
    %231 = vmatpush1.bf16.msra.mxu0 0
    %232 = vmatprep.subr.bf16.mxu0 0
    %233 = vmatpush1.bf16.msra.mxu0 0
    %234 = vmatprep.subr.bf16.mxu0 0
    %235 = vmatpush1.bf16.msra.mxu0 0
    %236 = vmatprep.subr.bf16.mxu0 0
    %237 = vmatpush1.bf16.msra.mxu0 0
    %238 = vmatprep.mubr.bf16.mxu0 0
    %239 = vmatmul.mubr.bf16.gmra.mrb[0].mxu0 %v161
    %v240 = vpop.f32.mrb[0].mxu0
    %v241 = vadd.f32 0.0, %v240
    %v242 = vpop.f32.mrb[0].mxu0
    %v243 = vadd.f32 0.0, %v242
    %v244 = vpop.f32.mrb[0].mxu0
    %v245 = vadd.f32 0.0, %v244
    %v246 = vpop.f32.mrb[0].mxu0
    %v247 = vadd.f32 0.0, %v246
    %248 = vdwg.mxu0
    %v265 = vunpack.c.l.b16 %v43
    %v266 = vunpack.c.h.b16 %v43
    %v267 = vunpack.c.l.b16 %v44
    %v268 = vunpack.c.h.b16 %v44
    %v269 = vunpack.c.l.b16 %v45
    %v270 = vunpack.c.h.b16 %v45
    %v271 = vunpack.c.l.b16 %v46
    %v272 = vunpack.c.h.b16 %v46
    %v273 = vunpack.c.l.b16 %v47
    %v274 = vunpack.c.h.b16 %v47
    %v275 = vunpack.c.l.b16 %v48
    %v276 = vunpack.c.h.b16 %v48
    %v277 = vunpack.c.l.b16 %v49
    %v278 = vunpack.c.h.b16 %v49
    %v279 = vunpack.c.l.b16 %v50
    %v280 = vunpack.c.h.b16 %v50
    %v281 = vunpack.c.l.b16 %v51
    %v282 = vunpack.c.h.b16 %v51
    %v283 = vunpack.c.l.b16 %v52
    %v284 = vunpack.c.h.b16 %v52
    %v285 = vunpack.c.l.b16 %v53
    %v286 = vunpack.c.h.b16 %v53
    %v287 = vunpack.c.l.b16 %v54
    %v288 = vunpack.c.h.b16 %v54
    %v289 = vunpack.c.l.b16 %v55
    %v290 = vunpack.c.h.b16 %v55
    %v291 = vunpack.c.l.b16 %v56
    %v292 = vunpack.c.h.b16 %v56
    %v293 = vunpack.c.l.b16 %v57
    %v294 = vunpack.c.h.b16 %v57
    %v295 = vunpack.c.l.b16 %v58
    %v296 = vunpack.c.h.b16 %v58
    %v297 = vpack.c.b16 %v269, %v265
    %v298 = vpack.c.b16 %v270, %v266
    %v299 = vpack.c.b16 %v271, %v267
    %v300 = vpack.c.b16 %v272, %v268
    %v301 = vpack.c.b16 %v277, %v273
    %v302 = vpack.c.b16 %v278, %v274
    %v303 = vpack.c.b16 %v279, %v275
    %v304 = vpack.c.b16 %v280, %v276
    %v305 = vpack.c.b16 %v285, %v281
    %v306 = vpack.c.b16 %v286, %v282
    %v307 = vpack.c.b16 %v287, %v283
    %v308 = vpack.c.b16 %v288, %v284
    %v309 = vpack.c.b16 %v293, %v289
    %v310 = vpack.c.b16 %v294, %v290
    %v311 = vpack.c.b16 %v295, %v291
    %v312 = vpack.c.b16 %v296, %v292
    %v330 = vsel %vm159, %v42, 0
    %332 = vmatprep.subr.bf16.mxu0 %v298
    %333 = vmatpush1.bf16.msra.mxu0 %v297
    %334 = vmatprep.subr.bf16.mxu0 %v302
    %335 = vmatpush1.bf16.msra.mxu0 %v301
    %336 = vmatprep.subr.bf16.mxu0 %v306
    %337 = vmatpush1.bf16.msra.mxu0 %v305
    %338 = vmatprep.subr.bf16.mxu0 %v310
    %339 = vmatpush1.bf16.msra.mxu0 %v309
    %340 = vmatprep.subr.bf16.mxu0 0
    %341 = vmatpush1.bf16.msra.mxu0 0
    %342 = vmatprep.subr.bf16.mxu0 0
    %343 = vmatpush1.bf16.msra.mxu0 0
    %344 = vmatprep.subr.bf16.mxu0 0
    %345 = vmatpush1.bf16.msra.mxu0 0
    %346 = vmatprep.subr.bf16.mxu0 0
    %347 = vmatpush1.bf16.msra.mxu0 0
    %348 = vmatprep.subr.bf16.mxu0 0
    %349 = vmatpush1.bf16.msra.mxu0 0
    %350 = vmatprep.subr.bf16.mxu0 0
    %351 = vmatpush1.bf16.msra.mxu0 0
    %352 = vmatprep.subr.bf16.mxu0 0
    %353 = vmatpush1.bf16.msra.mxu0 0
    %354 = vmatprep.subr.bf16.mxu0 0
    %355 = vmatpush1.bf16.msra.mxu0 0
    %356 = vmatprep.subr.bf16.mxu0 0
    %357 = vmatpush1.bf16.msra.mxu0 0
    %358 = vmatprep.subr.bf16.mxu0 0
    %359 = vmatpush1.bf16.msra.mxu0 0
    %360 = vmatprep.subr.bf16.mxu0 0
    %361 = vmatpush1.bf16.msra.mxu0 0
    %362 = vmatprep.subr.bf16.mxu0 0
    %363 = vmatpush1.bf16.msra.mxu0 0
    %364 = vmatprep.mubr.bf16.mxu0 0
    %365 = vmatmul.mubr.bf16.gmra.mrb[0].mxu0 %v330
    %v366 = vpop.f32.mrb[0].mxu0
    %v367 = vadd.f32 %v198, %v366
    %v368 = vpop.f32.mrb[0].mxu0
    %v369 = vadd.f32 %v200, %v368
    %v370 = vpop.f32.mrb[0].mxu0
    %v371 = vadd.f32 %v202, %v370
    %v372 = vpop.f32.mrb[0].mxu0
    %v373 = vadd.f32 %v204, %v372
    %374 = vdwg.mxu0
    %375 = vmatprep.subr.bf16.mxu0 %v300
    %376 = vmatpush1.bf16.msra.mxu0 %v299
    %377 = vmatprep.subr.bf16.mxu0 %v304
    %378 = vmatpush1.bf16.msra.mxu0 %v303
    %379 = vmatprep.subr.bf16.mxu0 %v308
    %380 = vmatpush1.bf16.msra.mxu0 %v307
    %381 = vmatprep.subr.bf16.mxu0 %v312
    %382 = vmatpush1.bf16.msra.mxu0 %v311
    %383 = vmatprep.subr.bf16.mxu0 0
    %384 = vmatpush1.bf16.msra.mxu0 0
    %385 = vmatprep.subr.bf16.mxu0 0
    %386 = vmatpush1.bf16.msra.mxu0 0
    %387 = vmatprep.subr.bf16.mxu0 0
    %388 = vmatpush1.bf16.msra.mxu0 0
    %389 = vmatprep.subr.bf16.mxu0 0
    %390 = vmatpush1.bf16.msra.mxu0 0
    %391 = vmatprep.subr.bf16.mxu0 0
    %392 = vmatpush1.bf16.msra.mxu0 0
    %393 = vmatprep.subr.bf16.mxu0 0
    %394 = vmatpush1.bf16.msra.mxu0 0
    %395 = vmatprep.subr.bf16.mxu0 0
    %396 = vmatpush1.bf16.msra.mxu0 0
    %397 = vmatprep.subr.bf16.mxu0 0
    %398 = vmatpush1.bf16.msra.mxu0 0
    %399 = vmatprep.subr.bf16.mxu0 0
    %400 = vmatpush1.bf16.msra.mxu0 0
    %401 = vmatprep.subr.bf16.mxu0 0
    %402 = vmatpush1.bf16.msra.mxu0 0
    %403 = vmatprep.subr.bf16.mxu0 0
    %404 = vmatpush1.bf16.msra.mxu0 0
    %405 = vmatprep.subr.bf16.mxu0 0
    %406 = vmatpush1.bf16.msra.mxu0 0
    %407 = vmatprep.mubr.bf16.mxu0 0
    %408 = vmatmul.mubr.bf16.gmra.mrb[0].mxu0 %v330
    %v409 = vpop.f32.mrb[0].mxu0
    %v410 = vadd.f32 %v241, %v409
    %v411 = vpop.f32.mrb[0].mxu0
    %v412 = vadd.f32 %v243, %v411
    %v413 = vpop.f32.mrb[0].mxu0
    %v414 = vadd.f32 %v245, %v413
    %v415 = vpop.f32.mrb[0].mxu0
    %v416 = vadd.f32 %v247, %v415
    %417 = vdwg.mxu0
    %s418 = scalar_lea.vmem [#allocation2], 256
    %v419 = vld [vmem:[%s418] sm:$0xff]
    %v420 = vld [vmem:[%s418 + $0x8] sm:$0xff]
    %v421 = vld [vmem:[%s418 + $0x10] sm:$0xff]
    %v422 = vld [vmem:[%s418 + $0x18] sm:$0xff]
    %v423 = vld [vmem:[%s418 + $0x20] sm:$0xff]
    %v424 = vld [vmem:[%s418 + $0x28] sm:$0xff]
    %v425 = vld [vmem:[%s418 + $0x30] sm:$0xff]
    %v426 = vld [vmem:[%s418 + $0x38] sm:$0xff]
    %v427 = vld [vmem:[%s418 + $0x40] sm:$0xff]
    %v428 = vld [vmem:[%s418 + $0x48] sm:$0xff]
    %v429 = vld [vmem:[%s418 + $0x50] sm:$0xff]
    %v430 = vld [vmem:[%s418 + $0x58] sm:$0xff]
    %v431 = vld [vmem:[%s418 + $0x60] sm:$0xff]
    %v432 = vld [vmem:[%s418 + $0x68] sm:$0xff]
    %v433 = vld [vmem:[%s418 + $0x70] sm:$0xff]
    %v434 = vld [vmem:[%s418 + $0x78] sm:$0xff]
    %435 = vrot.lane.b32.xlu0 %v42, 120
    %v436 = vpop.permute.xlu0 %435
    %v453 = vunpack.c.l.b16 %v419
    %v454 = vunpack.c.h.b16 %v419
    %v455 = vunpack.c.l.b16 %v420
    %v456 = vunpack.c.h.b16 %v420
    %v457 = vunpack.c.l.b16 %v421
    %v458 = vunpack.c.h.b16 %v421
    %v459 = vunpack.c.l.b16 %v422
    %v460 = vunpack.c.h.b16 %v422
    %v461 = vunpack.c.l.b16 %v423
    %v462 = vunpack.c.h.b16 %v423
    %v463 = vunpack.c.l.b16 %v424
    %v464 = vunpack.c.h.b16 %v424
    %v465 = vunpack.c.l.b16 %v425
    %v466 = vunpack.c.h.b16 %v425
    %v467 = vunpack.c.l.b16 %v426
    %v468 = vunpack.c.h.b16 %v426
    %v469 = vunpack.c.l.b16 %v427
    %v470 = vunpack.c.h.b16 %v427
    %v471 = vunpack.c.l.b16 %v428
    %v472 = vunpack.c.h.b16 %v428
    %v473 = vunpack.c.l.b16 %v429
    %v474 = vunpack.c.h.b16 %v429
    %v475 = vunpack.c.l.b16 %v430
    %v476 = vunpack.c.h.b16 %v430
    %v477 = vunpack.c.l.b16 %v431
    %v478 = vunpack.c.h.b16 %v431
    %v479 = vunpack.c.l.b16 %v432
    %v480 = vunpack.c.h.b16 %v432
    %v481 = vunpack.c.l.b16 %v433
    %v482 = vunpack.c.h.b16 %v433
    %v483 = vunpack.c.l.b16 %v434
    %v484 = vunpack.c.h.b16 %v434
    %v485 = vpack.c.b16 %v457, %v453
    %v486 = vpack.c.b16 %v458, %v454
    %v487 = vpack.c.b16 %v459, %v455
    %v488 = vpack.c.b16 %v460, %v456
    %v489 = vpack.c.b16 %v465, %v461
    %v490 = vpack.c.b16 %v466, %v462
    %v491 = vpack.c.b16 %v467, %v463
    %v492 = vpack.c.b16 %v468, %v464
    %v493 = vpack.c.b16 %v473, %v469
    %v494 = vpack.c.b16 %v474, %v470
    %v495 = vpack.c.b16 %v475, %v471
    %v496 = vpack.c.b16 %v476, %v472
    %v497 = vpack.c.b16 %v481, %v477
    %v498 = vpack.c.b16 %v482, %v478
    %v499 = vpack.c.b16 %v483, %v479
    %v500 = vpack.c.b16 %v484, %v480
    %v518 = vsel %vm159, %v436, 0
    %520 = vmatprep.subr.bf16.mxu0 %v486
    %521 = vmatpush1.bf16.msra.mxu0 %v485
    %522 = vmatprep.subr.bf16.mxu0 %v490
    %523 = vmatpush1.bf16.msra.mxu0 %v489
    %524 = vmatprep.subr.bf16.mxu0 %v494
    %525 = vmatpush1.bf16.msra.mxu0 %v493
    %526 = vmatprep.subr.bf16.mxu0 %v498
    %527 = vmatpush1.bf16.msra.mxu0 %v497
    %528 = vmatprep.subr.bf16.mxu0 0
    %529 = vmatpush1.bf16.msra.mxu0 0
    %530 = vmatprep.subr.bf16.mxu0 0
    %531 = vmatpush1.bf16.msra.mxu0 0
    %532 = vmatprep.subr.bf16.mxu0 0
    %533 = vmatpush1.bf16.msra.mxu0 0
    %534 = vmatprep.subr.bf16.mxu0 0
    %535 = vmatpush1.bf16.msra.mxu0 0
    %536 = vmatprep.subr.bf16.mxu0 0
    %537 = vmatpush1.bf16.msra.mxu0 0
    %538 = vmatprep.subr.bf16.mxu0 0
    %539 = vmatpush1.bf16.msra.mxu0 0
    %540 = vmatprep.subr.bf16.mxu0 0
    %541 = vmatpush1.bf16.msra.mxu0 0
    %542 = vmatprep.subr.bf16.mxu0 0
    %543 = vmatpush1.bf16.msra.mxu0 0
    %544 = vmatprep.subr.bf16.mxu0 0
    %545 = vmatpush1.bf16.msra.mxu0 0
    %546 = vmatprep.subr.bf16.mxu0 0
    %547 = vmatpush1.bf16.msra.mxu0 0
    %548 = vmatprep.subr.bf16.mxu0 0
    %549 = vmatpush1.bf16.msra.mxu0 0
    %550 = vmatprep.subr.bf16.mxu0 0
    %551 = vmatpush1.bf16.msra.mxu0 0
    %552 = vmatprep.mubr.bf16.mxu0 0
    %553 = vmatmul.mubr.bf16.gmra.mrb[0].mxu0 %v518
    %v554 = vpop.f32.mrb[0].mxu0
    %v555 = vadd.f32 0.0, %v554
    %v556 = vpop.f32.mrb[0].mxu0
    %v557 = vadd.f32 0.0, %v556
    %v558 = vpop.f32.mrb[0].mxu0
    %v559 = vadd.f32 0.0, %v558
    %v560 = vpop.f32.mrb[0].mxu0
    %v561 = vadd.f32 0.0, %v560
    %562 = vdwg.mxu0
    %563 = vmatprep.subr.bf16.mxu0 %v488
    %564 = vmatpush1.bf16.msra.mxu0 %v487
    %565 = vmatprep.subr.bf16.mxu0 %v492
    %566 = vmatpush1.bf16.msra.mxu0 %v491
    %567 = vmatprep.subr.bf16.mxu0 %v496
    %568 = vmatpush1.bf16.msra.mxu0 %v495
    %569 = vmatprep.subr.bf16.mxu0 %v500
    %570 = vmatpush1.bf16.msra.mxu0 %v499
    %571 = vmatprep.subr.bf16.mxu0 0
    %572 = vmatpush1.bf16.msra.mxu0 0
    %573 = vmatprep.subr.bf16.mxu0 0
    %574 = vmatpush1.bf16.msra.mxu0 0
    %575 = vmatprep.subr.bf16.mxu0 0
    %576 = vmatpush1.bf16.msra.mxu0 0
    %577 = vmatprep.subr.bf16.mxu0 0
    %578 = vmatpush1.bf16.msra.mxu0 0
    %579 = vmatprep.subr.bf16.mxu0 0
    %580 = vmatpush1.bf16.msra.mxu0 0
    %581 = vmatprep.subr.bf16.mxu0 0
    %582 = vmatpush1.bf16.msra.mxu0 0
    %583 = vmatprep.subr.bf16.mxu0 0
    %584 = vmatpush1.bf16.msra.mxu0 0
    %585 = vmatprep.subr.bf16.mxu0 0
    %586 = vmatpush1.bf16.msra.mxu0 0
    %587 = vmatprep.subr.bf16.mxu0 0
    %588 = vmatpush1.bf16.msra.mxu0 0
    %589 = vmatprep.subr.bf16.mxu0 0
    %590 = vmatpush1.bf16.msra.mxu0 0
    %591 = vmatprep.subr.bf16.mxu0 0
    %592 = vmatpush1.bf16.msra.mxu0 0
    %593 = vmatprep.subr.bf16.mxu0 0
    %594 = vmatpush1.bf16.msra.mxu0 0
    %595 = vmatprep.mubr.bf16.mxu0 0
    %596 = vmatmul.mubr.bf16.gmra.mrb[0].mxu0 %v518
    %v597 = vpop.f32.mrb[0].mxu0
    %v598 = vadd.f32 0.0, %v597
    %v599 = vpop.f32.mrb[0].mxu0
    %v600 = vadd.f32 0.0, %v599
    %v601 = vpop.f32.mrb[0].mxu0
    %v602 = vadd.f32 0.0, %v601
    %v603 = vpop.f32.mrb[0].mxu0
    %v604 = vadd.f32 0.0, %v603
    %605 = vdwg.mxu0
    %v606 = vadd.f32 %v367, %v555
    %v607 = vadd.f32 %v369, %v557
    %v608 = vadd.f32 %v410, %v598
    %v609 = vadd.f32 %v412, %v600
    %v610 = vadd.f32 %v371, %v559
    %v611 = vadd.f32 %v373, %v561
    %v612 = vadd.f32 %v414, %v602
    %v613 = vadd.f32 %v416, %v604
    %v614 = vpack.c.bf16 %v41, %v41
    %s615 = scalar_lea.vmem [#allocation2], 384
    %v616 = vld [vmem:[%s615] sm:$0xff]
    %v617 = vld [vmem:[%s615 + $0x8] sm:$0xff]
    %v618 = vld [vmem:[%s615 + $0x10] sm:$0xff]
    %v619 = vld [vmem:[%s615 + $0x18] sm:$0xff]
    %v620 = vld [vmem:[%s615 + $0x20] sm:$0xff]
    %v621 = vld [vmem:[%s615 + $0x28] sm:$0xff]
    %v622 = vld [vmem:[%s615 + $0x30] sm:$0xff]
    %v623 = vld [vmem:[%s615 + $0x38] sm:$0xff]
    %v624 = vld [vmem:[%s615 + $0x40] sm:$0xff]
    %v625 = vld [vmem:[%s615 + $0x48] sm:$0xff]
    %v626 = vld [vmem:[%s615 + $0x50] sm:$0xff]
    %v627 = vld [vmem:[%s615 + $0x58] sm:$0xff]
    %v628 = vld [vmem:[%s615 + $0x60] sm:$0xff]
    %v629 = vld [vmem:[%s615 + $0x68] sm:$0xff]
    %v630 = vld [vmem:[%s615 + $0x70] sm:$0xff]
    %v631 = vld [vmem:[%s615 + $0x78] sm:$0xff]
    %vm632 = vsmask.f32 7424
    %v633 = vshrl.u32 %v42, 16
    %v635 = vshll.u32 %v42, 16
    %v637 = vrot.slane %v635, 1
    %v638 = vor.u32 %v633, %v637
    %v640 = vshll.u32 %v614, 16
    %v642 = vrot.slane %v640, 1
    %v643 = vsel %vm632, %v638, %v642
    %v660 = vunpack.c.l.b16 %v616
    %v661 = vunpack.c.h.b16 %v616
    %v662 = vunpack.c.l.b16 %v617
    %v663 = vunpack.c.h.b16 %v617
    %v664 = vunpack.c.l.b16 %v618
    %v665 = vunpack.c.h.b16 %v618
    %v666 = vunpack.c.l.b16 %v619
    %v667 = vunpack.c.h.b16 %v619
    %v668 = vunpack.c.l.b16 %v620
    %v669 = vunpack.c.h.b16 %v620
    %v670 = vunpack.c.l.b16 %v621
    %v671 = vunpack.c.h.b16 %v621
    %v672 = vunpack.c.l.b16 %v622
    %v673 = vunpack.c.h.b16 %v622
    %v674 = vunpack.c.l.b16 %v623
    %v675 = vunpack.c.h.b16 %v623
    %v676 = vunpack.c.l.b16 %v624
    %v677 = vunpack.c.h.b16 %v624
    %v678 = vunpack.c.l.b16 %v625
    %v679 = vunpack.c.h.b16 %v625
    %v680 = vunpack.c.l.b16 %v626
    %v681 = vunpack.c.h.b16 %v626
    %v682 = vunpack.c.l.b16 %v627
    %v683 = vunpack.c.h.b16 %v627
    %v684 = vunpack.c.l.b16 %v628
    %v685 = vunpack.c.h.b16 %v628
    %v686 = vunpack.c.l.b16 %v629
    %v687 = vunpack.c.h.b16 %v629
    %v688 = vunpack.c.l.b16 %v630
    %v689 = vunpack.c.h.b16 %v630
    %v690 = vunpack.c.l.b16 %v631
    %v691 = vunpack.c.h.b16 %v631
    %v692 = vpack.c.b16 %v664, %v660
    %v693 = vpack.c.b16 %v665, %v661
    %v694 = vpack.c.b16 %v666, %v662
    %v695 = vpack.c.b16 %v667, %v663
    %v696 = vpack.c.b16 %v672, %v668
    %v697 = vpack.c.b16 %v673, %v669
    %v698 = vpack.c.b16 %v674, %v670
    %v699 = vpack.c.b16 %v675, %v671
    %v700 = vpack.c.b16 %v680, %v676
    %v701 = vpack.c.b16 %v681, %v677
    %v702 = vpack.c.b16 %v682, %v678
    %v703 = vpack.c.b16 %v683, %v679
    %v704 = vpack.c.b16 %v688, %v684
    %v705 = vpack.c.b16 %v689, %v685
    %v706 = vpack.c.b16 %v690, %v686
    %v707 = vpack.c.b16 %v691, %v687
    %v725 = vsel %vm159, %v643, 0
    %727 = vmatprep.subr.bf16.mxu0 %v693
    %728 = vmatpush1.bf16.msra.mxu0 %v692
    %729 = vmatprep.subr.bf16.mxu0 %v697
    %730 = vmatpush1.bf16.msra.mxu0 %v696
    %731 = vmatprep.subr.bf16.mxu0 %v701
    %732 = vmatpush1.bf16.msra.mxu0 %v700
    %733 = vmatprep.subr.bf16.mxu0 %v705
    %734 = vmatpush1.bf16.msra.mxu0 %v704
    %735 = vmatprep.subr.bf16.mxu0 0
    %736 = vmatpush1.bf16.msra.mxu0 0
    %737 = vmatprep.subr.bf16.mxu0 0
    %738 = vmatpush1.bf16.msra.mxu0 0
    %739 = vmatprep.subr.bf16.mxu0 0
    %740 = vmatpush1.bf16.msra.mxu0 0
    %741 = vmatprep.subr.bf16.mxu0 0
    %742 = vmatpush1.bf16.msra.mxu0 0
    %743 = vmatprep.subr.bf16.mxu0 0
    %744 = vmatpush1.bf16.msra.mxu0 0
    %745 = vmatprep.subr.bf16.mxu0 0
    %746 = vmatpush1.bf16.msra.mxu0 0
    %747 = vmatprep.subr.bf16.mxu0 0
    %748 = vmatpush1.bf16.msra.mxu0 0
    %749 = vmatprep.subr.bf16.mxu0 0
    %750 = vmatpush1.bf16.msra.mxu0 0
    %751 = vmatprep.subr.bf16.mxu0 0
    %752 = vmatpush1.bf16.msra.mxu0 0
    %753 = vmatprep.subr.bf16.mxu0 0
    %754 = vmatpush1.bf16.msra.mxu0 0
    %755 = vmatprep.subr.bf16.mxu0 0
    %756 = vmatpush1.bf16.msra.mxu0 0
    %757 = vmatprep.subr.bf16.mxu0 0
    %758 = vmatpush1.bf16.msra.mxu0 0
    %759 = vmatprep.mubr.bf16.mxu0 0
    %760 = vmatmul.mubr.bf16.gmra.mrb[0].mxu0 %v725
    %v761 = vpop.f32.mrb[0].mxu0
    %v762 = vadd.f32 0.0, %v761
    %v763 = vpop.f32.mrb[0].mxu0
    %v764 = vadd.f32 0.0, %v763
    %v765 = vpop.f32.mrb[0].mxu0
    %v766 = vadd.f32 0.0, %v765
    %v767 = vpop.f32.mrb[0].mxu0
    %v768 = vadd.f32 0.0, %v767
    %769 = vdwg.mxu0
    %770 = vmatprep.subr.bf16.mxu0 %v695
    %771 = vmatpush1.bf16.msra.mxu0 %v694
    %772 = vmatprep.subr.bf16.mxu0 %v699
    %773 = vmatpush1.bf16.msra.mxu0 %v698
    %774 = vmatprep.subr.bf16.mxu0 %v703
    %775 = vmatpush1.bf16.msra.mxu0 %v702
    %776 = vmatprep.subr.bf16.mxu0 %v707
    %777 = vmatpush1.bf16.msra.mxu0 %v706
    %778 = vmatprep.subr.bf16.mxu0 0
    %779 = vmatpush1.bf16.msra.mxu0 0
    %780 = vmatprep.subr.bf16.mxu0 0
    %781 = vmatpush1.bf16.msra.mxu0 0
    %782 = vmatprep.subr.bf16.mxu0 0
    %783 = vmatpush1.bf16.msra.mxu0 0
    %784 = vmatprep.subr.bf16.mxu0 0
    %785 = vmatpush1.bf16.msra.mxu0 0
    %786 = vmatprep.subr.bf16.mxu0 0
    %787 = vmatpush1.bf16.msra.mxu0 0
    %788 = vmatprep.subr.bf16.mxu0 0
    %789 = vmatpush1.bf16.msra.mxu0 0
    %790 = vmatprep.subr.bf16.mxu0 0
    %791 = vmatpush1.bf16.msra.mxu0 0
    %792 = vmatprep.subr.bf16.mxu0 0
    %793 = vmatpush1.bf16.msra.mxu0 0
    %794 = vmatprep.subr.bf16.mxu0 0
    %795 = vmatpush1.bf16.msra.mxu0 0
    %796 = vmatprep.subr.bf16.mxu0 0
    %797 = vmatpush1.bf16.msra.mxu0 0
    %798 = vmatprep.subr.bf16.mxu0 0
    %799 = vmatpush1.bf16.msra.mxu0 0
    %800 = vmatprep.subr.bf16.mxu0 0
    %801 = vmatpush1.bf16.msra.mxu0 0
    %802 = vmatprep.mubr.bf16.mxu0 0
    %803 = vmatmul.mubr.bf16.gmra.mrb[0].mxu0 %v725
    %v804 = vpop.f32.mrb[0].mxu0
    %v805 = vadd.f32 0.0, %v804
    %v806 = vpop.f32.mrb[0].mxu0
    %v807 = vadd.f32 0.0, %v806
    %v808 = vpop.f32.mrb[0].mxu0
    %v809 = vadd.f32 0.0, %v808
    %v810 = vpop.f32.mrb[0].mxu0
    %v811 = vadd.f32 0.0, %v810
    %812 = vdwg.mxu0
    %v813 = vadd.f32 %v606, %v762
    %v814 = vadd.f32 %v607, %v764
    %v815 = vadd.f32 %v608, %v805
    %v816 = vadd.f32 %v609, %v807
    %v817 = vadd.f32 %v610, %v766
    %v818 = vadd.f32 %v611, %v768
    %v819 = vadd.f32 %v612, %v809
    %v820 = vadd.f32 %v613, %v811
    %s821 = scalar_lea.vmem [#allocation2], 512
    %v822 = vld [vmem:[%s821] sm:$0xff]
    %v823 = vld [vmem:[%s821 + $0x8] sm:$0xff]
    %v824 = vld [vmem:[%s821 + $0x10] sm:$0xff]
    %v825 = vld [vmem:[%s821 + $0x18] sm:$0xff]
    %v826 = vld [vmem:[%s821 + $0x20] sm:$0xff]
    %v827 = vld [vmem:[%s821 + $0x28] sm:$0xff]
    %v828 = vld [vmem:[%s821 + $0x30] sm:$0xff]
    %v829 = vld [vmem:[%s821 + $0x38] sm:$0xff]
    %v830 = vld [vmem:[%s821 + $0x40] sm:$0xff]
    %v831 = vld [vmem:[%s821 + $0x48] sm:$0xff]
    %v832 = vld [vmem:[%s821 + $0x50] sm:$0xff]
    %v833 = vld [vmem:[%s821 + $0x58] sm:$0xff]
    %v834 = vld [vmem:[%s821 + $0x60] sm:$0xff]
    %v835 = vld [vmem:[%s821 + $0x68] sm:$0xff]
    %v836 = vld [vmem:[%s821 + $0x70] sm:$0xff]
    %v837 = vld [vmem:[%s821 + $0x78] sm:$0xff]
    %838 = vrot.lane.b32.xlu0 %v643, 124
    %v839 = vpop.permute.xlu0 %838
    %v856 = vunpack.c.l.b16 %v822
    %v857 = vunpack.c.h.b16 %v822
    %v858 = vunpack.c.l.b16 %v823
    %v859 = vunpack.c.h.b16 %v823
    %v860 = vunpack.c.l.b16 %v824
    %v861 = vunpack.c.h.b16 %v824
    %v862 = vunpack.c.l.b16 %v825
    %v863 = vunpack.c.h.b16 %v825
    %v864 = vunpack.c.l.b16 %v826
    %v865 = vunpack.c.h.b16 %v826
    %v866 = vunpack.c.l.b16 %v827
    %v867 = vunpack.c.h.b16 %v827
    %v868 = vunpack.c.l.b16 %v828
    %v869 = vunpack.c.h.b16 %v828
    %v870 = vunpack.c.l.b16 %v829
    %v871 = vunpack.c.h.b16 %v829
    %v872 = vunpack.c.l.b16 %v830
    %v873 = vunpack.c.h.b16 %v830
    %v874 = vunpack.c.l.b16 %v831
    %v875 = vunpack.c.h.b16 %v831
    %v876 = vunpack.c.l.b16 %v832
    %v877 = vunpack.c.h.b16 %v832
    %v878 = vunpack.c.l.b16 %v833
    %v879 = vunpack.c.h.b16 %v833
    %v880 = vunpack.c.l.b16 %v834
    %v881 = vunpack.c.h.b16 %v834
    %v882 = vunpack.c.l.b16 %v835
    %v883 = vunpack.c.h.b16 %v835
    %v884 = vunpack.c.l.b16 %v836
    %v885 = vunpack.c.h.b16 %v836
    %v886 = vunpack.c.l.b16 %v837
    %v887 = vunpack.c.h.b16 %v837
    %v888 = vpack.c.b16 %v860, %v856
    %v889 = vpack.c.b16 %v861, %v857
    %v890 = vpack.c.b16 %v862, %v858
    %v891 = vpack.c.b16 %v863, %v859
    %v892 = vpack.c.b16 %v868, %v864
    %v893 = vpack.c.b16 %v869, %v865
    %v894 = vpack.c.b16 %v870, %v866
    %v895 = vpack.c.b16 %v871, %v867
    %v896 = vpack.c.b16 %v876, %v872
    %v897 = vpack.c.b16 %v877, %v873
    %v898 = vpack.c.b16 %v878, %v874
    %v899 = vpack.c.b16 %v879, %v875
    %v900 = vpack.c.b16 %v884, %v880
    %v901 = vpack.c.b16 %v885, %v881
    %v902 = vpack.c.b16 %v886, %v882
    %v903 = vpack.c.b16 %v887, %v883
    %v921 = vsel %vm159, %v839, 0
    %923 = vmatprep.subr.bf16.mxu0 %v889
    %924 = vmatpush1.bf16.msra.mxu0 %v888
    %925 = vmatprep.subr.bf16.mxu0 %v893
    %926 = vmatpush1.bf16.msra.mxu0 %v892
    %927 = vmatprep.subr.bf16.mxu0 %v897
    %928 = vmatpush1.bf16.msra.mxu0 %v896
    %929 = vmatprep.subr.bf16.mxu0 %v901
    %930 = vmatpush1.bf16.msra.mxu0 %v900
    %931 = vmatprep.subr.bf16.mxu0 0
    %932 = vmatpush1.bf16.msra.mxu0 0
    %933 = vmatprep.subr.bf16.mxu0 0
    %934 = vmatpush1.bf16.msra.mxu0 0
    %935 = vmatprep.subr.bf16.mxu0 0
    %936 = vmatpush1.bf16.msra.mxu0 0
    %937 = vmatprep.subr.bf16.mxu0 0
    %938 = vmatpush1.bf16.msra.mxu0 0
    %939 = vmatprep.subr.bf16.mxu0 0
    %940 = vmatpush1.bf16.msra.mxu0 0
    %941 = vmatprep.subr.bf16.mxu0 0
    %942 = vmatpush1.bf16.msra.mxu0 0
    %943 = vmatprep.subr.bf16.mxu0 0
    %944 = vmatpush1.bf16.msra.mxu0 0
    %945 = vmatprep.subr.bf16.mxu0 0
    %946 = vmatpush1.bf16.msra.mxu0 0
    %947 = vmatprep.subr.bf16.mxu0 0
    %948 = vmatpush1.bf16.msra.mxu0 0
    %949 = vmatprep.subr.bf16.mxu0 0
    %950 = vmatpush1.bf16.msra.mxu0 0
    %951 = vmatprep.subr.bf16.mxu0 0
    %952 = vmatpush1.bf16.msra.mxu0 0
    %953 = vmatprep.subr.bf16.mxu0 0
    %954 = vmatpush1.bf16.msra.mxu0 0
    %955 = vmatprep.mubr.bf16.mxu0 0
    %956 = vmatmul.mubr.bf16.gmra.mrb[0].mxu0 %v921
    %v957 = vpop.f32.mrb[0].mxu0
    %v958 = vadd.f32 0.0, %v957
    %v959 = vpop.f32.mrb[0].mxu0
    %v960 = vadd.f32 0.0, %v959
    %v961 = vpop.f32.mrb[0].mxu0
    %v962 = vadd.f32 0.0, %v961
    %v963 = vpop.f32.mrb[0].mxu0
    %v964 = vadd.f32 0.0, %v963
    %965 = vdwg.mxu0
    %966 = vmatprep.subr.bf16.mxu0 %v891
    %967 = vmatpush1.bf16.msra.mxu0 %v890
    %968 = vmatprep.subr.bf16.mxu0 %v895
    %969 = vmatpush1.bf16.msra.mxu0 %v894
    %970 = vmatprep.subr.bf16.mxu0 %v899
    %971 = vmatpush1.bf16.msra.mxu0 %v898
    %972 = vmatprep.subr.bf16.mxu0 %v903
    %973 = vmatpush1.bf16.msra.mxu0 %v902
    %974 = vmatprep.subr.bf16.mxu0 0
    %975 = vmatpush1.bf16.msra.mxu0 0
    %976 = vmatprep.subr.bf16.mxu0 0
    %977 = vmatpush1.bf16.msra.mxu0 0
    %978 = vmatprep.subr.bf16.mxu0 0
    %979 = vmatpush1.bf16.msra.mxu0 0
    %980 = vmatprep.subr.bf16.mxu0 0
    %981 = vmatpush1.bf16.msra.mxu0 0
    %982 = vmatprep.subr.bf16.mxu0 0
    %983 = vmatpush1.bf16.msra.mxu0 0
    %984 = vmatprep.subr.bf16.mxu0 0
    %985 = vmatpush1.bf16.msra.mxu0 0
    %986 = vmatprep.subr.bf16.mxu0 0
    %987 = vmatpush1.bf16.msra.mxu0 0
    %988 = vmatprep.subr.bf16.mxu0 0
    %989 = vmatpush1.bf16.msra.mxu0 0
    %990 = vmatprep.subr.bf16.mxu0 0
    %991 = vmatpush1.bf16.msra.mxu0 0
    %992 = vmatprep.subr.bf16.mxu0 0
    %993 = vmatpush1.bf16.msra.mxu0 0
    %994 = vmatprep.subr.bf16.mxu0 0
    %995 = vmatpush1.bf16.msra.mxu0 0
    %996 = vmatprep.subr.bf16.mxu0 0
    %997 = vmatpush1.bf16.msra.mxu0 0
    %998 = vmatprep.mubr.bf16.mxu0 0
    %999 = vmatmul.mubr.bf16.gmra.mrb[0].mxu0 %v921
    %v1000 = vpop.f32.mrb[0].mxu0
    %v1001 = vadd.f32 0.0, %v1000
    %v1002 = vpop.f32.mrb[0].mxu0
    %v1003 = vadd.f32 0.0, %v1002
    %v1004 = vpop.f32.mrb[0].mxu0
    %v1005 = vadd.f32 0.0, %v1004
    %v1006 = vpop.f32.mrb[0].mxu0
    %v1007 = vadd.f32 0.0, %v1006
    %1008 = vdwg.mxu0
    %v1009 = vadd.f32 %v813, %v958
    %v1010 = vadd.f32 %v814, %v960
    %v1011 = vadd.f32 %v815, %v1001
    %v1012 = vadd.f32 %v816, %v1003
    %v1013 = vadd.f32 %v817, %v962
    %v1014 = vadd.f32 %v818, %v964
    %v1015 = vadd.f32 %v819, %v1005
    %v1016 = vadd.f32 %v820, %v1007
    %s1017 = scalar_lea.vmem [#allocation2], 640
    %v1018 = vld [vmem:[%s1017] sm:$0xff]
    %v1019 = vld [vmem:[%s1017 + $0x8] sm:$0xff]
    %v1020 = vld [vmem:[%s1017 + $0x10] sm:$0xff]
    %v1021 = vld [vmem:[%s1017 + $0x18] sm:$0xff]
    %v1022 = vld [vmem:[%s1017 + $0x20] sm:$0xff]
    %v1023 = vld [vmem:[%s1017 + $0x28] sm:$0xff]
    %v1024 = vld [vmem:[%s1017 + $0x30] sm:$0xff]
    %v1025 = vld [vmem:[%s1017 + $0x38] sm:$0xff]
    %v1026 = vld [vmem:[%s1017 + $0x40] sm:$0xff]
    %v1027 = vld [vmem:[%s1017 + $0x48] sm:$0xff]
    %v1028 = vld [vmem:[%s1017 + $0x50] sm:$0xff]
    %v1029 = vld [vmem:[%s1017 + $0x58] sm:$0xff]
    %v1030 = vld [vmem:[%s1017 + $0x60] sm:$0xff]
    %v1031 = vld [vmem:[%s1017 + $0x68] sm:$0xff]
    %v1032 = vld [vmem:[%s1017 + $0x70] sm:$0xff]
    %v1033 = vld [vmem:[%s1017 + $0x78] sm:$0xff]
    %1034 = vrot.lane.b32.xlu0 %v643, 120
    %v1035 = vpop.permute.xlu0 %1034
    %v1052 = vunpack.c.l.b16 %v1018
    %v1053 = vunpack.c.h.b16 %v1018
    %v1054 = vunpack.c.l.b16 %v1019
    %v1055 = vunpack.c.h.b16 %v1019
    %v1056 = vunpack.c.l.b16 %v1020
    %v1057 = vunpack.c.h.b16 %v1020
    %v1058 = vunpack.c.l.b16 %v1021
    %v1059 = vunpack.c.h.b16 %v1021
    %v1060 = vunpack.c.l.b16 %v1022
    %v1061 = vunpack.c.h.b16 %v1022
    %v1062 = vunpack.c.l.b16 %v1023
    %v1063 = vunpack.c.h.b16 %v1023
    %v1064 = vunpack.c.l.b16 %v1024
    %v1065 = vunpack.c.h.b16 %v1024
    %v1066 = vunpack.c.l.b16 %v1025
    %v1067 = vunpack.c.h.b16 %v1025
    %v1068 = vunpack.c.l.b16 %v1026
    %v1069 = vunpack.c.h.b16 %v1026
    %v1070 = vunpack.c.l.b16 %v1027
    %v1071 = vunpack.c.h.b16 %v1027
    %v1072 = vunpack.c.l.b16 %v1028
    %v1073 = vunpack.c.h.b16 %v1028
    %v1074 = vunpack.c.l.b16 %v1029
    %v1075 = vunpack.c.h.b16 %v1029
    %v1076 = vunpack.c.l.b16 %v1030
    %v1077 = vunpack.c.h.b16 %v1030
    %v1078 = vunpack.c.l.b16 %v1031
    %v1079 = vunpack.c.h.b16 %v1031
    %v1080 = vunpack.c.l.b16 %v1032
    %v1081 = vunpack.c.h.b16 %v1032
    %v1082 = vunpack.c.l.b16 %v1033
    %v1083 = vunpack.c.h.b16 %v1033
    %v1084 = vpack.c.b16 %v1056, %v1052
    %v1085 = vpack.c.b16 %v1057, %v1053
    %v1086 = vpack.c.b16 %v1058, %v1054
    %v1087 = vpack.c.b16 %v1059, %v1055
    %v1088 = vpack.c.b16 %v1064, %v1060
    %v1089 = vpack.c.b16 %v1065, %v1061
    %v1090 = vpack.c.b16 %v1066, %v1062
    %v1091 = vpack.c.b16 %v1067, %v1063
    %v1092 = vpack.c.b16 %v1072, %v1068
    %v1093 = vpack.c.b16 %v1073, %v1069
    %v1094 = vpack.c.b16 %v1074, %v1070
    %v1095 = vpack.c.b16 %v1075, %v1071
    %v1096 = vpack.c.b16 %v1080, %v1076
    %v1097 = vpack.c.b16 %v1081, %v1077
    %v1098 = vpack.c.b16 %v1082, %v1078
    %v1099 = vpack.c.b16 %v1083, %v1079
    %v1117 = vsel %vm159, %v1035, 0
    %1119 = vmatprep.subr.bf16.mxu0 %v1085
    %1120 = vmatpush1.bf16.msra.mxu0 %v1084
    %1121 = vmatprep.subr.bf16.mxu0 %v1089
    %1122 = vmatpush1.bf16.msra.mxu0 %v1088
    %1123 = vmatprep.subr.bf16.mxu0 %v1093
    %1124 = vmatpush1.bf16.msra.mxu0 %v1092
    %1125 = vmatprep.subr.bf16.mxu0 %v1097
    %1126 = vmatpush1.bf16.msra.mxu0 %v1096
    %1127 = vmatprep.subr.bf16.mxu0 0
    %1128 = vmatpush1.bf16.msra.mxu0 0
    %1129 = vmatprep.subr.bf16.mxu0 0
    %1130 = vmatpush1.bf16.msra.mxu0 0
    %1131 = vmatprep.subr.bf16.mxu0 0
    %1132 = vmatpush1.bf16.msra.mxu0 0
    %1133 = vmatprep.subr.bf16.mxu0 0
    %1134 = vmatpush1.bf16.msra.mxu0 0
    %1135 = vmatprep.subr.bf16.mxu0 0
    %1136 = vmatpush1.bf16.msra.mxu0 0
    %1137 = vmatprep.subr.bf16.mxu0 0
    %1138 = vmatpush1.bf16.msra.mxu0 0
    %1139 = vmatprep.subr.bf16.mxu0 0
    %1140 = vmatpush1.bf16.msra.mxu0 0
    %1141 = vmatprep.subr.bf16.mxu0 0
    %1142 = vmatpush1.bf16.msra.mxu0 0
    %1143 = vmatprep.subr.bf16.mxu0 0
    %1144 = vmatpush1.bf16.msra.mxu0 0
    %1145 = vmatprep.subr.bf16.mxu0 0
    %1146 = vmatpush1.bf16.msra.mxu0 0
    %1147 = vmatprep.subr.bf16.mxu0 0
    %1148 = vmatpush1.bf16.msra.mxu0 0
    %1149 = vmatprep.subr.bf16.mxu0 0
    %1150 = vmatpush1.bf16.msra.mxu0 0
    %1151 = vmatprep.mubr.bf16.mxu0 0
    %1152 = vmatmul.mubr.bf16.gmra.mrb[0].mxu0 %v1117
    %v1153 = vpop.f32.mrb[0].mxu0
    %v1154 = vadd.f32 0.0, %v1153
    %v1155 = vpop.f32.mrb[0].mxu0
    %v1156 = vadd.f32 0.0, %v1155
    %v1157 = vpop.f32.mrb[0].mxu0
    %v1158 = vadd.f32 0.0, %v1157
    %v1159 = vpop.f32.mrb[0].mxu0
    %v1160 = vadd.f32 0.0, %v1159
    %1161 = vdwg.mxu0
    %1162 = vmatprep.subr.bf16.mxu0 %v1087
    %1163 = vmatpush1.bf16.msra.mxu0 %v1086
    %1164 = vmatprep.subr.bf16.mxu0 %v1091
    %1165 = vmatpush1.bf16.msra.mxu0 %v1090
    %1166 = vmatprep.subr.bf16.mxu0 %v1095
    %1167 = vmatpush1.bf16.msra.mxu0 %v1094
    %1168 = vmatprep.subr.bf16.mxu0 %v1099
    %1169 = vmatpush1.bf16.msra.mxu0 %v1098
    %1170 = vmatprep.subr.bf16.mxu0 0
    %1171 = vmatpush1.bf16.msra.mxu0 0
    %1172 = vmatprep.subr.bf16.mxu0 0
    %1173 = vmatpush1.bf16.msra.mxu0 0
    %1174 = vmatprep.subr.bf16.mxu0 0
    %1175 = vmatpush1.bf16.msra.mxu0 0
    %1176 = vmatprep.subr.bf16.mxu0 0
    %1177 = vmatpush1.bf16.msra.mxu0 0
    %1178 = vmatprep.subr.bf16.mxu0 0
    %1179 = vmatpush1.bf16.msra.mxu0 0
    %1180 = vmatprep.subr.bf16.mxu0 0
    %1181 = vmatpush1.bf16.msra.mxu0 0
    %1182 = vmatprep.subr.bf16.mxu0 0
    %1183 = vmatpush1.bf16.msra.mxu0 0
    %1184 = vmatprep.subr.bf16.mxu0 0
    %1185 = vmatpush1.bf16.msra.mxu0 0
    %1186 = vmatprep.subr.bf16.mxu0 0
    %1187 = vmatpush1.bf16.msra.mxu0 0
    %1188 = vmatprep.subr.bf16.mxu0 0
    %1189 = vmatpush1.bf16.msra.mxu0 0
    %1190 = vmatprep.subr.bf16.mxu0 0
    %1191 = vmatpush1.bf16.msra.mxu0 0
    %1192 = vmatprep.subr.bf16.mxu0 0
    %1193 = vmatpush1.bf16.msra.mxu0 0
    %1194 = vmatprep.mubr.bf16.mxu0 0
    %1195 = vmatmul.mubr.bf16.gmra.mrb[0].mxu0 %v1117
    %v1196 = vpop.f32.mrb[0].mxu0
    %v1197 = vadd.f32 0.0, %v1196
    %v1198 = vpop.f32.mrb[0].mxu0
    %v1199 = vadd.f32 0.0, %v1198
    %v1200 = vpop.f32.mrb[0].mxu0
    %v1201 = vadd.f32 0.0, %v1200
    %v1202 = vpop.f32.mrb[0].mxu0
    %v1203 = vadd.f32 0.0, %v1202
    %1204 = vdwg.mxu0
    %v1205 = vadd.f32 %v1009, %v1154
    %v1206 = vadd.f32 %v1010, %v1156
    %v1207 = vadd.f32 %v1011, %v1197
    %v1208 = vadd.f32 %v1012, %v1199
    %v1209 = vadd.f32 %v1013, %v1158
    %v1210 = vadd.f32 %v1014, %v1160
    %v1211 = vadd.f32 %v1015, %v1201
    %v1212 = vadd.f32 %v1016, %v1203
    %s1213 = scalar_lea.vmem [#allocation2], 768
    %v1214 = vld [vmem:[%s1213] sm:$0xff]
    %v1215 = vld [vmem:[%s1213 + $0x8] sm:$0xff]
    %v1216 = vld [vmem:[%s1213 + $0x10] sm:$0xff]
    %v1217 = vld [vmem:[%s1213 + $0x18] sm:$0xff]
    %v1218 = vld [vmem:[%s1213 + $0x20] sm:$0xff]
    %v1219 = vld [vmem:[%s1213 + $0x28] sm:$0xff]
    %v1220 = vld [vmem:[%s1213 + $0x30] sm:$0xff]
    %v1221 = vld [vmem:[%s1213 + $0x38] sm:$0xff]
    %v1222 = vld [vmem:[%s1213 + $0x40] sm:$0xff]
    %v1223 = vld [vmem:[%s1213 + $0x48] sm:$0xff]
    %v1224 = vld [vmem:[%s1213 + $0x50] sm:$0xff]
    %v1225 = vld [vmem:[%s1213 + $0x58] sm:$0xff]
    %v1226 = vld [vmem:[%s1213 + $0x60] sm:$0xff]
    %v1227 = vld [vmem:[%s1213 + $0x68] sm:$0xff]
    %v1228 = vld [vmem:[%s1213 + $0x70] sm:$0xff]
    %v1229 = vld [vmem:[%s1213 + $0x78] sm:$0xff]
    %vm1231 = vcmask 1046528
    %v1232 = vrot.slane %v42, 1
    %v1233 = vrot.slane %v614, 1
    %v1234 = vsel %vm1231, %v1232, %v1233
    %v1251 = vunpack.c.l.b16 %v1214
    %v1252 = vunpack.c.h.b16 %v1214
    %v1253 = vunpack.c.l.b16 %v1215
    %v1254 = vunpack.c.h.b16 %v1215
    %v1255 = vunpack.c.l.b16 %v1216
    %v1256 = vunpack.c.h.b16 %v1216
    %v1257 = vunpack.c.l.b16 %v1217
    %v1258 = vunpack.c.h.b16 %v1217
    %v1259 = vunpack.c.l.b16 %v1218
    %v1260 = vunpack.c.h.b16 %v1218
    %v1261 = vunpack.c.l.b16 %v1219
    %v1262 = vunpack.c.h.b16 %v1219
    %v1263 = vunpack.c.l.b16 %v1220
    %v1264 = vunpack.c.h.b16 %v1220
    %v1265 = vunpack.c.l.b16 %v1221
    %v1266 = vunpack.c.h.b16 %v1221
    %v1267 = vunpack.c.l.b16 %v1222
    %v1268 = vunpack.c.h.b16 %v1222
    %v1269 = vunpack.c.l.b16 %v1223
    %v1270 = vunpack.c.h.b16 %v1223
    %v1271 = vunpack.c.l.b16 %v1224
    %v1272 = vunpack.c.h.b16 %v1224
    %v1273 = vunpack.c.l.b16 %v1225
    %v1274 = vunpack.c.h.b16 %v1225
    %v1275 = vunpack.c.l.b16 %v1226
    %v1276 = vunpack.c.h.b16 %v1226
    %v1277 = vunpack.c.l.b16 %v1227
    %v1278 = vunpack.c.h.b16 %v1227
    %v1279 = vunpack.c.l.b16 %v1228
    %v1280 = vunpack.c.h.b16 %v1228
    %v1281 = vunpack.c.l.b16 %v1229
    %v1282 = vunpack.c.h.b16 %v1229
    %v1283 = vpack.c.b16 %v1255, %v1251
    %v1284 = vpack.c.b16 %v1256, %v1252
    %v1285 = vpack.c.b16 %v1257, %v1253
    %v1286 = vpack.c.b16 %v1258, %v1254
    %v1287 = vpack.c.b16 %v1263, %v1259
    %v1288 = vpack.c.b16 %v1264, %v1260
    %v1289 = vpack.c.b16 %v1265, %v1261
    %v1290 = vpack.c.b16 %v1266, %v1262
    %v1291 = vpack.c.b16 %v1271, %v1267
    %v1292 = vpack.c.b16 %v1272, %v1268
    %v1293 = vpack.c.b16 %v1273, %v1269
    %v1294 = vpack.c.b16 %v1274, %v1270
    %v1295 = vpack.c.b16 %v1279, %v1275
    %v1296 = vpack.c.b16 %v1280, %v1276
    %v1297 = vpack.c.b16 %v1281, %v1277
    %v1298 = vpack.c.b16 %v1282, %v1278
    %v1316 = vsel %vm159, %v1234, 0
    %1318 = vmatprep.subr.bf16.mxu0 %v1284
    %1319 = vmatpush1.bf16.msra.mxu0 %v1283
    %1320 = vmatprep.subr.bf16.mxu0 %v1288
    %1321 = vmatpush1.bf16.msra.mxu0 %v1287
    %1322 = vmatprep.subr.bf16.mxu0 %v1292
    %1323 = vmatpush1.bf16.msra.mxu0 %v1291
    %1324 = vmatprep.subr.bf16.mxu0 %v1296
    %1325 = vmatpush1.bf16.msra.mxu0 %v1295
    %1326 = vmatprep.subr.bf16.mxu0 0
    %1327 = vmatpush1.bf16.msra.mxu0 0
    %1328 = vmatprep.subr.bf16.mxu0 0
    %1329 = vmatpush1.bf16.msra.mxu0 0
    %1330 = vmatprep.subr.bf16.mxu0 0
    %1331 = vmatpush1.bf16.msra.mxu0 0
    %1332 = vmatprep.subr.bf16.mxu0 0
    %1333 = vmatpush1.bf16.msra.mxu0 0
    %1334 = vmatprep.subr.bf16.mxu0 0
    %1335 = vmatpush1.bf16.msra.mxu0 0
    %1336 = vmatprep.subr.bf16.mxu0 0
    %1337 = vmatpush1.bf16.msra.mxu0 0
    %1338 = vmatprep.subr.bf16.mxu0 0
    %1339 = vmatpush1.bf16.msra.mxu0 0
    %1340 = vmatprep.subr.bf16.mxu0 0
    %1341 = vmatpush1.bf16.msra.mxu0 0
    %1342 = vmatprep.subr.bf16.mxu0 0
    %1343 = vmatpush1.bf16.msra.mxu0 0
    %1344 = vmatprep.subr.bf16.mxu0 0
    %1345 = vmatpush1.bf16.msra.mxu0 0
    %1346 = vmatprep.subr.bf16.mxu0 0
    %1347 = vmatpush1.bf16.msra.mxu0 0
    %1348 = vmatprep.subr.bf16.mxu0 0
    %1349 = vmatpush1.bf16.msra.mxu0 0
    %1350 = vmatprep.mubr.bf16.mxu0 0
    %1351 = vmatmul.mubr.bf16.gmra.mrb[0].mxu0 %v1316
    %v1352 = vpop.f32.mrb[0].mxu0
    %v1353 = vadd.f32 0.0, %v1352
    %v1354 = vpop.f32.mrb[0].mxu0
    %v1355 = vadd.f32 0.0, %v1354
    %v1356 = vpop.f32.mrb[0].mxu0
    %v1357 = vadd.f32 0.0, %v1356
    %v1358 = vpop.f32.mrb[0].mxu0
    %v1359 = vadd.f32 0.0, %v1358
    %1360 = vdwg.mxu0
    %1361 = vmatprep.subr.bf16.mxu0 %v1286
    %1362 = vmatpush1.bf16.msra.mxu0 %v1285
    %1363 = vmatprep.subr.bf16.mxu0 %v1290
    %1364 = vmatpush1.bf16.msra.mxu0 %v1289
    %1365 = vmatprep.subr.bf16.mxu0 %v1294
    %1366 = vmatpush1.bf16.msra.mxu0 %v1293
    %1367 = vmatprep.subr.bf16.mxu0 %v1298
    %1368 = vmatpush1.bf16.msra.mxu0 %v1297
    %1369 = vmatprep.subr.bf16.mxu0 0
    %1370 = vmatpush1.bf16.msra.mxu0 0
    %1371 = vmatprep.subr.bf16.mxu0 0
    %1372 = vmatpush1.bf16.msra.mxu0 0
    %1373 = vmatprep.subr.bf16.mxu0 0
    %1374 = vmatpush1.bf16.msra.mxu0 0
    %1375 = vmatprep.subr.bf16.mxu0 0
    %1376 = vmatpush1.bf16.msra.mxu0 0
    %1377 = vmatprep.subr.bf16.mxu0 0
    %1378 = vmatpush1.bf16.msra.mxu0 0
    %1379 = vmatprep.subr.bf16.mxu0 0
    %1380 = vmatpush1.bf16.msra.mxu0 0
    %1381 = vmatprep.subr.bf16.mxu0 0
    %1382 = vmatpush1.bf16.msra.mxu0 0
    %1383 = vmatprep.subr.bf16.mxu0 0
    %1384 = vmatpush1.bf16.msra.mxu0 0
    %1385 = vmatprep.subr.bf16.mxu0 0
    %1386 = vmatpush1.bf16.msra.mxu0 0
    %1387 = vmatprep.subr.bf16.mxu0 0
    %1388 = vmatpush1.bf16.msra.mxu0 0
    %1389 = vmatprep.subr.bf16.mxu0 0
    %1390 = vmatpush1.bf16.msra.mxu0 0
    %1391 = vmatprep.subr.bf16.mxu0 0
    %1392 = vmatpush1.bf16.msra.mxu0 0
    %1393 = vmatprep.mubr.bf16.mxu0 0
    %1394 = vmatmul.mubr.bf16.gmra.mrb[0].mxu0 %v1316
    %v1395 = vpop.f32.mrb[0].mxu0
    %v1396 = vadd.f32 0.0, %v1395
    %v1397 = vpop.f32.mrb[0].mxu0
    %v1398 = vadd.f32 0.0, %v1397
    %v1399 = vpop.f32.mrb[0].mxu0
    %v1400 = vadd.f32 0.0, %v1399
    %v1401 = vpop.f32.mrb[0].mxu0
    %v1402 = vadd.f32 0.0, %v1401
    %1403 = vdwg.mxu0
    %v1404 = vadd.f32 %v1205, %v1353
    %v1405 = vadd.f32 %v1206, %v1355
    %v1406 = vadd.f32 %v1207, %v1396
    %v1407 = vadd.f32 %v1208, %v1398
    %v1408 = vadd.f32 %v1209, %v1357
    %v1409 = vadd.f32 %v1210, %v1359
    %v1410 = vadd.f32 %v1211, %v1400
    %v1411 = vadd.f32 %v1212, %v1402
    %s1412 = scalar_lea.vmem [#allocation2], 896
    %v1413 = vld [vmem:[%s1412] sm:$0xff]
    %v1414 = vld [vmem:[%s1412 + $0x8] sm:$0xff]
    %v1415 = vld [vmem:[%s1412 + $0x10] sm:$0xff]
    %v1416 = vld [vmem:[%s1412 + $0x18] sm:$0xff]
    %v1417 = vld [vmem:[%s1412 + $0x20] sm:$0xff]
    %v1418 = vld [vmem:[%s1412 + $0x28] sm:$0xff]
    %v1419 = vld [vmem:[%s1412 + $0x30] sm:$0xff]
    %v1420 = vld [vmem:[%s1412 + $0x38] sm:$0xff]
    %v1421 = vld [vmem:[%s1412 + $0x40] sm:$0xff]
    %v1422 = vld [vmem:[%s1412 + $0x48] sm:$0xff]
    %v1423 = vld [vmem:[%s1412 + $0x50] sm:$0xff]
    %v1424 = vld [vmem:[%s1412 + $0x58] sm:$0xff]
    %v1425 = vld [vmem:[%s1412 + $0x60] sm:$0xff]
    %v1426 = vld [vmem:[%s1412 + $0x68] sm:$0xff]
    %v1427 = vld [vmem:[%s1412 + $0x70] sm:$0xff]
    %v1428 = vld [vmem:[%s1412 + $0x78] sm:$0xff]
    %1429 = vrot.lane.b32.xlu0 %v1234, 124
    %v1430 = vpop.permute.xlu0 %1429
    %v1447 = vunpack.c.l.b16 %v1413
    %v1448 = vunpack.c.h.b16 %v1413
    %v1449 = vunpack.c.l.b16 %v1414
    %v1450 = vunpack.c.h.b16 %v1414
    %v1451 = vunpack.c.l.b16 %v1415
    %v1452 = vunpack.c.h.b16 %v1415
    %v1453 = vunpack.c.l.b16 %v1416
    %v1454 = vunpack.c.h.b16 %v1416
    %v1455 = vunpack.c.l.b16 %v1417
    %v1456 = vunpack.c.h.b16 %v1417
    %v1457 = vunpack.c.l.b16 %v1418
    %v1458 = vunpack.c.h.b16 %v1418
    %v1459 = vunpack.c.l.b16 %v1419
    %v1460 = vunpack.c.h.b16 %v1419
    %v1461 = vunpack.c.l.b16 %v1420
    %v1462 = vunpack.c.h.b16 %v1420
    %v1463 = vunpack.c.l.b16 %v1421
    %v1464 = vunpack.c.h.b16 %v1421
    %v1465 = vunpack.c.l.b16 %v1422
    %v1466 = vunpack.c.h.b16 %v1422
    %v1467 = vunpack.c.l.b16 %v1423
    %v1468 = vunpack.c.h.b16 %v1423
    %v1469 = vunpack.c.l.b16 %v1424
    %v1470 = vunpack.c.h.b16 %v1424
    %v1471 = vunpack.c.l.b16 %v1425
    %v1472 = vunpack.c.h.b16 %v1425
    %v1473 = vunpack.c.l.b16 %v1426
    %v1474 = vunpack.c.h.b16 %v1426
    %v1475 = vunpack.c.l.b16 %v1427
    %v1476 = vunpack.c.h.b16 %v1427
    %v1477 = vunpack.c.l.b16 %v1428
    %v1478 = vunpack.c.h.b16 %v1428
    %v1479 = vpack.c.b16 %v1451, %v1447
    %v1480 = vpack.c.b16 %v1452, %v1448
    %v1481 = vpack.c.b16 %v1453, %v1449
    %v1482 = vpack.c.b16 %v1454, %v1450
    %v1483 = vpack.c.b16 %v1459, %v1455
    %v1484 = vpack.c.b16 %v1460, %v1456
    %v1485 = vpack.c.b16 %v1461, %v1457
    %v1486 = vpack.c.b16 %v1462, %v1458
    %v1487 = vpack.c.b16 %v1467, %v1463
    %v1488 = vpack.c.b16 %v1468, %v1464
    %v1489 = vpack.c.b16 %v1469, %v1465
    %v1490 = vpack.c.b16 %v1470, %v1466
    %v1491 = vpack.c.b16 %v1475, %v1471
    %v1492 = vpack.c.b16 %v1476, %v1472
    %v1493 = vpack.c.b16 %v1477, %v1473
    %v1494 = vpack.c.b16 %v1478, %v1474
    %v1512 = vsel %vm159, %v1430, 0
    %1514 = vmatprep.subr.bf16.mxu0 %v1480
    %1515 = vmatpush1.bf16.msra.mxu0 %v1479
    %1516 = vmatprep.subr.bf16.mxu0 %v1484
    %1517 = vmatpush1.bf16.msra.mxu0 %v1483
    %1518 = vmatprep.subr.bf16.mxu0 %v1488
    %1519 = vmatpush1.bf16.msra.mxu0 %v1487
    %1520 = vmatprep.subr.bf16.mxu0 %v1492
    %1521 = vmatpush1.bf16.msra.mxu0 %v1491
    %1522 = vmatprep.subr.bf16.mxu0 0
    %1523 = vmatpush1.bf16.msra.mxu0 0
    %1524 = vmatprep.subr.bf16.mxu0 0
    %1525 = vmatpush1.bf16.msra.mxu0 0
    %1526 = vmatprep.subr.bf16.mxu0 0
    %1527 = vmatpush1.bf16.msra.mxu0 0
    %1528 = vmatprep.subr.bf16.mxu0 0
    %1529 = vmatpush1.bf16.msra.mxu0 0
    %1530 = vmatprep.subr.bf16.mxu0 0
    %1531 = vmatpush1.bf16.msra.mxu0 0
    %1532 = vmatprep.subr.bf16.mxu0 0
    %1533 = vmatpush1.bf16.msra.mxu0 0
    %1534 = vmatprep.subr.bf16.mxu0 0
    %1535 = vmatpush1.bf16.msra.mxu0 0
    %1536 = vmatprep.subr.bf16.mxu0 0
    %1537 = vmatpush1.bf16.msra.mxu0 0
    %1538 = vmatprep.subr.bf16.mxu0 0
    %1539 = vmatpush1.bf16.msra.mxu0 0
    %1540 = vmatprep.subr.bf16.mxu0 0
    %1541 = vmatpush1.bf16.msra.mxu0 0
    %1542 = vmatprep.subr.bf16.mxu0 0
    %1543 = vmatpush1.bf16.msra.mxu0 0
    %1544 = vmatprep.subr.bf16.mxu0 0
    %1545 = vmatpush1.bf16.msra.mxu0 0
    %1546 = vmatprep.mubr.bf16.mxu0 0
    %1547 = vmatmul.mubr.bf16.gmra.mrb[0].mxu0 %v1512
    %v1548 = vpop.f32.mrb[0].mxu0
    %v1549 = vadd.f32 0.0, %v1548
    %v1550 = vpop.f32.mrb[0].mxu0
    %v1551 = vadd.f32 0.0, %v1550
    %v1552 = vpop.f32.mrb[0].mxu0
    %v1553 = vadd.f32 0.0, %v1552
    %v1554 = vpop.f32.mrb[0].mxu0
    %v1555 = vadd.f32 0.0, %v1554
    %1556 = vdwg.mxu0
    %1557 = vmatprep.subr.bf16.mxu0 %v1482
    %1558 = vmatpush1.bf16.msra.mxu0 %v1481
    %1559 = vmatprep.subr.bf16.mxu0 %v1486
    %1560 = vmatpush1.bf16.msra.mxu0 %v1485
    %1561 = vmatprep.subr.bf16.mxu0 %v1490
    %1562 = vmatpush1.bf16.msra.mxu0 %v1489
    %1563 = vmatprep.subr.bf16.mxu0 %v1494
    %1564 = vmatpush1.bf16.msra.mxu0 %v1493
    %1565 = vmatprep.subr.bf16.mxu0 0
    %1566 = vmatpush1.bf16.msra.mxu0 0
    %1567 = vmatprep.subr.bf16.mxu0 0
    %1568 = vmatpush1.bf16.msra.mxu0 0
    %1569 = vmatprep.subr.bf16.mxu0 0
    %1570 = vmatpush1.bf16.msra.mxu0 0
    %1571 = vmatprep.subr.bf16.mxu0 0
    %1572 = vmatpush1.bf16.msra.mxu0 0
    %1573 = vmatprep.subr.bf16.mxu0 0
    %1574 = vmatpush1.bf16.msra.mxu0 0
    %1575 = vmatprep.subr.bf16.mxu0 0
    %1576 = vmatpush1.bf16.msra.mxu0 0
    %1577 = vmatprep.subr.bf16.mxu0 0
    %1578 = vmatpush1.bf16.msra.mxu0 0
    %1579 = vmatprep.subr.bf16.mxu0 0
    %1580 = vmatpush1.bf16.msra.mxu0 0
    %1581 = vmatprep.subr.bf16.mxu0 0
    %1582 = vmatpush1.bf16.msra.mxu0 0
    %1583 = vmatprep.subr.bf16.mxu0 0
    %1584 = vmatpush1.bf16.msra.mxu0 0
    %1585 = vmatprep.subr.bf16.mxu0 0
    %1586 = vmatpush1.bf16.msra.mxu0 0
    %1587 = vmatprep.subr.bf16.mxu0 0
    %1588 = vmatpush1.bf16.msra.mxu0 0
    %1589 = vmatprep.mubr.bf16.mxu0 0
    %1590 = vmatmul.mubr.bf16.gmra.mrb[0].mxu0 %v1512
    %v1591 = vpop.f32.mrb[0].mxu0
    %v1592 = vadd.f32 0.0, %v1591
    %v1593 = vpop.f32.mrb[0].mxu0
    %v1594 = vadd.f32 0.0, %v1593
    %v1595 = vpop.f32.mrb[0].mxu0
    %v1596 = vadd.f32 0.0, %v1595
    %v1597 = vpop.f32.mrb[0].mxu0
    %v1598 = vadd.f32 0.0, %v1597
    %1599 = vdwg.mxu0
    %v1600 = vadd.f32 %v1404, %v1549
    %v1601 = vadd.f32 %v1405, %v1551
    %v1602 = vadd.f32 %v1406, %v1592
    %v1603 = vadd.f32 %v1407, %v1594
    %v1604 = vadd.f32 %v1408, %v1553
    %v1605 = vadd.f32 %v1409, %v1555
    %v1606 = vadd.f32 %v1410, %v1596
    %v1607 = vadd.f32 %v1411, %v1598
    %s1608 = scalar_lea.vmem [#allocation2], 1024
    %v1609 = vld [vmem:[%s1608] sm:$0xff]
    %v1610 = vld [vmem:[%s1608 + $0x8] sm:$0xff]
    %v1611 = vld [vmem:[%s1608 + $0x10] sm:$0xff]
    %v1612 = vld [vmem:[%s1608 + $0x18] sm:$0xff]
    %v1613 = vld [vmem:[%s1608 + $0x20] sm:$0xff]
    %v1614 = vld [vmem:[%s1608 + $0x28] sm:$0xff]
    %v1615 = vld [vmem:[%s1608 + $0x30] sm:$0xff]
    %v1616 = vld [vmem:[%s1608 + $0x38] sm:$0xff]
    %v1617 = vld [vmem:[%s1608 + $0x40] sm:$0xff]
    %v1618 = vld [vmem:[%s1608 + $0x48] sm:$0xff]
    %v1619 = vld [vmem:[%s1608 + $0x50] sm:$0xff]
    %v1620 = vld [vmem:[%s1608 + $0x58] sm:$0xff]
    %v1621 = vld [vmem:[%s1608 + $0x60] sm:$0xff]
    %v1622 = vld [vmem:[%s1608 + $0x68] sm:$0xff]
    %v1623 = vld [vmem:[%s1608 + $0x70] sm:$0xff]
    %v1624 = vld [vmem:[%s1608 + $0x78] sm:$0xff]
    %1625 = vrot.lane.b32.xlu0 %v1234, 120
    %v1626 = vpop.permute.xlu0 %1625
    %v1643 = vunpack.c.l.b16 %v1609
    %v1644 = vunpack.c.h.b16 %v1609
    %v1645 = vunpack.c.l.b16 %v1610
    %v1646 = vunpack.c.h.b16 %v1610
    %v1647 = vunpack.c.l.b16 %v1611
    %v1648 = vunpack.c.h.b16 %v1611
    %v1649 = vunpack.c.l.b16 %v1612
    %v1650 = vunpack.c.h.b16 %v1612
    %v1651 = vunpack.c.l.b16 %v1613
    %v1652 = vunpack.c.h.b16 %v1613
    %v1653 = vunpack.c.l.b16 %v1614
    %v1654 = vunpack.c.h.b16 %v1614
    %v1655 = vunpack.c.l.b16 %v1615
    %v1656 = vunpack.c.h.b16 %v1615
    %v1657 = vunpack.c.l.b16 %v1616
    %v1658 = vunpack.c.h.b16 %v1616
    %v1659 = vunpack.c.l.b16 %v1617
    %v1660 = vunpack.c.h.b16 %v1617
    %v1661 = vunpack.c.l.b16 %v1618
    %v1662 = vunpack.c.h.b16 %v1618
    %v1663 = vunpack.c.l.b16 %v1619
    %v1664 = vunpack.c.h.b16 %v1619
    %v1665 = vunpack.c.l.b16 %v1620
    %v1666 = vunpack.c.h.b16 %v1620
    %v1667 = vunpack.c.l.b16 %v1621
    %v1668 = vunpack.c.h.b16 %v1621
    %v1669 = vunpack.c.l.b16 %v1622
    %v1670 = vunpack.c.h.b16 %v1622
    %v1671 = vunpack.c.l.b16 %v1623
    %v1672 = vunpack.c.h.b16 %v1623
    %v1673 = vunpack.c.l.b16 %v1624
    %v1674 = vunpack.c.h.b16 %v1624
    %v1675 = vpack.c.b16 %v1647, %v1643
    %v1676 = vpack.c.b16 %v1648, %v1644
    %v1677 = vpack.c.b16 %v1649, %v1645
    %v1678 = vpack.c.b16 %v1650, %v1646
    %v1679 = vpack.c.b16 %v1655, %v1651
    %v1680 = vpack.c.b16 %v1656, %v1652
    %v1681 = vpack.c.b16 %v1657, %v1653
    %v1682 = vpack.c.b16 %v1658, %v1654
    %v1683 = vpack.c.b16 %v1663, %v1659
    %v1684 = vpack.c.b16 %v1664, %v1660
    %v1685 = vpack.c.b16 %v1665, %v1661
    %v1686 = vpack.c.b16 %v1666, %v1662
    %v1687 = vpack.c.b16 %v1671, %v1667
    %v1688 = vpack.c.b16 %v1672, %v1668
    %v1689 = vpack.c.b16 %v1673, %v1669
    %v1690 = vpack.c.b16 %v1674, %v1670
    %v1708 = vsel %vm159, %v1626, 0
    %1710 = vmatprep.subr.bf16.mxu0 %v1676
    %1711 = vmatpush1.bf16.msra.mxu0 %v1675
    %1712 = vmatprep.subr.bf16.mxu0 %v1680
    %1713 = vmatpush1.bf16.msra.mxu0 %v1679
    %1714 = vmatprep.subr.bf16.mxu0 %v1684
    %1715 = vmatpush1.bf16.msra.mxu0 %v1683
    %1716 = vmatprep.subr.bf16.mxu0 %v1688
    %1717 = vmatpush1.bf16.msra.mxu0 %v1687
    %1718 = vmatprep.subr.bf16.mxu0 0
    %1719 = vmatpush1.bf16.msra.mxu0 0
    %1720 = vmatprep.subr.bf16.mxu0 0
    %1721 = vmatpush1.bf16.msra.mxu0 0
    %1722 = vmatprep.subr.bf16.mxu0 0
    %1723 = vmatpush1.bf16.msra.mxu0 0
    %1724 = vmatprep.subr.bf16.mxu0 0
    %1725 = vmatpush1.bf16.msra.mxu0 0
    %1726 = vmatprep.subr.bf16.mxu0 0
    %1727 = vmatpush1.bf16.msra.mxu0 0
    %1728 = vmatprep.subr.bf16.mxu0 0
    %1729 = vmatpush1.bf16.msra.mxu0 0
    %1730 = vmatprep.subr.bf16.mxu0 0
    %1731 = vmatpush1.bf16.msra.mxu0 0
    %1732 = vmatprep.subr.bf16.mxu0 0
    %1733 = vmatpush1.bf16.msra.mxu0 0
    %1734 = vmatprep.subr.bf16.mxu0 0
    %1735 = vmatpush1.bf16.msra.mxu0 0
    %1736 = vmatprep.subr.bf16.mxu0 0
    %1737 = vmatpush1.bf16.msra.mxu0 0
    %1738 = vmatprep.subr.bf16.mxu0 0
    %1739 = vmatpush1.bf16.msra.mxu0 0
    %1740 = vmatprep.subr.bf16.mxu0 0
    %1741 = vmatpush1.bf16.msra.mxu0 0
    %1742 = vmatprep.mubr.bf16.mxu0 0
    %1743 = vmatmul.mubr.bf16.gmra.mrb[0].mxu0 %v1708
    %v1744 = vpop.f32.mrb[0].mxu0
    %v1745 = vadd.f32 0.0, %v1744
    %v1746 = vpop.f32.mrb[0].mxu0
    %v1747 = vadd.f32 0.0, %v1746
    %v1748 = vpop.f32.mrb[0].mxu0
    %v1749 = vadd.f32 0.0, %v1748
    %v1750 = vpop.f32.mrb[0].mxu0
    %v1751 = vadd.f32 0.0, %v1750
    %1752 = vdwg.mxu0
    %1753 = vmatprep.subr.bf16.mxu0 %v1678
    %1754 = vmatpush1.bf16.msra.mxu0 %v1677
    %1755 = vmatprep.subr.bf16.mxu0 %v1682
    %1756 = vmatpush1.bf16.msra.mxu0 %v1681
    %1757 = vmatprep.subr.bf16.mxu0 %v1686
    %1758 = vmatpush1.bf16.msra.mxu0 %v1685
    %1759 = vmatprep.subr.bf16.mxu0 %v1690
    %1760 = vmatpush1.bf16.msra.mxu0 %v1689
    %1761 = vmatprep.subr.bf16.mxu0 0
    %1762 = vmatpush1.bf16.msra.mxu0 0
    %1763 = vmatprep.subr.bf16.mxu0 0
    %1764 = vmatpush1.bf16.msra.mxu0 0
    %1765 = vmatprep.subr.bf16.mxu0 0
    %1766 = vmatpush1.bf16.msra.mxu0 0
    %1767 = vmatprep.subr.bf16.mxu0 0
    %1768 = vmatpush1.bf16.msra.mxu0 0
    %1769 = vmatprep.subr.bf16.mxu0 0
    %1770 = vmatpush1.bf16.msra.mxu0 0
    %1771 = vmatprep.subr.bf16.mxu0 0
    %1772 = vmatpush1.bf16.msra.mxu0 0
    %1773 = vmatprep.subr.bf16.mxu0 0
    %1774 = vmatpush1.bf16.msra.mxu0 0
    %1775 = vmatprep.subr.bf16.mxu0 0
    %1776 = vmatpush1.bf16.msra.mxu0 0
    %1777 = vmatprep.subr.bf16.mxu0 0
    %1778 = vmatpush1.bf16.msra.mxu0 0
    %1779 = vmatprep.subr.bf16.mxu0 0
    %1780 = vmatpush1.bf16.msra.mxu0 0
    %1781 = vmatprep.subr.bf16.mxu0 0
    %1782 = vmatpush1.bf16.msra.mxu0 0
    %1783 = vmatprep.subr.bf16.mxu0 0
    %1784 = vmatpush1.bf16.msra.mxu0 0
    %1785 = vmatprep.mubr.bf16.mxu0 0
    %1786 = vmatmul.mubr.bf16.gmra.mrb[0].mxu0 %v1708
    %v1787 = vpop.f32.mrb[0].mxu0
    %v1788 = vadd.f32 0.0, %v1787
    %v1789 = vpop.f32.mrb[0].mxu0
    %v1790 = vadd.f32 0.0, %v1789
    %v1791 = vpop.f32.mrb[0].mxu0
    %v1792 = vadd.f32 0.0, %v1791
    %v1793 = vpop.f32.mrb[0].mxu0
    %v1794 = vadd.f32 0.0, %v1793
    %1795 = vdwg.mxu0
    %v1796 = vadd.f32 %v1600, %v1745
    %v1797 = vadd.f32 %v1601, %v1747
    %v1798 = vadd.f32 %v1602, %v1788
    %v1799 = vadd.f32 %v1603, %v1790
    %v1800 = vadd.f32 %v1604, %v1749
    %v1801 = vadd.f32 %v1605, %v1751
    %v1802 = vadd.f32 %v1606, %v1792
    %v1803 = vadd.f32 %v1607, %v1794
    %v1804 = vld [vmem:[%s2] sm:$0xf]
    %v1806 = vlaneseq
    %v1807 = vshrl.u32 %v1806, 7
    %v1808 = vsub.s32 0, %v1807
    %v1809 = vrot.slane %v1804, %v1808
    %v1810 = vlaneseq
    %v1811 = vshrl.u32 %v1810, 7
    %v1812 = vsub.s32 1, %v1811
    %v1813 = vrot.slane %v1804, %v1812
    %v1814 = vlaneseq
    %v1815 = vshrl.u32 %v1814, 7
    %v1816 = vsub.s32 2, %v1815
    %v1817 = vrot.slane %v1804, %v1816
    %v1818 = vlaneseq
    %v1819 = vshrl.u32 %v1818, 7
    %v1820 = vsub.s32 3, %v1819
    %v1821 = vrot.slane %v1804, %v1820
    %v1826 = vadd.f32 %v1796, %v1809
    %v1827 = vadd.f32 %v1797, %v1813
    %v1828 = vadd.f32 %v1798, %v1817
    %v1829 = vadd.f32 %v1799, %v1821
    %v1830 = vadd.f32 %v1800, %v1809
    %v1831 = vadd.f32 %v1801, %v1813
    %v1832 = vadd.f32 %v1802, %v1817
    %v1833 = vadd.f32 %v1803, %v1821
    %v1834 = vmax.f32 %v1826, 0.0
    %v1835 = vmax.f32 %v1827, 0.0
    %v1836 = vmax.f32 %v1828, 0.0
    %v1837 = vmax.f32 %v1829, 0.0
    %v1838 = vmax.f32 %v1830, 0.0
    %v1839 = vmax.f32 %v1831, 0.0
    %v1840 = vmax.f32 %v1832, 0.0
    %v1841 = vmax.f32 %v1833, 0.0
    %v1842 = vpack.c.bf16 %v1838, %v1834
    %v1843 = vpack.c.bf16 %v1839, %v1835
    %v1844 = vpack.c.bf16 %v1840, %v1836
    %v1845 = vpack.c.bf16 %v1841, %v1837
    %v1850 = vunpack.c.l.b16 %v1842
    %v1851 = vunpack.c.l.b16 %v1843
    %v1852 = vunpack.c.l.b16 %v1844
    %v1853 = vunpack.c.l.b16 %v1845
    %v1854 = vunpack.c.h.b16 %v1842
    %v1855 = vunpack.c.h.b16 %v1843
    %v1856 = vunpack.c.h.b16 %v1844
    %v1857 = vunpack.c.h.b16 %v1845
    %v1858 = vpack.c.b16 %v1851, %v1850
    %v1859 = vpack.c.b16 %v1853, %v1852
    %v1860 = vpack.c.b16 %v1855, %v1854
    %v1861 = vpack.c.b16 %v1857, %v1856
    %1866 = vst [vmem:[#allocation5] sm:$0xff] %v1858
    %1867 = vst [vmem:[#allocation5 + $0x8] sm:$0xff] %v1859
    %1868 = vst [vmem:[#allocation5 + $0x10] sm:$0xff] %v1860
    %1869 = vst [vmem:[#allocation5 + $0x18] sm:$0xff] %v1861
    %v1870 = vadd.f32 %v1834, %v1838
    %v1871 = vrot.slane %v1870, 4
    %v1872 = vadd.f32 %v1870, %v1871
    %v1873 = vrot.slane %v1872, 2
    %v1874 = vadd.f32 %v1872, %v1873
    %v1875 = vrot.slane %v1874, 1
    %v1876 = vadd.f32 %v1874, %v1875
    %v1877 = vadd.f32 %v1835, %v1839
    %v1878 = vrot.slane %v1877, 4
    %v1879 = vadd.f32 %v1877, %v1878
    %v1880 = vrot.slane %v1879, 2
    %v1881 = vadd.f32 %v1879, %v1880
    %v1882 = vrot.slane %v1881, 1
    %v1883 = vadd.f32 %v1881, %v1882
    %v1884 = vadd.f32 %v1836, %v1840
    %v1885 = vrot.slane %v1884, 4
    %v1886 = vadd.f32 %v1884, %v1885
    %v1887 = vrot.slane %v1886, 2
    %v1888 = vadd.f32 %v1886, %v1887
    %v1889 = vrot.slane %v1888, 1
    %v1890 = vadd.f32 %v1888, %v1889
    %v1891 = vadd.f32 %v1837, %v1841
    %v1892 = vrot.slane %v1891, 4
    %v1893 = vadd.f32 %v1891, %v1892
    %v1894 = vrot.slane %v1893, 2
    %v1895 = vadd.f32 %v1893, %v1894
    %v1896 = vrot.slane %v1895, 1
    %v1897 = vadd.f32 %v1895, %v1896
    %v1898 = vld [vmem:[%s3] sm:$0xff]
    %v1899 = vld [vmem:[%s3 + $0x8] sm:$0xff]
    %v1900 = vld [vmem:[%s3 + $0x10] sm:$0xff]
    %v1901 = vld [vmem:[%s3 + $0x18] sm:$0xff]
    %v1902 = vld [vmem:[%s3 + $0x20] sm:$0xff]
    %v1903 = vld [vmem:[%s3 + $0x28] sm:$0xff]
    %v1904 = vld [vmem:[%s3 + $0x30] sm:$0xff]
    %v1905 = vld [vmem:[%s3 + $0x38] sm:$0xff]
    %v1906 = vld [vmem:[%s3 + $0x40] sm:$0xff]
    %v1907 = vld [vmem:[%s3 + $0x48] sm:$0xff]
    %v1908 = vld [vmem:[%s3 + $0x50] sm:$0xff]
    %v1909 = vld [vmem:[%s3 + $0x58] sm:$0xff]
    %v1910 = vld [vmem:[%s3 + $0x60] sm:$0xff]
    %v1911 = vld [vmem:[%s3 + $0x68] sm:$0xff]
    %v1912 = vld [vmem:[%s3 + $0x70] sm:$0xff]
    %v1913 = vld [vmem:[%s3 + $0x78] sm:$0xff]
    %v1914 = vld [vmem:[%s3 + $0x80] sm:$0xff]
    %v1915 = vld [vmem:[%s3 + $0x88] sm:$0xff]
    %v1916 = vld [vmem:[%s3 + $0x90] sm:$0xff]
    %v1917 = vld [vmem:[%s3 + $0x98] sm:$0xff]
    %v1918 = vld [vmem:[%s3 + $0xa0] sm:$0xff]
    %v1919 = vld [vmem:[%s3 + $0xa8] sm:$0xff]
    %v1920 = vld [vmem:[%s3 + $0xb0] sm:$0xff]
    %v1921 = vld [vmem:[%s3 + $0xb8] sm:$0xff]
    %v1922 = vld [vmem:[%s3 + $0xc0] sm:$0xff]
    %v1923 = vld [vmem:[%s3 + $0xc8] sm:$0xff]
    %v1924 = vld [vmem:[%s3 + $0xd0] sm:$0xff]
    %v1925 = vld [vmem:[%s3 + $0xd8] sm:$0xff]
    %v1926 = vld [vmem:[%s3 + $0xe0] sm:$0xff]
    %v1927 = vld [vmem:[%s3 + $0xe8] sm:$0xff]
    %v1928 = vld [vmem:[%s3 + $0xf0] sm:$0xff]
    %v1929 = vld [vmem:[%s3 + $0xf8] sm:$0xff]
    %v1930 = vld [vmem:[%s3 + $0x100] sm:$0xff]
    %v1931 = vld [vmem:[%s3 + $0x108] sm:$0xff]
    %v1932 = vld [vmem:[%s3 + $0x110] sm:$0xff]
    %v1933 = vld [vmem:[%s3 + $0x118] sm:$0xff]
    %v1934 = vld [vmem:[%s3 + $0x120] sm:$0xff]
    %v1935 = vld [vmem:[%s3 + $0x128] sm:$0xff]
    %v1936 = vld [vmem:[%s3 + $0x130] sm:$0xff]
    %v1937 = vld [vmem:[%s3 + $0x138] sm:$0xff]
    %v1938 = vld [vmem:[%s3 + $0x140] sm:$0xff]
    %v1939 = vld [vmem:[%s3 + $0x148] sm:$0xff]
    %v1940 = vld [vmem:[%s3 + $0x150] sm:$0xff]
    %v1941 = vld [vmem:[%s3 + $0x158] sm:$0xff]
    %v1942 = vld [vmem:[%s3 + $0x160] sm:$0xff]
    %v1943 = vld [vmem:[%s3 + $0x168] sm:$0xff]
    %v1944 = vld [vmem:[%s3 + $0x170] sm:$0xff]
    %v1945 = vld [vmem:[%s3 + $0x178] sm:$0xff]
    %v1946 = vld [vmem:[%s3 + $0x180] sm:$0xff]
    %v1947 = vld [vmem:[%s3 + $0x188] sm:$0xff]
    %v1948 = vld [vmem:[%s3 + $0x190] sm:$0xff]
    %v1949 = vld [vmem:[%s3 + $0x198] sm:$0xff]
    %v1950 = vld [vmem:[%s3 + $0x1a0] sm:$0xff]
    %v1951 = vld [vmem:[%s3 + $0x1a8] sm:$0xff]
    %v1952 = vld [vmem:[%s3 + $0x1b0] sm:$0xff]
    %v1953 = vld [vmem:[%s3 + $0x1b8] sm:$0xff]
    %v1954 = vld [vmem:[%s3 + $0x1c0] sm:$0xff]
    %v1955 = vld [vmem:[%s3 + $0x1c8] sm:$0xff]
    %v1956 = vld [vmem:[%s3 + $0x1d0] sm:$0xff]
    %v1957 = vld [vmem:[%s3 + $0x1d8] sm:$0xff]
    %v1958 = vld [vmem:[%s3 + $0x1e0] sm:$0xff]
    %v1959 = vld [vmem:[%s3 + $0x1e8] sm:$0xff]
    %v1960 = vld [vmem:[%s3 + $0x1f0] sm:$0xff]
    %v1961 = vld [vmem:[%s3 + $0x1f8] sm:$0xff]
    %v1962 = vld [vmem:[%s4] sm:$0x1]
    %1963 = vmatprep.subr.mxu0 0.0
    %1964 = vmatpush1.msra.mxu0 %v1898
    %1965 = vmatprep.subr.mxu0 0.0
    %1966 = vmatpush1.msra.mxu0 %v1899
    %1967 = vmatprep.subr.mxu0 0.0
    %1968 = vmatpush1.msra.mxu0 %v1900
    %1969 = vmatprep.subr.mxu0 0.0
    %1970 = vmatpush1.msra.mxu0 %v1901
    %1971 = vmatprep.subr.mxu0 0.0
    %1972 = vmatpush1.msra.mxu0 %v1902
    %1973 = vmatprep.subr.mxu0 0.0
    %1974 = vmatpush1.msra.mxu0 %v1903
    %1975 = vmatprep.subr.mxu0 0.0
    %1976 = vmatpush1.msra.mxu0 %v1904
    %1977 = vmatprep.subr.mxu0 0.0
    %1978 = vmatpush1.msra.mxu0 %v1905
    %1979 = vmatprep.subr.mxu0 0.0
    %1980 = vmatpush1.msra.mxu0 %v1906
    %1981 = vmatprep.subr.mxu0 0.0
    %1982 = vmatpush1.msra.mxu0 %v1907
    %1983 = vmatprep.subr.mxu0 0.0
    %1984 = vmatpush1.msra.mxu0 %v1908
    %1985 = vmatprep.subr.mxu0 0.0
    %1986 = vmatpush1.msra.mxu0 %v1909
    %1987 = vmatprep.subr.mxu0 0.0
    %1988 = vmatpush1.msra.mxu0 %v1910
    %1989 = vmatprep.subr.mxu0 0.0
    %1990 = vmatpush1.msra.mxu0 %v1911
    %1991 = vmatprep.subr.mxu0 0.0
    %1992 = vmatpush1.msra.mxu0 %v1912
    %1993 = vmatprep.subr.mxu0 0.0
    %1994 = vmatpush1.msra.mxu0 %v1913
    %1995 = vmatprep.subr.mxu0 0.0
    %1996 = vmatpush1.msra.mxu0 %v1914
    %1997 = vmatprep.subr.mxu0 0.0
    %1998 = vmatpush1.msra.mxu0 %v1915
    %1999 = vmatprep.subr.mxu0 0.0
    %2000 = vmatpush1.msra.mxu0 %v1916
    %2001 = vmatprep.subr.mxu0 0.0
    %2002 = vmatpush1.msra.mxu0 %v1917
    %2003 = vmatprep.subr.mxu0 0.0
    %2004 = vmatpush1.msra.mxu0 %v1918
    %2005 = vmatprep.subr.mxu0 0.0
    %2006 = vmatpush1.msra.mxu0 %v1919
    %2007 = vmatprep.subr.mxu0 0.0
    %2008 = vmatpush1.msra.mxu0 %v1920
    %2009 = vmatprep.subr.mxu0 0.0
    %2010 = vmatpush1.msra.mxu0 %v1921
    %2011 = vmatprep.subr.mxu0 0.0
    %2012 = vmatpush1.msra.mxu0 %v1922
    %2013 = vmatprep.subr.mxu0 0.0
    %2014 = vmatpush1.msra.mxu0 %v1923
    %2015 = vmatprep.subr.mxu0 0.0
    %2016 = vmatpush1.msra.mxu0 %v1924
    %2017 = vmatprep.subr.mxu0 0.0
    %2018 = vmatpush1.msra.mxu0 %v1925
    %2019 = vmatprep.subr.mxu0 0.0
    %2020 = vmatpush1.msra.mxu0 %v1926
    %2021 = vmatprep.subr.mxu0 0.0
    %2022 = vmatpush1.msra.mxu0 %v1927
    %2023 = vmatprep.subr.mxu0 0.0
    %2024 = vmatpush1.msra.mxu0 %v1928
    %2025 = vmatprep.subr.mxu0 0.0
    %2026 = vmatpush1.msra.mxu0 %v1929
    %2027 = vmatprep.mubr.f32.mxu0 %v1883
    %2028 = vmatmul.mubr.f32.gmra.mrb[0].mxu0 %v1876
    %v2029 = vpop.f32.mrb[0].mxu0
    %v2030 = vadd.f32 %v1962, %v2029
    %v2031 = vpop.f32.mrb[0].mxu0
    %2032 = vdwg.mxu0
    %2033 = vmatprep.subr.mxu0 0.0
    %2034 = vmatpush1.msra.mxu0 %v1930
    %2035 = vmatprep.subr.mxu0 0.0
    %2036 = vmatpush1.msra.mxu0 %v1931
    %2037 = vmatprep.subr.mxu0 0.0
    %2038 = vmatpush1.msra.mxu0 %v1932
    %2039 = vmatprep.subr.mxu0 0.0
    %2040 = vmatpush1.msra.mxu0 %v1933
    %2041 = vmatprep.subr.mxu0 0.0
    %2042 = vmatpush1.msra.mxu0 %v1934
    %2043 = vmatprep.subr.mxu0 0.0
    %2044 = vmatpush1.msra.mxu0 %v1935
    %2045 = vmatprep.subr.mxu0 0.0
    %2046 = vmatpush1.msra.mxu0 %v1936
    %2047 = vmatprep.subr.mxu0 0.0
    %2048 = vmatpush1.msra.mxu0 %v1937
    %2049 = vmatprep.subr.mxu0 0.0
    %2050 = vmatpush1.msra.mxu0 %v1938
    %2051 = vmatprep.subr.mxu0 0.0
    %2052 = vmatpush1.msra.mxu0 %v1939
    %2053 = vmatprep.subr.mxu0 0.0
    %2054 = vmatpush1.msra.mxu0 %v1940
    %2055 = vmatprep.subr.mxu0 0.0
    %2056 = vmatpush1.msra.mxu0 %v1941
    %2057 = vmatprep.subr.mxu0 0.0
    %2058 = vmatpush1.msra.mxu0 %v1942
    %2059 = vmatprep.subr.mxu0 0.0
    %2060 = vmatpush1.msra.mxu0 %v1943
    %2061 = vmatprep.subr.mxu0 0.0
    %2062 = vmatpush1.msra.mxu0 %v1944
    %2063 = vmatprep.subr.mxu0 0.0
    %2064 = vmatpush1.msra.mxu0 %v1945
    %2065 = vmatprep.subr.mxu0 0.0
    %2066 = vmatpush1.msra.mxu0 %v1946
    %2067 = vmatprep.subr.mxu0 0.0
    %2068 = vmatpush1.msra.mxu0 %v1947
    %2069 = vmatprep.subr.mxu0 0.0
    %2070 = vmatpush1.msra.mxu0 %v1948
    %2071 = vmatprep.subr.mxu0 0.0
    %2072 = vmatpush1.msra.mxu0 %v1949
    %2073 = vmatprep.subr.mxu0 0.0
    %2074 = vmatpush1.msra.mxu0 %v1950
    %2075 = vmatprep.subr.mxu0 0.0
    %2076 = vmatpush1.msra.mxu0 %v1951
    %2077 = vmatprep.subr.mxu0 0.0
    %2078 = vmatpush1.msra.mxu0 %v1952
    %2079 = vmatprep.subr.mxu0 0.0
    %2080 = vmatpush1.msra.mxu0 %v1953
    %2081 = vmatprep.subr.mxu0 0.0
    %2082 = vmatpush1.msra.mxu0 %v1954
    %2083 = vmatprep.subr.mxu0 0.0
    %2084 = vmatpush1.msra.mxu0 %v1955
    %2085 = vmatprep.subr.mxu0 0.0
    %2086 = vmatpush1.msra.mxu0 %v1956
    %2087 = vmatprep.subr.mxu0 0.0
    %2088 = vmatpush1.msra.mxu0 %v1957
    %2089 = vmatprep.subr.mxu0 0.0
    %2090 = vmatpush1.msra.mxu0 %v1958
    %2091 = vmatprep.subr.mxu0 0.0
    %2092 = vmatpush1.msra.mxu0 %v1959
    %2093 = vmatprep.subr.mxu0 0.0
    %2094 = vmatpush1.msra.mxu0 %v1960
    %2095 = vmatprep.subr.mxu0 0.0
    %2096 = vmatpush1.msra.mxu0 %v1961
    %2097 = vmatprep.mubr.f32.mxu0 %v1897
    %2098 = vmatmul.mubr.f32.gmra.mrb[0].mxu0 %v1890
    %v2099 = vpop.f32.mrb[0].mxu0
    %v2100 = vadd.f32 %v2030, %v2099
    %v2101 = vpop.f32.mrb[0].mxu0
    %2102 = vdwg.mxu0
    %vm2103 = vcmask 73728
    %2104 = vst.msk [vmem:[#allocation6] sm:$0x1] %vm2103, %v2100
    %s2105 = scalar_lea.vmem %s0, 24
    %v2106 = vld [vmem:[%s2105] sm:$0xff]
    %v2107 = vld [vmem:[%s2105 + $0x8] sm:$0xff]
    %v2108 = vld [vmem:[%s2105 + $0x10] sm:$0x3]
    %v2109 = vpack.c.bf16 %v2107, %v2106
    %v2110 = vld [vmem:[#allocation2] sm:$0xff]
    %v2111 = vld [vmem:[#allocation2 + $0x8] sm:$0xff]
    %v2112 = vld [vmem:[#allocation2 + $0x10] sm:$0xff]
    %v2113 = vld [vmem:[#allocation2 + $0x18] sm:$0xff]
    %v2114 = vld [vmem:[#allocation2 + $0x20] sm:$0xff]
    %v2115 = vld [vmem:[#allocation2 + $0x28] sm:$0xff]
    %v2116 = vld [vmem:[#allocation2 + $0x30] sm:$0xff]
    %v2117 = vld [vmem:[#allocation2 + $0x38] sm:$0xff]
    %v2118 = vld [vmem:[#allocation2 + $0x40] sm:$0xff]
    %v2119 = vld [vmem:[#allocation2 + $0x48] sm:$0xff]
    %v2120 = vld [vmem:[#allocation2 + $0x50] sm:$0xff]
    %v2121 = vld [vmem:[#allocation2 + $0x58] sm:$0xff]
    %v2122 = vld [vmem:[#allocation2 + $0x60] sm:$0xff]
    %v2123 = vld [vmem:[#allocation2 + $0x68] sm:$0xff]
    %v2124 = vld [vmem:[#allocation2 + $0x70] sm:$0xff]
    %v2125 = vld [vmem:[#allocation2 + $0x78] sm:$0xff]
    %v2126 = vld [vmem:[%s59] sm:$0xff]
    %v2127 = vld [vmem:[%s59 + $0x8] sm:$0xff]
    %v2128 = vld [vmem:[%s59 + $0x10] sm:$0xff]
    %v2129 = vld [vmem:[%s59 + $0x18] sm:$0xff]
    %v2130 = vld [vmem:[%s59 + $0x20] sm:$0xff]
    %v2131 = vld [vmem:[%s59 + $0x28] sm:$0xff]
    %v2132 = vld [vmem:[%s59 + $0x30] sm:$0xff]
    %v2133 = vld [vmem:[%s59 + $0x38] sm:$0xff]
    %v2134 = vld [vmem:[%s59 + $0x40] sm:$0xff]
    %v2135 = vld [vmem:[%s59 + $0x48] sm:$0xff]
    %v2136 = vld [vmem:[%s59 + $0x50] sm:$0xff]
    %v2137 = vld [vmem:[%s59 + $0x58] sm:$0xff]
    %v2138 = vld [vmem:[%s59 + $0x60] sm:$0xff]
    %v2139 = vld [vmem:[%s59 + $0x68] sm:$0xff]
    %v2140 = vld [vmem:[%s59 + $0x70] sm:$0xff]
    %v2141 = vld [vmem:[%s59 + $0x78] sm:$0xff]
    %2143 = vrot.lane.b32.xlu0 %v2109, 124
    %v2144 = vpop.permute.xlu0 %2143
    %v2161 = vunpack.c.l.b16 %v2126
    %v2162 = vunpack.c.h.b16 %v2126
    %v2163 = vunpack.c.l.b16 %v2127
    %v2164 = vunpack.c.h.b16 %v2127
    %v2165 = vunpack.c.l.b16 %v2128
    %v2166 = vunpack.c.h.b16 %v2128
    %v2167 = vunpack.c.l.b16 %v2129
    %v2168 = vunpack.c.h.b16 %v2129
    %v2169 = vunpack.c.l.b16 %v2130
    %v2170 = vunpack.c.h.b16 %v2130
    %v2171 = vunpack.c.l.b16 %v2131
    %v2172 = vunpack.c.h.b16 %v2131
    %v2173 = vunpack.c.l.b16 %v2132
    %v2174 = vunpack.c.h.b16 %v2132
    %v2175 = vunpack.c.l.b16 %v2133
    %v2176 = vunpack.c.h.b16 %v2133
    %v2177 = vunpack.c.l.b16 %v2134
    %v2178 = vunpack.c.h.b16 %v2134
    %v2179 = vunpack.c.l.b16 %v2135
    %v2180 = vunpack.c.h.b16 %v2135
    %v2181 = vunpack.c.l.b16 %v2136
    %v2182 = vunpack.c.h.b16 %v2136
    %v2183 = vunpack.c.l.b16 %v2137
    %v2184 = vunpack.c.h.b16 %v2137
    %v2185 = vunpack.c.l.b16 %v2138
    %v2186 = vunpack.c.h.b16 %v2138
    %v2187 = vunpack.c.l.b16 %v2139
    %v2188 = vunpack.c.h.b16 %v2139
    %v2189 = vunpack.c.l.b16 %v2140
    %v2190 = vunpack.c.h.b16 %v2140
    %v2191 = vunpack.c.l.b16 %v2141
    %v2192 = vunpack.c.h.b16 %v2141
    %v2193 = vpack.c.b16 %v2165, %v2161
    %v2194 = vpack.c.b16 %v2166, %v2162
    %v2195 = vpack.c.b16 %v2167, %v2163
    %v2196 = vpack.c.b16 %v2168, %v2164
    %v2197 = vpack.c.b16 %v2173, %v2169
    %v2198 = vpack.c.b16 %v2174, %v2170
    %v2199 = vpack.c.b16 %v2175, %v2171
    %v2200 = vpack.c.b16 %v2176, %v2172
    %v2201 = vpack.c.b16 %v2181, %v2177
    %v2202 = vpack.c.b16 %v2182, %v2178
    %v2203 = vpack.c.b16 %v2183, %v2179
    %v2204 = vpack.c.b16 %v2184, %v2180
    %v2205 = vpack.c.b16 %v2189, %v2185
    %v2206 = vpack.c.b16 %v2190, %v2186
    %v2207 = vpack.c.b16 %v2191, %v2187
    %v2208 = vpack.c.b16 %v2192, %v2188
    %v2226 = vsel %vm159, %v2144, 0
    %2228 = vmatprep.subr.bf16.mxu0 %v2194
    %2229 = vmatpush1.bf16.msra.mxu0 %v2193
    %2230 = vmatprep.subr.bf16.mxu0 %v2198
    %2231 = vmatpush1.bf16.msra.mxu0 %v2197
    %2232 = vmatprep.subr.bf16.mxu0 %v2202
    %2233 = vmatpush1.bf16.msra.mxu0 %v2201
    %2234 = vmatprep.subr.bf16.mxu0 %v2206
    %2235 = vmatpush1.bf16.msra.mxu0 %v2205
    %2236 = vmatprep.subr.bf16.mxu0 0
    %2237 = vmatpush1.bf16.msra.mxu0 0
    %2238 = vmatprep.subr.bf16.mxu0 0
    %2239 = vmatpush1.bf16.msra.mxu0 0
    %2240 = vmatprep.subr.bf16.mxu0 0
    %2241 = vmatpush1.bf16.msra.mxu0 0
    %2242 = vmatprep.subr.bf16.mxu0 0
    %2243 = vmatpush1.bf16.msra.mxu0 0
    %2244 = vmatprep.subr.bf16.mxu0 0
    %2245 = vmatpush1.bf16.msra.mxu0 0
    %2246 = vmatprep.subr.bf16.mxu0 0
    %2247 = vmatpush1.bf16.msra.mxu0 0
    %2248 = vmatprep.subr.bf16.mxu0 0
    %2249 = vmatpush1.bf16.msra.mxu0 0
    %2250 = vmatprep.subr.bf16.mxu0 0
    %2251 = vmatpush1.bf16.msra.mxu0 0
    %2252 = vmatprep.subr.bf16.mxu0 0
    %2253 = vmatpush1.bf16.msra.mxu0 0
    %2254 = vmatprep.subr.bf16.mxu0 0
    %2255 = vmatpush1.bf16.msra.mxu0 0
    %2256 = vmatprep.subr.bf16.mxu0 0
    %2257 = vmatpush1.bf16.msra.mxu0 0
    %2258 = vmatprep.subr.bf16.mxu0 0
    %2259 = vmatpush1.bf16.msra.mxu0 0
    %2260 = vmatprep.mubr.bf16.mxu0 0
    %2261 = vmatmul.mubr.bf16.gmra.mrb[0].mxu0 %v2226
    %v2262 = vpop.f32.mrb[0].mxu0
    %v2263 = vadd.f32 0.0, %v2262
    %v2264 = vpop.f32.mrb[0].mxu0
    %v2265 = vadd.f32 0.0, %v2264
    %v2266 = vpop.f32.mrb[0].mxu0
    %v2267 = vadd.f32 0.0, %v2266
    %v2268 = vpop.f32.mrb[0].mxu0
    %v2269 = vadd.f32 0.0, %v2268
    %2270 = vdwg.mxu0
    %2271 = vmatprep.subr.bf16.mxu0 %v2196
    %2272 = vmatpush1.bf16.msra.mxu0 %v2195
    %2273 = vmatprep.subr.bf16.mxu0 %v2200
    %2274 = vmatpush1.bf16.msra.mxu0 %v2199
    %2275 = vmatprep.subr.bf16.mxu0 %v2204
    %2276 = vmatpush1.bf16.msra.mxu0 %v2203
    %2277 = vmatprep.subr.bf16.mxu0 %v2208
    %2278 = vmatpush1.bf16.msra.mxu0 %v2207
    %2279 = vmatprep.subr.bf16.mxu0 0
    %2280 = vmatpush1.bf16.msra.mxu0 0
    %2281 = vmatprep.subr.bf16.mxu0 0
    %2282 = vmatpush1.bf16.msra.mxu0 0
    %2283 = vmatprep.subr.bf16.mxu0 0
    %2284 = vmatpush1.bf16.msra.mxu0 0
    %2285 = vmatprep.subr.bf16.mxu0 0
    %2286 = vmatpush1.bf16.msra.mxu0 0
    %2287 = vmatprep.subr.bf16.mxu0 0
    %2288 = vmatpush1.bf16.msra.mxu0 0
    %2289 = vmatprep.subr.bf16.mxu0 0
    %2290 = vmatpush1.bf16.msra.mxu0 0
    %2291 = vmatprep.subr.bf16.mxu0 0
    %2292 = vmatpush1.bf16.msra.mxu0 0
    %2293 = vmatprep.subr.bf16.mxu0 0
    %2294 = vmatpush1.bf16.msra.mxu0 0
    %2295 = vmatprep.subr.bf16.mxu0 0
    %2296 = vmatpush1.bf16.msra.mxu0 0
    %2297 = vmatprep.subr.bf16.mxu0 0
    %2298 = vmatpush1.bf16.msra.mxu0 0
    %2299 = vmatprep.subr.bf16.mxu0 0
    %2300 = vmatpush1.bf16.msra.mxu0 0
    %2301 = vmatprep.subr.bf16.mxu0 0
    %2302 = vmatpush1.bf16.msra.mxu0 0
    %2303 = vmatprep.mubr.bf16.mxu0 0
    %2304 = vmatmul.mubr.bf16.gmra.mrb[0].mxu0 %v2226
    %v2305 = vpop.f32.mrb[0].mxu0
    %v2306 = vadd.f32 0.0, %v2305
    %v2307 = vpop.f32.mrb[0].mxu0
    %v2308 = vadd.f32 0.0, %v2307
    %v2309 = vpop.f32.mrb[0].mxu0
    %v2310 = vadd.f32 0.0, %v2309
    %v2311 = vpop.f32.mrb[0].mxu0
    %v2312 = vadd.f32 0.0, %v2311
    %2313 = vdwg.mxu0
    %v2330 = vunpack.c.l.b16 %v2110
    %v2331 = vunpack.c.h.b16 %v2110
    %v2332 = vunpack.c.l.b16 %v2111
    %v2333 = vunpack.c.h.b16 %v2111
    %v2334 = vunpack.c.l.b16 %v2112
    %v2335 = vunpack.c.h.b16 %v2112
    %v2336 = vunpack.c.l.b16 %v2113
    %v2337 = vunpack.c.h.b16 %v2113
    %v2338 = vunpack.c.l.b16 %v2114
    %v2339 = vunpack.c.h.b16 %v2114
    %v2340 = vunpack.c.l.b16 %v2115
    %v2341 = vunpack.c.h.b16 %v2115
    %v2342 = vunpack.c.l.b16 %v2116
    %v2343 = vunpack.c.h.b16 %v2116
    %v2344 = vunpack.c.l.b16 %v2117
    %v2345 = vunpack.c.h.b16 %v2117
    %v2346 = vunpack.c.l.b16 %v2118
    %v2347 = vunpack.c.h.b16 %v2118
    %v2348 = vunpack.c.l.b16 %v2119
    %v2349 = vunpack.c.h.b16 %v2119
    %v2350 = vunpack.c.l.b16 %v2120
    %v2351 = vunpack.c.h.b16 %v2120
    %v2352 = vunpack.c.l.b16 %v2121
    %v2353 = vunpack.c.h.b16 %v2121
    %v2354 = vunpack.c.l.b16 %v2122
    %v2355 = vunpack.c.h.b16 %v2122
    %v2356 = vunpack.c.l.b16 %v2123
    %v2357 = vunpack.c.h.b16 %v2123
    %v2358 = vunpack.c.l.b16 %v2124
    %v2359 = vunpack.c.h.b16 %v2124
    %v2360 = vunpack.c.l.b16 %v2125
    %v2361 = vunpack.c.h.b16 %v2125
    %v2362 = vpack.c.b16 %v2334, %v2330
    %v2363 = vpack.c.b16 %v2335, %v2331
    %v2364 = vpack.c.b16 %v2336, %v2332
    %v2365 = vpack.c.b16 %v2337, %v2333
    %v2366 = vpack.c.b16 %v2342, %v2338
    %v2367 = vpack.c.b16 %v2343, %v2339
    %v2368 = vpack.c.b16 %v2344, %v2340
    %v2369 = vpack.c.b16 %v2345, %v2341
    %v2370 = vpack.c.b16 %v2350, %v2346
    %v2371 = vpack.c.b16 %v2351, %v2347
    %v2372 = vpack.c.b16 %v2352, %v2348
    %v2373 = vpack.c.b16 %v2353, %v2349
    %v2374 = vpack.c.b16 %v2358, %v2354
    %v2375 = vpack.c.b16 %v2359, %v2355
    %v2376 = vpack.c.b16 %v2360, %v2356
    %v2377 = vpack.c.b16 %v2361, %v2357
    %v2395 = vsel %vm159, %v2109, 0
    %2397 = vmatprep.subr.bf16.mxu0 %v2363
    %2398 = vmatpush1.bf16.msra.mxu0 %v2362
    %2399 = vmatprep.subr.bf16.mxu0 %v2367
    %2400 = vmatpush1.bf16.msra.mxu0 %v2366
    %2401 = vmatprep.subr.bf16.mxu0 %v2371
    %2402 = vmatpush1.bf16.msra.mxu0 %v2370
    %2403 = vmatprep.subr.bf16.mxu0 %v2375
    %2404 = vmatpush1.bf16.msra.mxu0 %v2374
    %2405 = vmatprep.subr.bf16.mxu0 0
    %2406 = vmatpush1.bf16.msra.mxu0 0
    %2407 = vmatprep.subr.bf16.mxu0 0
    %2408 = vmatpush1.bf16.msra.mxu0 0
    %2409 = vmatprep.subr.bf16.mxu0 0
    %2410 = vmatpush1.bf16.msra.mxu0 0
    %2411 = vmatprep.subr.bf16.mxu0 0
    %2412 = vmatpush1.bf16.msra.mxu0 0
    %2413 = vmatprep.subr.bf16.mxu0 0
    %2414 = vmatpush1.bf16.msra.mxu0 0
    %2415 = vmatprep.subr.bf16.mxu0 0
    %2416 = vmatpush1.bf16.msra.mxu0 0
    %2417 = vmatprep.subr.bf16.mxu0 0
    %2418 = vmatpush1.bf16.msra.mxu0 0
    %2419 = vmatprep.subr.bf16.mxu0 0
    %2420 = vmatpush1.bf16.msra.mxu0 0
    %2421 = vmatprep.subr.bf16.mxu0 0
    %2422 = vmatpush1.bf16.msra.mxu0 0
    %2423 = vmatprep.subr.bf16.mxu0 0
    %2424 = vmatpush1.bf16.msra.mxu0 0
    %2425 = vmatprep.subr.bf16.mxu0 0
    %2426 = vmatpush1.bf16.msra.mxu0 0
    %2427 = vmatprep.subr.bf16.mxu0 0
    %2428 = vmatpush1.bf16.msra.mxu0 0
    %2429 = vmatprep.mubr.bf16.mxu0 0
    %2430 = vmatmul.mubr.bf16.gmra.mrb[0].mxu0 %v2395
    %v2431 = vpop.f32.mrb[0].mxu0
    %v2432 = vadd.f32 %v2263, %v2431
    %v2433 = vpop.f32.mrb[0].mxu0
    %v2434 = vadd.f32 %v2265, %v2433
    %v2435 = vpop.f32.mrb[0].mxu0
    %v2436 = vadd.f32 %v2267, %v2435
    %v2437 = vpop.f32.mrb[0].mxu0
    %v2438 = vadd.f32 %v2269, %v2437
    %2439 = vdwg.mxu0
    %2440 = vmatprep.subr.bf16.mxu0 %v2365
    %2441 = vmatpush1.bf16.msra.mxu0 %v2364
    %2442 = vmatprep.subr.bf16.mxu0 %v2369
    %2443 = vmatpush1.bf16.msra.mxu0 %v2368
    %2444 = vmatprep.subr.bf16.mxu0 %v2373
    %2445 = vmatpush1.bf16.msra.mxu0 %v2372
    %2446 = vmatprep.subr.bf16.mxu0 %v2377
    %2447 = vmatpush1.bf16.msra.mxu0 %v2376
    %2448 = vmatprep.subr.bf16.mxu0 0
    %2449 = vmatpush1.bf16.msra.mxu0 0
    %2450 = vmatprep.subr.bf16.mxu0 0
    %2451 = vmatpush1.bf16.msra.mxu0 0
    %2452 = vmatprep.subr.bf16.mxu0 0
    %2453 = vmatpush1.bf16.msra.mxu0 0
    %2454 = vmatprep.subr.bf16.mxu0 0
    %2455 = vmatpush1.bf16.msra.mxu0 0
    %2456 = vmatprep.subr.bf16.mxu0 0
    %2457 = vmatpush1.bf16.msra.mxu0 0
    %2458 = vmatprep.subr.bf16.mxu0 0
    %2459 = vmatpush1.bf16.msra.mxu0 0
    %2460 = vmatprep.subr.bf16.mxu0 0
    %2461 = vmatpush1.bf16.msra.mxu0 0
    %2462 = vmatprep.subr.bf16.mxu0 0
    %2463 = vmatpush1.bf16.msra.mxu0 0
    %2464 = vmatprep.subr.bf16.mxu0 0
    %2465 = vmatpush1.bf16.msra.mxu0 0
    %2466 = vmatprep.subr.bf16.mxu0 0
    %2467 = vmatpush1.bf16.msra.mxu0 0
    %2468 = vmatprep.subr.bf16.mxu0 0
    %2469 = vmatpush1.bf16.msra.mxu0 0
    %2470 = vmatprep.subr.bf16.mxu0 0
    %2471 = vmatpush1.bf16.msra.mxu0 0
    %2472 = vmatprep.mubr.bf16.mxu0 0
    %2473 = vmatmul.mubr.bf16.gmra.mrb[0].mxu0 %v2395
    %v2474 = vpop.f32.mrb[0].mxu0
    %v2475 = vadd.f32 %v2306, %v2474
    %v2476 = vpop.f32.mrb[0].mxu0
    %v2477 = vadd.f32 %v2308, %v2476
    %v2478 = vpop.f32.mrb[0].mxu0
    %v2479 = vadd.f32 %v2310, %v2478
    %v2480 = vpop.f32.mrb[0].mxu0
    %v2481 = vadd.f32 %v2312, %v2480
    %2482 = vdwg.mxu0
    %v2483 = vld [vmem:[%s418] sm:$0xff]
    %v2484 = vld [vmem:[%s418 + $0x8] sm:$0xff]
    %v2485 = vld [vmem:[%s418 + $0x10] sm:$0xff]
    %v2486 = vld [vmem:[%s418 + $0x18] sm:$0xff]
    %v2487 = vld [vmem:[%s418 + $0x20] sm:$0xff]
    %v2488 = vld [vmem:[%s418 + $0x28] sm:$0xff]
    %v2489 = vld [vmem:[%s418 + $0x30] sm:$0xff]
    %v2490 = vld [vmem:[%s418 + $0x38] sm:$0xff]
    %v2491 = vld [vmem:[%s418 + $0x40] sm:$0xff]
    %v2492 = vld [vmem:[%s418 + $0x48] sm:$0xff]
    %v2493 = vld [vmem:[%s418 + $0x50] sm:$0xff]
    %v2494 = vld [vmem:[%s418 + $0x58] sm:$0xff]
    %v2495 = vld [vmem:[%s418 + $0x60] sm:$0xff]
    %v2496 = vld [vmem:[%s418 + $0x68] sm:$0xff]
    %v2497 = vld [vmem:[%s418 + $0x70] sm:$0xff]
    %v2498 = vld [vmem:[%s418 + $0x78] sm:$0xff]
    %2499 = vrot.lane.b32.xlu0 %v2109, 120
    %v2500 = vpop.permute.xlu0 %2499
    %v2517 = vunpack.c.l.b16 %v2483
    %v2518 = vunpack.c.h.b16 %v2483
    %v2519 = vunpack.c.l.b16 %v2484
    %v2520 = vunpack.c.h.b16 %v2484
    %v2521 = vunpack.c.l.b16 %v2485
    %v2522 = vunpack.c.h.b16 %v2485
    %v2523 = vunpack.c.l.b16 %v2486
    %v2524 = vunpack.c.h.b16 %v2486
    %v2525 = vunpack.c.l.b16 %v2487
    %v2526 = vunpack.c.h.b16 %v2487
    %v2527 = vunpack.c.l.b16 %v2488
    %v2528 = vunpack.c.h.b16 %v2488
    %v2529 = vunpack.c.l.b16 %v2489
    %v2530 = vunpack.c.h.b16 %v2489
    %v2531 = vunpack.c.l.b16 %v2490
    %v2532 = vunpack.c.h.b16 %v2490
    %v2533 = vunpack.c.l.b16 %v2491
    %v2534 = vunpack.c.h.b16 %v2491
    %v2535 = vunpack.c.l.b16 %v2492
    %v2536 = vunpack.c.h.b16 %v2492
    %v2537 = vunpack.c.l.b16 %v2493
    %v2538 = vunpack.c.h.b16 %v2493
    %v2539 = vunpack.c.l.b16 %v2494
    %v2540 = vunpack.c.h.b16 %v2494
    %v2541 = vunpack.c.l.b16 %v2495
    %v2542 = vunpack.c.h.b16 %v2495
    %v2543 = vunpack.c.l.b16 %v2496
    %v2544 = vunpack.c.h.b16 %v2496
    %v2545 = vunpack.c.l.b16 %v2497
    %v2546 = vunpack.c.h.b16 %v2497
    %v2547 = vunpack.c.l.b16 %v2498
    %v2548 = vunpack.c.h.b16 %v2498
    %v2549 = vpack.c.b16 %v2521, %v2517
    %v2550 = vpack.c.b16 %v2522, %v2518
    %v2551 = vpack.c.b16 %v2523, %v2519
    %v2552 = vpack.c.b16 %v2524, %v2520
    %v2553 = vpack.c.b16 %v2529, %v2525
    %v2554 = vpack.c.b16 %v2530, %v2526
    %v2555 = vpack.c.b16 %v2531, %v2527
    %v2556 = vpack.c.b16 %v2532, %v2528
    %v2557 = vpack.c.b16 %v2537, %v2533
    %v2558 = vpack.c.b16 %v2538, %v2534
    %v2559 = vpack.c.b16 %v2539, %v2535
    %v2560 = vpack.c.b16 %v2540, %v2536
    %v2561 = vpack.c.b16 %v2545, %v2541
    %v2562 = vpack.c.b16 %v2546, %v2542
    %v2563 = vpack.c.b16 %v2547, %v2543
    %v2564 = vpack.c.b16 %v2548, %v2544
    %v2582 = vsel %vm159, %v2500, 0
    %2584 = vmatprep.subr.bf16.mxu0 %v2550
    %2585 = vmatpush1.bf16.msra.mxu0 %v2549
    %2586 = vmatprep.subr.bf16.mxu0 %v2554
    %2587 = vmatpush1.bf16.msra.mxu0 %v2553
    %2588 = vmatprep.subr.bf16.mxu0 %v2558
    %2589 = vmatpush1.bf16.msra.mxu0 %v2557
    %2590 = vmatprep.subr.bf16.mxu0 %v2562
    %2591 = vmatpush1.bf16.msra.mxu0 %v2561
    %2592 = vmatprep.subr.bf16.mxu0 0
    %2593 = vmatpush1.bf16.msra.mxu0 0
    %2594 = vmatprep.subr.bf16.mxu0 0
    %2595 = vmatpush1.bf16.msra.mxu0 0
    %2596 = vmatprep.subr.bf16.mxu0 0
    %2597 = vmatpush1.bf16.msra.mxu0 0
    %2598 = vmatprep.subr.bf16.mxu0 0
    %2599 = vmatpush1.bf16.msra.mxu0 0
    %2600 = vmatprep.subr.bf16.mxu0 0
    %2601 = vmatpush1.bf16.msra.mxu0 0
    %2602 = vmatprep.subr.bf16.mxu0 0
    %2603 = vmatpush1.bf16.msra.mxu0 0
    %2604 = vmatprep.subr.bf16.mxu0 0
    %2605 = vmatpush1.bf16.msra.mxu0 0
    %2606 = vmatprep.subr.bf16.mxu0 0
    %2607 = vmatpush1.bf16.msra.mxu0 0
    %2608 = vmatprep.subr.bf16.mxu0 0
    %2609 = vmatpush1.bf16.msra.mxu0 0
    %2610 = vmatprep.subr.bf16.mxu0 0
    %2611 = vmatpush1.bf16.msra.mxu0 0
    %2612 = vmatprep.subr.bf16.mxu0 0
    %2613 = vmatpush1.bf16.msra.mxu0 0
    %2614 = vmatprep.subr.bf16.mxu0 0
    %2615 = vmatpush1.bf16.msra.mxu0 0
    %2616 = vmatprep.mubr.bf16.mxu0 0
    %2617 = vmatmul.mubr.bf16.gmra.mrb[0].mxu0 %v2582
    %v2618 = vpop.f32.mrb[0].mxu0
    %v2619 = vadd.f32 0.0, %v2618
    %v2620 = vpop.f32.mrb[0].mxu0
    %v2621 = vadd.f32 0.0, %v2620
    %v2622 = vpop.f32.mrb[0].mxu0
    %v2623 = vadd.f32 0.0, %v2622
    %v2624 = vpop.f32.mrb[0].mxu0
    %v2625 = vadd.f32 0.0, %v2624
    %2626 = vdwg.mxu0
    %2627 = vmatprep.subr.bf16.mxu0 %v2552
    %2628 = vmatpush1.bf16.msra.mxu0 %v2551
    %2629 = vmatprep.subr.bf16.mxu0 %v2556
    %2630 = vmatpush1.bf16.msra.mxu0 %v2555
    %2631 = vmatprep.subr.bf16.mxu0 %v2560
    %2632 = vmatpush1.bf16.msra.mxu0 %v2559
    %2633 = vmatprep.subr.bf16.mxu0 %v2564
    %2634 = vmatpush1.bf16.msra.mxu0 %v2563
    %2635 = vmatprep.subr.bf16.mxu0 0
    %2636 = vmatpush1.bf16.msra.mxu0 0
    %2637 = vmatprep.subr.bf16.mxu0 0
    %2638 = vmatpush1.bf16.msra.mxu0 0
    %2639 = vmatprep.subr.bf16.mxu0 0
    %2640 = vmatpush1.bf16.msra.mxu0 0
    %2641 = vmatprep.subr.bf16.mxu0 0
    %2642 = vmatpush1.bf16.msra.mxu0 0
    %2643 = vmatprep.subr.bf16.mxu0 0
    %2644 = vmatpush1.bf16.msra.mxu0 0
    %2645 = vmatprep.subr.bf16.mxu0 0
    %2646 = vmatpush1.bf16.msra.mxu0 0
    %2647 = vmatprep.subr.bf16.mxu0 0
    %2648 = vmatpush1.bf16.msra.mxu0 0
    %2649 = vmatprep.subr.bf16.mxu0 0
    %2650 = vmatpush1.bf16.msra.mxu0 0
    %2651 = vmatprep.subr.bf16.mxu0 0
    %2652 = vmatpush1.bf16.msra.mxu0 0
    %2653 = vmatprep.subr.bf16.mxu0 0
    %2654 = vmatpush1.bf16.msra.mxu0 0
    %2655 = vmatprep.subr.bf16.mxu0 0
    %2656 = vmatpush1.bf16.msra.mxu0 0
    %2657 = vmatprep.subr.bf16.mxu0 0
    %2658 = vmatpush1.bf16.msra.mxu0 0
    %2659 = vmatprep.mubr.bf16.mxu0 0
    %2660 = vmatmul.mubr.bf16.gmra.mrb[0].mxu0 %v2582
    %v2661 = vpop.f32.mrb[0].mxu0
    %v2662 = vadd.f32 0.0, %v2661
    %v2663 = vpop.f32.mrb[0].mxu0
    %v2664 = vadd.f32 0.0, %v2663
    %v2665 = vpop.f32.mrb[0].mxu0
    %v2666 = vadd.f32 0.0, %v2665
    %v2667 = vpop.f32.mrb[0].mxu0
    %v2668 = vadd.f32 0.0, %v2667
    %2669 = vdwg.mxu0
    %v2670 = vadd.f32 %v2432, %v2619
    %v2671 = vadd.f32 %v2434, %v2621
    %v2672 = vadd.f32 %v2475, %v2662
    %v2673 = vadd.f32 %v2477, %v2664
    %v2674 = vadd.f32 %v2436, %v2623
    %v2675 = vadd.f32 %v2438, %v2625
    %v2676 = vadd.f32 %v2479, %v2666
    %v2677 = vadd.f32 %v2481, %v2668
    %v2678 = vpack.c.bf16 %v2108, %v2108
    %v2679 = vld [vmem:[%s615] sm:$0xff]
    %v2680 = vld [vmem:[%s615 + $0x8] sm:$0xff]
    %v2681 = vld [vmem:[%s615 + $0x10] sm:$0xff]
    %v2682 = vld [vmem:[%s615 + $0x18] sm:$0xff]
    %v2683 = vld [vmem:[%s615 + $0x20] sm:$0xff]
    %v2684 = vld [vmem:[%s615 + $0x28] sm:$0xff]
    %v2685 = vld [vmem:[%s615 + $0x30] sm:$0xff]
    %v2686 = vld [vmem:[%s615 + $0x38] sm:$0xff]
    %v2687 = vld [vmem:[%s615 + $0x40] sm:$0xff]
    %v2688 = vld [vmem:[%s615 + $0x48] sm:$0xff]
    %v2689 = vld [vmem:[%s615 + $0x50] sm:$0xff]
    %v2690 = vld [vmem:[%s615 + $0x58] sm:$0xff]
    %v2691 = vld [vmem:[%s615 + $0x60] sm:$0xff]
    %v2692 = vld [vmem:[%s615 + $0x68] sm:$0xff]
    %v2693 = vld [vmem:[%s615 + $0x70] sm:$0xff]
    %v2694 = vld [vmem:[%s615 + $0x78] sm:$0xff]
    %v2695 = vshrl.u32 %v2109, 16
    %v2697 = vshll.u32 %v2109, 16
    %v2699 = vrot.slane %v2697, 1
    %v2700 = vor.u32 %v2695, %v2699
    %v2702 = vshll.u32 %v2678, 16
    %v2704 = vrot.slane %v2702, 1
    %v2705 = vsel %vm632, %v2700, %v2704
    %v2722 = vunpack.c.l.b16 %v2679
    %v2723 = vunpack.c.h.b16 %v2679
    %v2724 = vunpack.c.l.b16 %v2680
    %v2725 = vunpack.c.h.b16 %v2680
    %v2726 = vunpack.c.l.b16 %v2681
    %v2727 = vunpack.c.h.b16 %v2681
    %v2728 = vunpack.c.l.b16 %v2682
    %v2729 = vunpack.c.h.b16 %v2682
    %v2730 = vunpack.c.l.b16 %v2683
    %v2731 = vunpack.c.h.b16 %v2683
    %v2732 = vunpack.c.l.b16 %v2684
    %v2733 = vunpack.c.h.b16 %v2684
    %v2734 = vunpack.c.l.b16 %v2685
    %v2735 = vunpack.c.h.b16 %v2685
    %v2736 = vunpack.c.l.b16 %v2686
    %v2737 = vunpack.c.h.b16 %v2686
    %v2738 = vunpack.c.l.b16 %v2687
    %v2739 = vunpack.c.h.b16 %v2687
    %v2740 = vunpack.c.l.b16 %v2688
    %v2741 = vunpack.c.h.b16 %v2688
    %v2742 = vunpack.c.l.b16 %v2689
    %v2743 = vunpack.c.h.b16 %v2689
    %v2744 = vunpack.c.l.b16 %v2690
    %v2745 = vunpack.c.h.b16 %v2690
    %v2746 = vunpack.c.l.b16 %v2691
    %v2747 = vunpack.c.h.b16 %v2691
    %v2748 = vunpack.c.l.b16 %v2692
    %v2749 = vunpack.c.h.b16 %v2692
    %v2750 = vunpack.c.l.b16 %v2693
    %v2751 = vunpack.c.h.b16 %v2693
    %v2752 = vunpack.c.l.b16 %v2694
    %v2753 = vunpack.c.h.b16 %v2694
    %v2754 = vpack.c.b16 %v2726, %v2722
    %v2755 = vpack.c.b16 %v2727, %v2723
    %v2756 = vpack.c.b16 %v2728, %v2724
    %v2757 = vpack.c.b16 %v2729, %v2725
    %v2758 = vpack.c.b16 %v2734, %v2730
    %v2759 = vpack.c.b16 %v2735, %v2731
    %v2760 = vpack.c.b16 %v2736, %v2732
    %v2761 = vpack.c.b16 %v2737, %v2733
    %v2762 = vpack.c.b16 %v2742, %v2738
    %v2763 = vpack.c.b16 %v2743, %v2739
    %v2764 = vpack.c.b16 %v2744, %v2740
    %v2765 = vpack.c.b16 %v2745, %v2741
    %v2766 = vpack.c.b16 %v2750, %v2746
    %v2767 = vpack.c.b16 %v2751, %v2747
    %v2768 = vpack.c.b16 %v2752, %v2748
    %v2769 = vpack.c.b16 %v2753, %v2749
    %v2787 = vsel %vm159, %v2705, 0
    %2789 = vmatprep.subr.bf16.mxu0 %v2755
    %2790 = vmatpush1.bf16.msra.mxu0 %v2754
    %2791 = vmatprep.subr.bf16.mxu0 %v2759
    %2792 = vmatpush1.bf16.msra.mxu0 %v2758
    %2793 = vmatprep.subr.bf16.mxu0 %v2763
    %2794 = vmatpush1.bf16.msra.mxu0 %v2762
    %2795 = vmatprep.subr.bf16.mxu0 %v2767
    %2796 = vmatpush1.bf16.msra.mxu0 %v2766
    %2797 = vmatprep.subr.bf16.mxu0 0
    %2798 = vmatpush1.bf16.msra.mxu0 0
    %2799 = vmatprep.subr.bf16.mxu0 0
    %2800 = vmatpush1.bf16.msra.mxu0 0
    %2801 = vmatprep.subr.bf16.mxu0 0
    %2802 = vmatpush1.bf16.msra.mxu0 0
    %2803 = vmatprep.subr.bf16.mxu0 0
    %2804 = vmatpush1.bf16.msra.mxu0 0
    %2805 = vmatprep.subr.bf16.mxu0 0
    %2806 = vmatpush1.bf16.msra.mxu0 0
    %2807 = vmatprep.subr.bf16.mxu0 0
    %2808 = vmatpush1.bf16.msra.mxu0 0
    %2809 = vmatprep.subr.bf16.mxu0 0
    %2810 = vmatpush1.bf16.msra.mxu0 0
    %2811 = vmatprep.subr.bf16.mxu0 0
    %2812 = vmatpush1.bf16.msra.mxu0 0
    %2813 = vmatprep.subr.bf16.mxu0 0
    %2814 = vmatpush1.bf16.msra.mxu0 0
    %2815 = vmatprep.subr.bf16.mxu0 0
    %2816 = vmatpush1.bf16.msra.mxu0 0
    %2817 = vmatprep.subr.bf16.mxu0 0
    %2818 = vmatpush1.bf16.msra.mxu0 0
    %2819 = vmatprep.subr.bf16.mxu0 0
    %2820 = vmatpush1.bf16.msra.mxu0 0
    %2821 = vmatprep.mubr.bf16.mxu0 0
    %2822 = vmatmul.mubr.bf16.gmra.mrb[0].mxu0 %v2787
    %v2823 = vpop.f32.mrb[0].mxu0
    %v2824 = vadd.f32 0.0, %v2823
    %v2825 = vpop.f32.mrb[0].mxu0
    %v2826 = vadd.f32 0.0, %v2825
    %v2827 = vpop.f32.mrb[0].mxu0
    %v2828 = vadd.f32 0.0, %v2827
    %v2829 = vpop.f32.mrb[0].mxu0
    %v2830 = vadd.f32 0.0, %v2829
    %2831 = vdwg.mxu0
    %2832 = vmatprep.subr.bf16.mxu0 %v2757
    %2833 = vmatpush1.bf16.msra.mxu0 %v2756
    %2834 = vmatprep.subr.bf16.mxu0 %v2761
    %2835 = vmatpush1.bf16.msra.mxu0 %v2760
    %2836 = vmatprep.subr.bf16.mxu0 %v2765
    %2837 = vmatpush1.bf16.msra.mxu0 %v2764
    %2838 = vmatprep.subr.bf16.mxu0 %v2769
    %2839 = vmatpush1.bf16.msra.mxu0 %v2768
    %2840 = vmatprep.subr.bf16.mxu0 0
    %2841 = vmatpush1.bf16.msra.mxu0 0
    %2842 = vmatprep.subr.bf16.mxu0 0
    %2843 = vmatpush1.bf16.msra.mxu0 0
    %2844 = vmatprep.subr.bf16.mxu0 0
    %2845 = vmatpush1.bf16.msra.mxu0 0
    %2846 = vmatprep.subr.bf16.mxu0 0
    %2847 = vmatpush1.bf16.msra.mxu0 0
    %2848 = vmatprep.subr.bf16.mxu0 0
    %2849 = vmatpush1.bf16.msra.mxu0 0
    %2850 = vmatprep.subr.bf16.mxu0 0
    %2851 = vmatpush1.bf16.msra.mxu0 0
    %2852 = vmatprep.subr.bf16.mxu0 0
    %2853 = vmatpush1.bf16.msra.mxu0 0
    %2854 = vmatprep.subr.bf16.mxu0 0
    %2855 = vmatpush1.bf16.msra.mxu0 0
    %2856 = vmatprep.subr.bf16.mxu0 0
    %2857 = vmatpush1.bf16.msra.mxu0 0
    %2858 = vmatprep.subr.bf16.mxu0 0
    %2859 = vmatpush1.bf16.msra.mxu0 0
    %2860 = vmatprep.subr.bf16.mxu0 0
    %2861 = vmatpush1.bf16.msra.mxu0 0
    %2862 = vmatprep.subr.bf16.mxu0 0
    %2863 = vmatpush1.bf16.msra.mxu0 0
    %2864 = vmatprep.mubr.bf16.mxu0 0
    %2865 = vmatmul.mubr.bf16.gmra.mrb[0].mxu0 %v2787
    %v2866 = vpop.f32.mrb[0].mxu0
    %v2867 = vadd.f32 0.0, %v2866
    %v2868 = vpop.f32.mrb[0].mxu0
    %v2869 = vadd.f32 0.0, %v2868
    %v2870 = vpop.f32.mrb[0].mxu0
    %v2871 = vadd.f32 0.0, %v2870
    %v2872 = vpop.f32.mrb[0].mxu0
    %v2873 = vadd.f32 0.0, %v2872
    %2874 = vdwg.mxu0
    %v2875 = vadd.f32 %v2670, %v2824
    %v2876 = vadd.f32 %v2671, %v2826
    %v2877 = vadd.f32 %v2672, %v2867
    %v2878 = vadd.f32 %v2673, %v2869
    %v2879 = vadd.f32 %v2674, %v2828
    %v2880 = vadd.f32 %v2675, %v2830
    %v2881 = vadd.f32 %v2676, %v2871
    %v2882 = vadd.f32 %v2677, %v2873
    %v2883 = vld [vmem:[%s821] sm:$0xff]
    %v2884 = vld [vmem:[%s821 + $0x8] sm:$0xff]
    %v2885 = vld [vmem:[%s821 + $0x10] sm:$0xff]
    %v2886 = vld [vmem:[%s821 + $0x18] sm:$0xff]
    %v2887 = vld [vmem:[%s821 + $0x20] sm:$0xff]
    %v2888 = vld [vmem:[%s821 + $0x28] sm:$0xff]
    %v2889 = vld [vmem:[%s821 + $0x30] sm:$0xff]
    %v2890 = vld [vmem:[%s821 + $0x38] sm:$0xff]
    %v2891 = vld [vmem:[%s821 + $0x40] sm:$0xff]
    %v2892 = vld [vmem:[%s821 + $0x48] sm:$0xff]
    %v2893 = vld [vmem:[%s821 + $0x50] sm:$0xff]
    %v2894 = vld [vmem:[%s821 + $0x58] sm:$0xff]
    %v2895 = vld [vmem:[%s821 + $0x60] sm:$0xff]
    %v2896 = vld [vmem:[%s821 + $0x68] sm:$0xff]
    %v2897 = vld [vmem:[%s821 + $0x70] sm:$0xff]
    %v2898 = vld [vmem:[%s821 + $0x78] sm:$0xff]
    %2899 = vrot.lane.b32.xlu0 %v2705, 124
    %v2900 = vpop.permute.xlu0 %2899
    %v2917 = vunpack.c.l.b16 %v2883
    %v2918 = vunpack.c.h.b16 %v2883
    %v2919 = vunpack.c.l.b16 %v2884
    %v2920 = vunpack.c.h.b16 %v2884
    %v2921 = vunpack.c.l.b16 %v2885
    %v2922 = vunpack.c.h.b16 %v2885
    %v2923 = vunpack.c.l.b16 %v2886
    %v2924 = vunpack.c.h.b16 %v2886
    %v2925 = vunpack.c.l.b16 %v2887
    %v2926 = vunpack.c.h.b16 %v2887
    %v2927 = vunpack.c.l.b16 %v2888
    %v2928 = vunpack.c.h.b16 %v2888
    %v2929 = vunpack.c.l.b16 %v2889
    %v2930 = vunpack.c.h.b16 %v2889
    %v2931 = vunpack.c.l.b16 %v2890
    %v2932 = vunpack.c.h.b16 %v2890
    %v2933 = vunpack.c.l.b16 %v2891
    %v2934 = vunpack.c.h.b16 %v2891
    %v2935 = vunpack.c.l.b16 %v2892
    %v2936 = vunpack.c.h.b16 %v2892
    %v2937 = vunpack.c.l.b16 %v2893
    %v2938 = vunpack.c.h.b16 %v2893
    %v2939 = vunpack.c.l.b16 %v2894
    %v2940 = vunpack.c.h.b16 %v2894
    %v2941 = vunpack.c.l.b16 %v2895
    %v2942 = vunpack.c.h.b16 %v2895
    %v2943 = vunpack.c.l.b16 %v2896
    %v2944 = vunpack.c.h.b16 %v2896
    %v2945 = vunpack.c.l.b16 %v2897
    %v2946 = vunpack.c.h.b16 %v2897
    %v2947 = vunpack.c.l.b16 %v2898
    %v2948 = vunpack.c.h.b16 %v2898
    %v2949 = vpack.c.b16 %v2921, %v2917
    %v2950 = vpack.c.b16 %v2922, %v2918
    %v2951 = vpack.c.b16 %v2923, %v2919
    %v2952 = vpack.c.b16 %v2924, %v2920
    %v2953 = vpack.c.b16 %v2929, %v2925
    %v2954 = vpack.c.b16 %v2930, %v2926
    %v2955 = vpack.c.b16 %v2931, %v2927
    %v2956 = vpack.c.b16 %v2932, %v2928
    %v2957 = vpack.c.b16 %v2937, %v2933
    %v2958 = vpack.c.b16 %v2938, %v2934
    %v2959 = vpack.c.b16 %v2939, %v2935
    %v2960 = vpack.c.b16 %v2940, %v2936
    %v2961 = vpack.c.b16 %v2945, %v2941
    %v2962 = vpack.c.b16 %v2946, %v2942
    %v2963 = vpack.c.b16 %v2947, %v2943
    %v2964 = vpack.c.b16 %v2948, %v2944
    %v2982 = vsel %vm159, %v2900, 0
    %2984 = vmatprep.subr.bf16.mxu0 %v2950
    %2985 = vmatpush1.bf16.msra.mxu0 %v2949
    %2986 = vmatprep.subr.bf16.mxu0 %v2954
    %2987 = vmatpush1.bf16.msra.mxu0 %v2953
    %2988 = vmatprep.subr.bf16.mxu0 %v2958
    %2989 = vmatpush1.bf16.msra.mxu0 %v2957
    %2990 = vmatprep.subr.bf16.mxu0 %v2962
    %2991 = vmatpush1.bf16.msra.mxu0 %v2961
    %2992 = vmatprep.subr.bf16.mxu0 0
    %2993 = vmatpush1.bf16.msra.mxu0 0
    %2994 = vmatprep.subr.bf16.mxu0 0
    %2995 = vmatpush1.bf16.msra.mxu0 0
    %2996 = vmatprep.subr.bf16.mxu0 0
    %2997 = vmatpush1.bf16.msra.mxu0 0
    %2998 = vmatprep.subr.bf16.mxu0 0
    %2999 = vmatpush1.bf16.msra.mxu0 0
    %3000 = vmatprep.subr.bf16.mxu0 0
    %3001 = vmatpush1.bf16.msra.mxu0 0
    %3002 = vmatprep.subr.bf16.mxu0 0
    %3003 = vmatpush1.bf16.msra.mxu0 0
    %3004 = vmatprep.subr.bf16.mxu0 0
    %3005 = vmatpush1.bf16.msra.mxu0 0
    %3006 = vmatprep.subr.bf16.mxu0 0
    %3007 = vmatpush1.bf16.msra.mxu0 0
    %3008 = vmatprep.subr.bf16.mxu0 0
    %3009 = vmatpush1.bf16.msra.mxu0 0
    %3010 = vmatprep.subr.bf16.mxu0 0
    %3011 = vmatpush1.bf16.msra.mxu0 0
    %3012 = vmatprep.subr.bf16.mxu0 0
    %3013 = vmatpush1.bf16.msra.mxu0 0
    %3014 = vmatprep.subr.bf16.mxu0 0
    %3015 = vmatpush1.bf16.msra.mxu0 0
    %3016 = vmatprep.mubr.bf16.mxu0 0
    %3017 = vmatmul.mubr.bf16.gmra.mrb[0].mxu0 %v2982
    %v3018 = vpop.f32.mrb[0].mxu0
    %v3019 = vadd.f32 0.0, %v3018
    %v3020 = vpop.f32.mrb[0].mxu0
    %v3021 = vadd.f32 0.0, %v3020
    %v3022 = vpop.f32.mrb[0].mxu0
    %v3023 = vadd.f32 0.0, %v3022
    %v3024 = vpop.f32.mrb[0].mxu0
    %v3025 = vadd.f32 0.0, %v3024
    %3026 = vdwg.mxu0
    %3027 = vmatprep.subr.bf16.mxu0 %v2952
    %3028 = vmatpush1.bf16.msra.mxu0 %v2951
    %3029 = vmatprep.subr.bf16.mxu0 %v2956
    %3030 = vmatpush1.bf16.msra.mxu0 %v2955
    %3031 = vmatprep.subr.bf16.mxu0 %v2960
    %3032 = vmatpush1.bf16.msra.mxu0 %v2959
    %3033 = vmatprep.subr.bf16.mxu0 %v2964
    %3034 = vmatpush1.bf16.msra.mxu0 %v2963
    %3035 = vmatprep.subr.bf16.mxu0 0
    %3036 = vmatpush1.bf16.msra.mxu0 0
    %3037 = vmatprep.subr.bf16.mxu0 0
    %3038 = vmatpush1.bf16.msra.mxu0 0
    %3039 = vmatprep.subr.bf16.mxu0 0
    %3040 = vmatpush1.bf16.msra.mxu0 0
    %3041 = vmatprep.subr.bf16.mxu0 0
    %3042 = vmatpush1.bf16.msra.mxu0 0
    %3043 = vmatprep.subr.bf16.mxu0 0
    %3044 = vmatpush1.bf16.msra.mxu0 0
    %3045 = vmatprep.subr.bf16.mxu0 0
    %3046 = vmatpush1.bf16.msra.mxu0 0
    %3047 = vmatprep.subr.bf16.mxu0 0
    %3048 = vmatpush1.bf16.msra.mxu0 0
    %3049 = vmatprep.subr.bf16.mxu0 0
    %3050 = vmatpush1.bf16.msra.mxu0 0
    %3051 = vmatprep.subr.bf16.mxu0 0
    %3052 = vmatpush1.bf16.msra.mxu0 0
    %3053 = vmatprep.subr.bf16.mxu0 0
    %3054 = vmatpush1.bf16.msra.mxu0 0
    %3055 = vmatprep.subr.bf16.mxu0 0
    %3056 = vmatpush1.bf16.msra.mxu0 0
    %3057 = vmatprep.subr.bf16.mxu0 0
    %3058 = vmatpush1.bf16.msra.mxu0 0
    %3059 = vmatprep.mubr.bf16.mxu0 0
    %3060 = vmatmul.mubr.bf16.gmra.mrb[0].mxu0 %v2982
    %v3061 = vpop.f32.mrb[0].mxu0
    %v3062 = vadd.f32 0.0, %v3061
    %v3063 = vpop.f32.mrb[0].mxu0
    %v3064 = vadd.f32 0.0, %v3063
    %v3065 = vpop.f32.mrb[0].mxu0
    %v3066 = vadd.f32 0.0, %v3065
    %v3067 = vpop.f32.mrb[0].mxu0
    %v3068 = vadd.f32 0.0, %v3067
    %3069 = vdwg.mxu0
    %v3070 = vadd.f32 %v2875, %v3019
    %v3071 = vadd.f32 %v2876, %v3021
    %v3072 = vadd.f32 %v2877, %v3062
    %v3073 = vadd.f32 %v2878, %v3064
    %v3074 = vadd.f32 %v2879, %v3023
    %v3075 = vadd.f32 %v2880, %v3025
    %v3076 = vadd.f32 %v2881, %v3066
    %v3077 = vadd.f32 %v2882, %v3068
    %v3078 = vld [vmem:[%s1017] sm:$0xff]
    %v3079 = vld [vmem:[%s1017 + $0x8] sm:$0xff]
    %v3080 = vld [vmem:[%s1017 + $0x10] sm:$0xff]
    %v3081 = vld [vmem:[%s1017 + $0x18] sm:$0xff]
    %v3082 = vld [vmem:[%s1017 + $0x20] sm:$0xff]
    %v3083 = vld [vmem:[%s1017 + $0x28] sm:$0xff]
    %v3084 = vld [vmem:[%s1017 + $0x30] sm:$0xff]
    %v3085 = vld [vmem:[%s1017 + $0x38] sm:$0xff]
    %v3086 = vld [vmem:[%s1017 + $0x40] sm:$0xff]
    %v3087 = vld [vmem:[%s1017 + $0x48] sm:$0xff]
    %v3088 = vld [vmem:[%s1017 + $0x50] sm:$0xff]
    %v3089 = vld [vmem:[%s1017 + $0x58] sm:$0xff]
    %v3090 = vld [vmem:[%s1017 + $0x60] sm:$0xff]
    %v3091 = vld [vmem:[%s1017 + $0x68] sm:$0xff]
    %v3092 = vld [vmem:[%s1017 + $0x70] sm:$0xff]
    %v3093 = vld [vmem:[%s1017 + $0x78] sm:$0xff]
    %3094 = vrot.lane.b32.xlu0 %v2705, 120
    %v3095 = vpop.permute.xlu0 %3094
    %v3112 = vunpack.c.l.b16 %v3078
    %v3113 = vunpack.c.h.b16 %v3078
    %v3114 = vunpack.c.l.b16 %v3079
    %v3115 = vunpack.c.h.b16 %v3079
    %v3116 = vunpack.c.l.b16 %v3080
    %v3117 = vunpack.c.h.b16 %v3080
    %v3118 = vunpack.c.l.b16 %v3081
    %v3119 = vunpack.c.h.b16 %v3081
    %v3120 = vunpack.c.l.b16 %v3082
    %v3121 = vunpack.c.h.b16 %v3082
    %v3122 = vunpack.c.l.b16 %v3083
    %v3123 = vunpack.c.h.b16 %v3083
    %v3124 = vunpack.c.l.b16 %v3084
    %v3125 = vunpack.c.h.b16 %v3084
    %v3126 = vunpack.c.l.b16 %v3085
    %v3127 = vunpack.c.h.b16 %v3085
    %v3128 = vunpack.c.l.b16 %v3086
    %v3129 = vunpack.c.h.b16 %v3086
    %v3130 = vunpack.c.l.b16 %v3087
    %v3131 = vunpack.c.h.b16 %v3087
    %v3132 = vunpack.c.l.b16 %v3088
    %v3133 = vunpack.c.h.b16 %v3088
    %v3134 = vunpack.c.l.b16 %v3089
    %v3135 = vunpack.c.h.b16 %v3089
    %v3136 = vunpack.c.l.b16 %v3090
    %v3137 = vunpack.c.h.b16 %v3090
    %v3138 = vunpack.c.l.b16 %v3091
    %v3139 = vunpack.c.h.b16 %v3091
    %v3140 = vunpack.c.l.b16 %v3092
    %v3141 = vunpack.c.h.b16 %v3092
    %v3142 = vunpack.c.l.b16 %v3093
    %v3143 = vunpack.c.h.b16 %v3093
    %v3144 = vpack.c.b16 %v3116, %v3112
    %v3145 = vpack.c.b16 %v3117, %v3113
    %v3146 = vpack.c.b16 %v3118, %v3114
    %v3147 = vpack.c.b16 %v3119, %v3115
    %v3148 = vpack.c.b16 %v3124, %v3120
    %v3149 = vpack.c.b16 %v3125, %v3121
    %v3150 = vpack.c.b16 %v3126, %v3122
    %v3151 = vpack.c.b16 %v3127, %v3123
    %v3152 = vpack.c.b16 %v3132, %v3128
    %v3153 = vpack.c.b16 %v3133, %v3129
    %v3154 = vpack.c.b16 %v3134, %v3130
    %v3155 = vpack.c.b16 %v3135, %v3131
    %v3156 = vpack.c.b16 %v3140, %v3136
    %v3157 = vpack.c.b16 %v3141, %v3137
    %v3158 = vpack.c.b16 %v3142, %v3138
    %v3159 = vpack.c.b16 %v3143, %v3139
    %v3177 = vsel %vm159, %v3095, 0
    %3179 = vmatprep.subr.bf16.mxu0 %v3145
    %3180 = vmatpush1.bf16.msra.mxu0 %v3144
    %3181 = vmatprep.subr.bf16.mxu0 %v3149
    %3182 = vmatpush1.bf16.msra.mxu0 %v3148
    %3183 = vmatprep.subr.bf16.mxu0 %v3153
    %3184 = vmatpush1.bf16.msra.mxu0 %v3152
    %3185 = vmatprep.subr.bf16.mxu0 %v3157
    %3186 = vmatpush1.bf16.msra.mxu0 %v3156
    %3187 = vmatprep.subr.bf16.mxu0 0
    %3188 = vmatpush1.bf16.msra.mxu0 0
    %3189 = vmatprep.subr.bf16.mxu0 0
    %3190 = vmatpush1.bf16.msra.mxu0 0
    %3191 = vmatprep.subr.bf16.mxu0 0
    %3192 = vmatpush1.bf16.msra.mxu0 0
    %3193 = vmatprep.subr.bf16.mxu0 0
    %3194 = vmatpush1.bf16.msra.mxu0 0
    %3195 = vmatprep.subr.bf16.mxu0 0
    %3196 = vmatpush1.bf16.msra.mxu0 0
    %3197 = vmatprep.subr.bf16.mxu0 0
    %3198 = vmatpush1.bf16.msra.mxu0 0
    %3199 = vmatprep.subr.bf16.mxu0 0
    %3200 = vmatpush1.bf16.msra.mxu0 0
    %3201 = vmatprep.subr.bf16.mxu0 0
    %3202 = vmatpush1.bf16.msra.mxu0 0
    %3203 = vmatprep.subr.bf16.mxu0 0
    %3204 = vmatpush1.bf16.msra.mxu0 0
    %3205 = vmatprep.subr.bf16.mxu0 0
    %3206 = vmatpush1.bf16.msra.mxu0 0
    %3207 = vmatprep.subr.bf16.mxu0 0
    %3208 = vmatpush1.bf16.msra.mxu0 0
    %3209 = vmatprep.subr.bf16.mxu0 0
    %3210 = vmatpush1.bf16.msra.mxu0 0
    %3211 = vmatprep.mubr.bf16.mxu0 0
    %3212 = vmatmul.mubr.bf16.gmra.mrb[0].mxu0 %v3177
    %v3213 = vpop.f32.mrb[0].mxu0
    %v3214 = vadd.f32 0.0, %v3213
    %v3215 = vpop.f32.mrb[0].mxu0
    %v3216 = vadd.f32 0.0, %v3215
    %v3217 = vpop.f32.mrb[0].mxu0
    %v3218 = vadd.f32 0.0, %v3217
    %v3219 = vpop.f32.mrb[0].mxu0
    %v3220 = vadd.f32 0.0, %v3219
    %3221 = vdwg.mxu0
    %3222 = vmatprep.subr.bf16.mxu0 %v3147
    %3223 = vmatpush1.bf16.msra.mxu0 %v3146
    %3224 = vmatprep.subr.bf16.mxu0 %v3151
    %3225 = vmatpush1.bf16.msra.mxu0 %v3150
    %3226 = vmatprep.subr.bf16.mxu0 %v3155
    %3227 = vmatpush1.bf16.msra.mxu0 %v3154
    %3228 = vmatprep.subr.bf16.mxu0 %v3159
    %3229 = vmatpush1.bf16.msra.mxu0 %v3158
    %3230 = vmatprep.subr.bf16.mxu0 0
    %3231 = vmatpush1.bf16.msra.mxu0 0
    %3232 = vmatprep.subr.bf16.mxu0 0
    %3233 = vmatpush1.bf16.msra.mxu0 0
    %3234 = vmatprep.subr.bf16.mxu0 0
    %3235 = vmatpush1.bf16.msra.mxu0 0
    %3236 = vmatprep.subr.bf16.mxu0 0
    %3237 = vmatpush1.bf16.msra.mxu0 0
    %3238 = vmatprep.subr.bf16.mxu0 0
    %3239 = vmatpush1.bf16.msra.mxu0 0
    %3240 = vmatprep.subr.bf16.mxu0 0
    %3241 = vmatpush1.bf16.msra.mxu0 0
    %3242 = vmatprep.subr.bf16.mxu0 0
    %3243 = vmatpush1.bf16.msra.mxu0 0
    %3244 = vmatprep.subr.bf16.mxu0 0
    %3245 = vmatpush1.bf16.msra.mxu0 0
    %3246 = vmatprep.subr.bf16.mxu0 0
    %3247 = vmatpush1.bf16.msra.mxu0 0
    %3248 = vmatprep.subr.bf16.mxu0 0
    %3249 = vmatpush1.bf16.msra.mxu0 0
    %3250 = vmatprep.subr.bf16.mxu0 0
    %3251 = vmatpush1.bf16.msra.mxu0 0
    %3252 = vmatprep.subr.bf16.mxu0 0
    %3253 = vmatpush1.bf16.msra.mxu0 0
    %3254 = vmatprep.mubr.bf16.mxu0 0
    %3255 = vmatmul.mubr.bf16.gmra.mrb[0].mxu0 %v3177
    %v3256 = vpop.f32.mrb[0].mxu0
    %v3257 = vadd.f32 0.0, %v3256
    %v3258 = vpop.f32.mrb[0].mxu0
    %v3259 = vadd.f32 0.0, %v3258
    %v3260 = vpop.f32.mrb[0].mxu0
    %v3261 = vadd.f32 0.0, %v3260
    %v3262 = vpop.f32.mrb[0].mxu0
    %v3263 = vadd.f32 0.0, %v3262
    %3264 = vdwg.mxu0
    %v3265 = vadd.f32 %v3070, %v3214
    %v3266 = vadd.f32 %v3071, %v3216
    %v3267 = vadd.f32 %v3072, %v3257
    %v3268 = vadd.f32 %v3073, %v3259
    %v3269 = vadd.f32 %v3074, %v3218
    %v3270 = vadd.f32 %v3075, %v3220
    %v3271 = vadd.f32 %v3076, %v3261
    %v3272 = vadd.f32 %v3077, %v3263
    %v3273 = vld [vmem:[%s1213] sm:$0xff]
    %v3274 = vld [vmem:[%s1213 + $0x8] sm:$0xff]
    %v3275 = vld [vmem:[%s1213 + $0x10] sm:$0xff]
    %v3276 = vld [vmem:[%s1213 + $0x18] sm:$0xff]
    %v3277 = vld [vmem:[%s1213 + $0x20] sm:$0xff]
    %v3278 = vld [vmem:[%s1213 + $0x28] sm:$0xff]
    %v3279 = vld [vmem:[%s1213 + $0x30] sm:$0xff]
    %v3280 = vld [vmem:[%s1213 + $0x38] sm:$0xff]
    %v3281 = vld [vmem:[%s1213 + $0x40] sm:$0xff]
    %v3282 = vld [vmem:[%s1213 + $0x48] sm:$0xff]
    %v3283 = vld [vmem:[%s1213 + $0x50] sm:$0xff]
    %v3284 = vld [vmem:[%s1213 + $0x58] sm:$0xff]
    %v3285 = vld [vmem:[%s1213 + $0x60] sm:$0xff]
    %v3286 = vld [vmem:[%s1213 + $0x68] sm:$0xff]
    %v3287 = vld [vmem:[%s1213 + $0x70] sm:$0xff]
    %v3288 = vld [vmem:[%s1213 + $0x78] sm:$0xff]
    %v3290 = vrot.slane %v2109, 1
    %v3291 = vrot.slane %v2678, 1
    %v3292 = vsel %vm1231, %v3290, %v3291
    %v3309 = vunpack.c.l.b16 %v3273
    %v3310 = vunpack.c.h.b16 %v3273
    %v3311 = vunpack.c.l.b16 %v3274
    %v3312 = vunpack.c.h.b16 %v3274
    %v3313 = vunpack.c.l.b16 %v3275
    %v3314 = vunpack.c.h.b16 %v3275
    %v3315 = vunpack.c.l.b16 %v3276
    %v3316 = vunpack.c.h.b16 %v3276
    %v3317 = vunpack.c.l.b16 %v3277
    %v3318 = vunpack.c.h.b16 %v3277
    %v3319 = vunpack.c.l.b16 %v3278
    %v3320 = vunpack.c.h.b16 %v3278
    %v3321 = vunpack.c.l.b16 %v3279
    %v3322 = vunpack.c.h.b16 %v3279
    %v3323 = vunpack.c.l.b16 %v3280
    %v3324 = vunpack.c.h.b16 %v3280
    %v3325 = vunpack.c.l.b16 %v3281
    %v3326 = vunpack.c.h.b16 %v3281
    %v3327 = vunpack.c.l.b16 %v3282
    %v3328 = vunpack.c.h.b16 %v3282
    %v3329 = vunpack.c.l.b16 %v3283
    %v3330 = vunpack.c.h.b16 %v3283
    %v3331 = vunpack.c.l.b16 %v3284
    %v3332 = vunpack.c.h.b16 %v3284
    %v3333 = vunpack.c.l.b16 %v3285
    %v3334 = vunpack.c.h.b16 %v3285
    %v3335 = vunpack.c.l.b16 %v3286
    %v3336 = vunpack.c.h.b16 %v3286
    %v3337 = vunpack.c.l.b16 %v3287
    %v3338 = vunpack.c.h.b16 %v3287
    %v3339 = vunpack.c.l.b16 %v3288
    %v3340 = vunpack.c.h.b16 %v3288
    %v3341 = vpack.c.b16 %v3313, %v3309
    %v3342 = vpack.c.b16 %v3314, %v3310
    %v3343 = vpack.c.b16 %v3315, %v3311
    %v3344 = vpack.c.b16 %v3316, %v3312
    %v3345 = vpack.c.b16 %v3321, %v3317
    %v3346 = vpack.c.b16 %v3322, %v3318
    %v3347 = vpack.c.b16 %v3323, %v3319
    %v3348 = vpack.c.b16 %v3324, %v3320
    %v3349 = vpack.c.b16 %v3329, %v3325
    %v3350 = vpack.c.b16 %v3330, %v3326
    %v3351 = vpack.c.b16 %v3331, %v3327
    %v3352 = vpack.c.b16 %v3332, %v3328
    %v3353 = vpack.c.b16 %v3337, %v3333
    %v3354 = vpack.c.b16 %v3338, %v3334
    %v3355 = vpack.c.b16 %v3339, %v3335
    %v3356 = vpack.c.b16 %v3340, %v3336
    %v3374 = vsel %vm159, %v3292, 0
    %3376 = vmatprep.subr.bf16.mxu0 %v3342
    %3377 = vmatpush1.bf16.msra.mxu0 %v3341
    %3378 = vmatprep.subr.bf16.mxu0 %v3346
    %3379 = vmatpush1.bf16.msra.mxu0 %v3345
    %3380 = vmatprep.subr.bf16.mxu0 %v3350
    %3381 = vmatpush1.bf16.msra.mxu0 %v3349
    %3382 = vmatprep.subr.bf16.mxu0 %v3354
    %3383 = vmatpush1.bf16.msra.mxu0 %v3353
    %3384 = vmatprep.subr.bf16.mxu0 0
    %3385 = vmatpush1.bf16.msra.mxu0 0
    %3386 = vmatprep.subr.bf16.mxu0 0
    %3387 = vmatpush1.bf16.msra.mxu0 0
    %3388 = vmatprep.subr.bf16.mxu0 0
    %3389 = vmatpush1.bf16.msra.mxu0 0
    %3390 = vmatprep.subr.bf16.mxu0 0
    %3391 = vmatpush1.bf16.msra.mxu0 0
    %3392 = vmatprep.subr.bf16.mxu0 0
    %3393 = vmatpush1.bf16.msra.mxu0 0
    %3394 = vmatprep.subr.bf16.mxu0 0
    %3395 = vmatpush1.bf16.msra.mxu0 0
    %3396 = vmatprep.subr.bf16.mxu0 0
    %3397 = vmatpush1.bf16.msra.mxu0 0
    %3398 = vmatprep.subr.bf16.mxu0 0
    %3399 = vmatpush1.bf16.msra.mxu0 0
    %3400 = vmatprep.subr.bf16.mxu0 0
    %3401 = vmatpush1.bf16.msra.mxu0 0
    %3402 = vmatprep.subr.bf16.mxu0 0
    %3403 = vmatpush1.bf16.msra.mxu0 0
    %3404 = vmatprep.subr.bf16.mxu0 0
    %3405 = vmatpush1.bf16.msra.mxu0 0
    %3406 = vmatprep.subr.bf16.mxu0 0
    %3407 = vmatpush1.bf16.msra.mxu0 0
    %3408 = vmatprep.mubr.bf16.mxu0 0
    %3409 = vmatmul.mubr.bf16.gmra.mrb[0].mxu0 %v3374
    %v3410 = vpop.f32.mrb[0].mxu0
    %v3411 = vadd.f32 0.0, %v3410
    %v3412 = vpop.f32.mrb[0].mxu0
    %v3413 = vadd.f32 0.0, %v3412
    %v3414 = vpop.f32.mrb[0].mxu0
    %v3415 = vadd.f32 0.0, %v3414
    %v3416 = vpop.f32.mrb[0].mxu0
    %v3417 = vadd.f32 0.0, %v3416
    %3418 = vdwg.mxu0
    %3419 = vmatprep.subr.bf16.mxu0 %v3344
    %3420 = vmatpush1.bf16.msra.mxu0 %v3343
    %3421 = vmatprep.subr.bf16.mxu0 %v3348
    %3422 = vmatpush1.bf16.msra.mxu0 %v3347
    %3423 = vmatprep.subr.bf16.mxu0 %v3352
    %3424 = vmatpush1.bf16.msra.mxu0 %v3351
    %3425 = vmatprep.subr.bf16.mxu0 %v3356
    %3426 = vmatpush1.bf16.msra.mxu0 %v3355
    %3427 = vmatprep.subr.bf16.mxu0 0
    %3428 = vmatpush1.bf16.msra.mxu0 0
    %3429 = vmatprep.subr.bf16.mxu0 0
    %3430 = vmatpush1.bf16.msra.mxu0 0
    %3431 = vmatprep.subr.bf16.mxu0 0
    %3432 = vmatpush1.bf16.msra.mxu0 0
    %3433 = vmatprep.subr.bf16.mxu0 0
    %3434 = vmatpush1.bf16.msra.mxu0 0
    %3435 = vmatprep.subr.bf16.mxu0 0
    %3436 = vmatpush1.bf16.msra.mxu0 0
    %3437 = vmatprep.subr.bf16.mxu0 0
    %3438 = vmatpush1.bf16.msra.mxu0 0
    %3439 = vmatprep.subr.bf16.mxu0 0
    %3440 = vmatpush1.bf16.msra.mxu0 0
    %3441 = vmatprep.subr.bf16.mxu0 0
    %3442 = vmatpush1.bf16.msra.mxu0 0
    %3443 = vmatprep.subr.bf16.mxu0 0
    %3444 = vmatpush1.bf16.msra.mxu0 0
    %3445 = vmatprep.subr.bf16.mxu0 0
    %3446 = vmatpush1.bf16.msra.mxu0 0
    %3447 = vmatprep.subr.bf16.mxu0 0
    %3448 = vmatpush1.bf16.msra.mxu0 0
    %3449 = vmatprep.subr.bf16.mxu0 0
    %3450 = vmatpush1.bf16.msra.mxu0 0
    %3451 = vmatprep.mubr.bf16.mxu0 0
    %3452 = vmatmul.mubr.bf16.gmra.mrb[0].mxu0 %v3374
    %v3453 = vpop.f32.mrb[0].mxu0
    %v3454 = vadd.f32 0.0, %v3453
    %v3455 = vpop.f32.mrb[0].mxu0
    %v3456 = vadd.f32 0.0, %v3455
    %v3457 = vpop.f32.mrb[0].mxu0
    %v3458 = vadd.f32 0.0, %v3457
    %v3459 = vpop.f32.mrb[0].mxu0
    %v3460 = vadd.f32 0.0, %v3459
    %3461 = vdwg.mxu0
    %v3462 = vadd.f32 %v3265, %v3411
    %v3463 = vadd.f32 %v3266, %v3413
    %v3464 = vadd.f32 %v3267, %v3454
    %v3465 = vadd.f32 %v3268, %v3456
    %v3466 = vadd.f32 %v3269, %v3415
    %v3467 = vadd.f32 %v3270, %v3417
    %v3468 = vadd.f32 %v3271, %v3458
    %v3469 = vadd.f32 %v3272, %v3460
    %v3470 = vld [vmem:[%s1412] sm:$0xff]
    %v3471 = vld [vmem:[%s1412 + $0x8] sm:$0xff]
    %v3472 = vld [vmem:[%s1412 + $0x10] sm:$0xff]
    %v3473 = vld [vmem:[%s1412 + $0x18] sm:$0xff]
    %v3474 = vld [vmem:[%s1412 + $0x20] sm:$0xff]
    %v3475 = vld [vmem:[%s1412 + $0x28] sm:$0xff]
    %v3476 = vld [vmem:[%s1412 + $0x30] sm:$0xff]
    %v3477 = vld [vmem:[%s1412 + $0x38] sm:$0xff]
    %v3478 = vld [vmem:[%s1412 + $0x40] sm:$0xff]
    %v3479 = vld [vmem:[%s1412 + $0x48] sm:$0xff]
    %v3480 = vld [vmem:[%s1412 + $0x50] sm:$0xff]
    %v3481 = vld [vmem:[%s1412 + $0x58] sm:$0xff]
    %v3482 = vld [vmem:[%s1412 + $0x60] sm:$0xff]
    %v3483 = vld [vmem:[%s1412 + $0x68] sm:$0xff]
    %v3484 = vld [vmem:[%s1412 + $0x70] sm:$0xff]
    %v3485 = vld [vmem:[%s1412 + $0x78] sm:$0xff]
    %3486 = vrot.lane.b32.xlu0 %v3292, 124
    %v3487 = vpop.permute.xlu0 %3486
    %v3504 = vunpack.c.l.b16 %v3470
    %v3505 = vunpack.c.h.b16 %v3470
    %v3506 = vunpack.c.l.b16 %v3471
    %v3507 = vunpack.c.h.b16 %v3471
    %v3508 = vunpack.c.l.b16 %v3472
    %v3509 = vunpack.c.h.b16 %v3472
    %v3510 = vunpack.c.l.b16 %v3473
    %v3511 = vunpack.c.h.b16 %v3473
    %v3512 = vunpack.c.l.b16 %v3474
    %v3513 = vunpack.c.h.b16 %v3474
    %v3514 = vunpack.c.l.b16 %v3475
    %v3515 = vunpack.c.h.b16 %v3475
    %v3516 = vunpack.c.l.b16 %v3476
    %v3517 = vunpack.c.h.b16 %v3476
    %v3518 = vunpack.c.l.b16 %v3477
    %v3519 = vunpack.c.h.b16 %v3477
    %v3520 = vunpack.c.l.b16 %v3478
    %v3521 = vunpack.c.h.b16 %v3478
    %v3522 = vunpack.c.l.b16 %v3479
    %v3523 = vunpack.c.h.b16 %v3479
    %v3524 = vunpack.c.l.b16 %v3480
    %v3525 = vunpack.c.h.b16 %v3480
    %v3526 = vunpack.c.l.b16 %v3481
    %v3527 = vunpack.c.h.b16 %v3481
    %v3528 = vunpack.c.l.b16 %v3482
    %v3529 = vunpack.c.h.b16 %v3482
    %v3530 = vunpack.c.l.b16 %v3483
    %v3531 = vunpack.c.h.b16 %v3483
    %v3532 = vunpack.c.l.b16 %v3484
    %v3533 = vunpack.c.h.b16 %v3484
    %v3534 = vunpack.c.l.b16 %v3485
    %v3535 = vunpack.c.h.b16 %v3485
    %v3536 = vpack.c.b16 %v3508, %v3504
    %v3537 = vpack.c.b16 %v3509, %v3505
    %v3538 = vpack.c.b16 %v3510, %v3506
    %v3539 = vpack.c.b16 %v3511, %v3507
    %v3540 = vpack.c.b16 %v3516, %v3512
    %v3541 = vpack.c.b16 %v3517, %v3513
    %v3542 = vpack.c.b16 %v3518, %v3514
    %v3543 = vpack.c.b16 %v3519, %v3515
    %v3544 = vpack.c.b16 %v3524, %v3520
    %v3545 = vpack.c.b16 %v3525, %v3521
    %v3546 = vpack.c.b16 %v3526, %v3522
    %v3547 = vpack.c.b16 %v3527, %v3523
    %v3548 = vpack.c.b16 %v3532, %v3528
    %v3549 = vpack.c.b16 %v3533, %v3529
    %v3550 = vpack.c.b16 %v3534, %v3530
    %v3551 = vpack.c.b16 %v3535, %v3531
    %v3569 = vsel %vm159, %v3487, 0
    %3571 = vmatprep.subr.bf16.mxu0 %v3537
    %3572 = vmatpush1.bf16.msra.mxu0 %v3536
    %3573 = vmatprep.subr.bf16.mxu0 %v3541
    %3574 = vmatpush1.bf16.msra.mxu0 %v3540
    %3575 = vmatprep.subr.bf16.mxu0 %v3545
    %3576 = vmatpush1.bf16.msra.mxu0 %v3544
    %3577 = vmatprep.subr.bf16.mxu0 %v3549
    %3578 = vmatpush1.bf16.msra.mxu0 %v3548
    %3579 = vmatprep.subr.bf16.mxu0 0
    %3580 = vmatpush1.bf16.msra.mxu0 0
    %3581 = vmatprep.subr.bf16.mxu0 0
    %3582 = vmatpush1.bf16.msra.mxu0 0
    %3583 = vmatprep.subr.bf16.mxu0 0
    %3584 = vmatpush1.bf16.msra.mxu0 0
    %3585 = vmatprep.subr.bf16.mxu0 0
    %3586 = vmatpush1.bf16.msra.mxu0 0
    %3587 = vmatprep.subr.bf16.mxu0 0
    %3588 = vmatpush1.bf16.msra.mxu0 0
    %3589 = vmatprep.subr.bf16.mxu0 0
    %3590 = vmatpush1.bf16.msra.mxu0 0
    %3591 = vmatprep.subr.bf16.mxu0 0
    %3592 = vmatpush1.bf16.msra.mxu0 0
    %3593 = vmatprep.subr.bf16.mxu0 0
    %3594 = vmatpush1.bf16.msra.mxu0 0
    %3595 = vmatprep.subr.bf16.mxu0 0
    %3596 = vmatpush1.bf16.msra.mxu0 0
    %3597 = vmatprep.subr.bf16.mxu0 0
    %3598 = vmatpush1.bf16.msra.mxu0 0
    %3599 = vmatprep.subr.bf16.mxu0 0
    %3600 = vmatpush1.bf16.msra.mxu0 0
    %3601 = vmatprep.subr.bf16.mxu0 0
    %3602 = vmatpush1.bf16.msra.mxu0 0
    %3603 = vmatprep.mubr.bf16.mxu0 0
    %3604 = vmatmul.mubr.bf16.gmra.mrb[0].mxu0 %v3569
    %v3605 = vpop.f32.mrb[0].mxu0
    %v3606 = vadd.f32 0.0, %v3605
    %v3607 = vpop.f32.mrb[0].mxu0
    %v3608 = vadd.f32 0.0, %v3607
    %v3609 = vpop.f32.mrb[0].mxu0
    %v3610 = vadd.f32 0.0, %v3609
    %v3611 = vpop.f32.mrb[0].mxu0
    %v3612 = vadd.f32 0.0, %v3611
    %3613 = vdwg.mxu0
    %3614 = vmatprep.subr.bf16.mxu0 %v3539
    %3615 = vmatpush1.bf16.msra.mxu0 %v3538
    %3616 = vmatprep.subr.bf16.mxu0 %v3543
    %3617 = vmatpush1.bf16.msra.mxu0 %v3542
    %3618 = vmatprep.subr.bf16.mxu0 %v3547
    %3619 = vmatpush1.bf16.msra.mxu0 %v3546
    %3620 = vmatprep.subr.bf16.mxu0 %v3551
    %3621 = vmatpush1.bf16.msra.mxu0 %v3550
    %3622 = vmatprep.subr.bf16.mxu0 0
    %3623 = vmatpush1.bf16.msra.mxu0 0
    %3624 = vmatprep.subr.bf16.mxu0 0
    %3625 = vmatpush1.bf16.msra.mxu0 0
    %3626 = vmatprep.subr.bf16.mxu0 0
    %3627 = vmatpush1.bf16.msra.mxu0 0
    %3628 = vmatprep.subr.bf16.mxu0 0
    %3629 = vmatpush1.bf16.msra.mxu0 0
    %3630 = vmatprep.subr.bf16.mxu0 0
    %3631 = vmatpush1.bf16.msra.mxu0 0
    %3632 = vmatprep.subr.bf16.mxu0 0
    %3633 = vmatpush1.bf16.msra.mxu0 0
    %3634 = vmatprep.subr.bf16.mxu0 0
    %3635 = vmatpush1.bf16.msra.mxu0 0
    %3636 = vmatprep.subr.bf16.mxu0 0
    %3637 = vmatpush1.bf16.msra.mxu0 0
    %3638 = vmatprep.subr.bf16.mxu0 0
    %3639 = vmatpush1.bf16.msra.mxu0 0
    %3640 = vmatprep.subr.bf16.mxu0 0
    %3641 = vmatpush1.bf16.msra.mxu0 0
    %3642 = vmatprep.subr.bf16.mxu0 0
    %3643 = vmatpush1.bf16.msra.mxu0 0
    %3644 = vmatprep.subr.bf16.mxu0 0
    %3645 = vmatpush1.bf16.msra.mxu0 0
    %3646 = vmatprep.mubr.bf16.mxu0 0
    %3647 = vmatmul.mubr.bf16.gmra.mrb[0].mxu0 %v3569
    %v3648 = vpop.f32.mrb[0].mxu0
    %v3649 = vadd.f32 0.0, %v3648
    %v3650 = vpop.f32.mrb[0].mxu0
    %v3651 = vadd.f32 0.0, %v3650
    %v3652 = vpop.f32.mrb[0].mxu0
    %v3653 = vadd.f32 0.0, %v3652
    %v3654 = vpop.f32.mrb[0].mxu0
    %v3655 = vadd.f32 0.0, %v3654
    %3656 = vdwg.mxu0
    %v3657 = vadd.f32 %v3462, %v3606
    %v3658 = vadd.f32 %v3463, %v3608
    %v3659 = vadd.f32 %v3464, %v3649
    %v3660 = vadd.f32 %v3465, %v3651
    %v3661 = vadd.f32 %v3466, %v3610
    %v3662 = vadd.f32 %v3467, %v3612
    %v3663 = vadd.f32 %v3468, %v3653
    %v3664 = vadd.f32 %v3469, %v3655
    %v3665 = vld [vmem:[%s1608] sm:$0xff]
    %v3666 = vld [vmem:[%s1608 + $0x8] sm:$0xff]
    %v3667 = vld [vmem:[%s1608 + $0x10] sm:$0xff]
    %v3668 = vld [vmem:[%s1608 + $0x18] sm:$0xff]
    %v3669 = vld [vmem:[%s1608 + $0x20] sm:$0xff]
    %v3670 = vld [vmem:[%s1608 + $0x28] sm:$0xff]
    %v3671 = vld [vmem:[%s1608 + $0x30] sm:$0xff]
    %v3672 = vld [vmem:[%s1608 + $0x38] sm:$0xff]
    %v3673 = vld [vmem:[%s1608 + $0x40] sm:$0xff]
    %v3674 = vld [vmem:[%s1608 + $0x48] sm:$0xff]
    %v3675 = vld [vmem:[%s1608 + $0x50] sm:$0xff]
    %v3676 = vld [vmem:[%s1608 + $0x58] sm:$0xff]
    %v3677 = vld [vmem:[%s1608 + $0x60] sm:$0xff]
    %v3678 = vld [vmem:[%s1608 + $0x68] sm:$0xff]
    %v3679 = vld [vmem:[%s1608 + $0x70] sm:$0xff]
    %v3680 = vld [vmem:[%s1608 + $0x78] sm:$0xff]
    %3681 = vrot.lane.b32.xlu0 %v3292, 120
    %v3682 = vpop.permute.xlu0 %3681
    %v3699 = vunpack.c.l.b16 %v3665
    %v3700 = vunpack.c.h.b16 %v3665
    %v3701 = vunpack.c.l.b16 %v3666
    %v3702 = vunpack.c.h.b16 %v3666
    %v3703 = vunpack.c.l.b16 %v3667
    %v3704 = vunpack.c.h.b16 %v3667
    %v3705 = vunpack.c.l.b16 %v3668
    %v3706 = vunpack.c.h.b16 %v3668
    %v3707 = vunpack.c.l.b16 %v3669
    %v3708 = vunpack.c.h.b16 %v3669
    %v3709 = vunpack.c.l.b16 %v3670
    %v3710 = vunpack.c.h.b16 %v3670
    %v3711 = vunpack.c.l.b16 %v3671
    %v3712 = vunpack.c.h.b16 %v3671
    %v3713 = vunpack.c.l.b16 %v3672
    %v3714 = vunpack.c.h.b16 %v3672
    %v3715 = vunpack.c.l.b16 %v3673
    %v3716 = vunpack.c.h.b16 %v3673
    %v3717 = vunpack.c.l.b16 %v3674
    %v3718 = vunpack.c.h.b16 %v3674
    %v3719 = vunpack.c.l.b16 %v3675
    %v3720 = vunpack.c.h.b16 %v3675
    %v3721 = vunpack.c.l.b16 %v3676
    %v3722 = vunpack.c.h.b16 %v3676
    %v3723 = vunpack.c.l.b16 %v3677
    %v3724 = vunpack.c.h.b16 %v3677
    %v3725 = vunpack.c.l.b16 %v3678
    %v3726 = vunpack.c.h.b16 %v3678
    %v3727 = vunpack.c.l.b16 %v3679
    %v3728 = vunpack.c.h.b16 %v3679
    %v3729 = vunpack.c.l.b16 %v3680
    %v3730 = vunpack.c.h.b16 %v3680
    %v3731 = vpack.c.b16 %v3703, %v3699
    %v3732 = vpack.c.b16 %v3704, %v3700
    %v3733 = vpack.c.b16 %v3705, %v3701
    %v3734 = vpack.c.b16 %v3706, %v3702
    %v3735 = vpack.c.b16 %v3711, %v3707
    %v3736 = vpack.c.b16 %v3712, %v3708
    %v3737 = vpack.c.b16 %v3713, %v3709
    %v3738 = vpack.c.b16 %v3714, %v3710
    %v3739 = vpack.c.b16 %v3719, %v3715
    %v3740 = vpack.c.b16 %v3720, %v3716
    %v3741 = vpack.c.b16 %v3721, %v3717
    %v3742 = vpack.c.b16 %v3722, %v3718
    %v3743 = vpack.c.b16 %v3727, %v3723
    %v3744 = vpack.c.b16 %v3728, %v3724
    %v3745 = vpack.c.b16 %v3729, %v3725
    %v3746 = vpack.c.b16 %v3730, %v3726
    %v3764 = vsel %vm159, %v3682, 0
    %3766 = vmatprep.subr.bf16.mxu0 %v3732
    %3767 = vmatpush1.bf16.msra.mxu0 %v3731
    %3768 = vmatprep.subr.bf16.mxu0 %v3736
    %3769 = vmatpush1.bf16.msra.mxu0 %v3735
    %3770 = vmatprep.subr.bf16.mxu0 %v3740
    %3771 = vmatpush1.bf16.msra.mxu0 %v3739
    %3772 = vmatprep.subr.bf16.mxu0 %v3744
    %3773 = vmatpush1.bf16.msra.mxu0 %v3743
    %3774 = vmatprep.subr.bf16.mxu0 0
    %3775 = vmatpush1.bf16.msra.mxu0 0
    %3776 = vmatprep.subr.bf16.mxu0 0
    %3777 = vmatpush1.bf16.msra.mxu0 0
    %3778 = vmatprep.subr.bf16.mxu0 0
    %3779 = vmatpush1.bf16.msra.mxu0 0
    %3780 = vmatprep.subr.bf16.mxu0 0
    %3781 = vmatpush1.bf16.msra.mxu0 0
    %3782 = vmatprep.subr.bf16.mxu0 0
    %3783 = vmatpush1.bf16.msra.mxu0 0
    %3784 = vmatprep.subr.bf16.mxu0 0
    %3785 = vmatpush1.bf16.msra.mxu0 0
    %3786 = vmatprep.subr.bf16.mxu0 0
    %3787 = vmatpush1.bf16.msra.mxu0 0
    %3788 = vmatprep.subr.bf16.mxu0 0
    %3789 = vmatpush1.bf16.msra.mxu0 0
    %3790 = vmatprep.subr.bf16.mxu0 0
    %3791 = vmatpush1.bf16.msra.mxu0 0
    %3792 = vmatprep.subr.bf16.mxu0 0
    %3793 = vmatpush1.bf16.msra.mxu0 0
    %3794 = vmatprep.subr.bf16.mxu0 0
    %3795 = vmatpush1.bf16.msra.mxu0 0
    %3796 = vmatprep.subr.bf16.mxu0 0
    %3797 = vmatpush1.bf16.msra.mxu0 0
    %3798 = vmatprep.mubr.bf16.mxu0 0
    %3799 = vmatmul.mubr.bf16.gmra.mrb[0].mxu0 %v3764
    %v3800 = vpop.f32.mrb[0].mxu0
    %v3801 = vadd.f32 0.0, %v3800
    %v3802 = vpop.f32.mrb[0].mxu0
    %v3803 = vadd.f32 0.0, %v3802
    %v3804 = vpop.f32.mrb[0].mxu0
    %v3805 = vadd.f32 0.0, %v3804
    %v3806 = vpop.f32.mrb[0].mxu0
    %v3807 = vadd.f32 0.0, %v3806
    %3808 = vdwg.mxu0
    %3809 = vmatprep.subr.bf16.mxu0 %v3734
    %3810 = vmatpush1.bf16.msra.mxu0 %v3733
    %3811 = vmatprep.subr.bf16.mxu0 %v3738
    %3812 = vmatpush1.bf16.msra.mxu0 %v3737
    %3813 = vmatprep.subr.bf16.mxu0 %v3742
    %3814 = vmatpush1.bf16.msra.mxu0 %v3741
    %3815 = vmatprep.subr.bf16.mxu0 %v3746
    %3816 = vmatpush1.bf16.msra.mxu0 %v3745
    %3817 = vmatprep.subr.bf16.mxu0 0
    %3818 = vmatpush1.bf16.msra.mxu0 0
    %3819 = vmatprep.subr.bf16.mxu0 0
    %3820 = vmatpush1.bf16.msra.mxu0 0
    %3821 = vmatprep.subr.bf16.mxu0 0
    %3822 = vmatpush1.bf16.msra.mxu0 0
    %3823 = vmatprep.subr.bf16.mxu0 0
    %3824 = vmatpush1.bf16.msra.mxu0 0
    %3825 = vmatprep.subr.bf16.mxu0 0
    %3826 = vmatpush1.bf16.msra.mxu0 0
    %3827 = vmatprep.subr.bf16.mxu0 0
    %3828 = vmatpush1.bf16.msra.mxu0 0
    %3829 = vmatprep.subr.bf16.mxu0 0
    %3830 = vmatpush1.bf16.msra.mxu0 0
    %3831 = vmatprep.subr.bf16.mxu0 0
    %3832 = vmatpush1.bf16.msra.mxu0 0
    %3833 = vmatprep.subr.bf16.mxu0 0
    %3834 = vmatpush1.bf16.msra.mxu0 0
    %3835 = vmatprep.subr.bf16.mxu0 0
    %3836 = vmatpush1.bf16.msra.mxu0 0
    %3837 = vmatprep.subr.bf16.mxu0 0
    %3838 = vmatpush1.bf16.msra.mxu0 0
    %3839 = vmatprep.subr.bf16.mxu0 0
    %3840 = vmatpush1.bf16.msra.mxu0 0
    %3841 = vmatprep.mubr.bf16.mxu0 0
    %3842 = vmatmul.mubr.bf16.gmra.mrb[0].mxu0 %v3764
    %v3843 = vpop.f32.mrb[0].mxu0
    %v3844 = vadd.f32 0.0, %v3843
    %v3845 = vpop.f32.mrb[0].mxu0
    %v3846 = vadd.f32 0.0, %v3845
    %v3847 = vpop.f32.mrb[0].mxu0
    %v3848 = vadd.f32 0.0, %v3847
    %v3849 = vpop.f32.mrb[0].mxu0
    %v3850 = vadd.f32 0.0, %v3849
    %3851 = vdwg.mxu0
    %v3852 = vadd.f32 %v3657, %v3801
    %v3853 = vadd.f32 %v3658, %v3803
    %v3854 = vadd.f32 %v3659, %v3844
    %v3855 = vadd.f32 %v3660, %v3846
    %v3856 = vadd.f32 %v3661, %v3805
    %v3857 = vadd.f32 %v3662, %v3807
    %v3858 = vadd.f32 %v3663, %v3848
    %v3859 = vadd.f32 %v3664, %v3850
    %v3860 = vld [vmem:[%s2] sm:$0xf]
    %v3862 = vlaneseq
    %v3863 = vshrl.u32 %v3862, 7
    %v3864 = vsub.s32 0, %v3863
    %v3865 = vrot.slane %v3860, %v3864
    %v3866 = vlaneseq
    %v3867 = vshrl.u32 %v3866, 7
    %v3868 = vsub.s32 1, %v3867
    %v3869 = vrot.slane %v3860, %v3868
    %v3870 = vlaneseq
    %v3871 = vshrl.u32 %v3870, 7
    %v3872 = vsub.s32 2, %v3871
    %v3873 = vrot.slane %v3860, %v3872
    %v3874 = vlaneseq
    %v3875 = vshrl.u32 %v3874, 7
    %v3876 = vsub.s32 3, %v3875
    %v3877 = vrot.slane %v3860, %v3876
    %v3882 = vadd.f32 %v3852, %v3865
    %v3883 = vadd.f32 %v3853, %v3869
    %v3884 = vadd.f32 %v3854, %v3873
    %v3885 = vadd.f32 %v3855, %v3877
    %v3886 = vadd.f32 %v3856, %v3865
    %v3887 = vadd.f32 %v3857, %v3869
    %v3888 = vadd.f32 %v3858, %v3873
    %v3889 = vadd.f32 %v3859, %v3877
    %v3890 = vmax.f32 %v3882, 0.0
    %v3891 = vmax.f32 %v3883, 0.0
    %v3892 = vmax.f32 %v3884, 0.0
    %v3893 = vmax.f32 %v3885, 0.0
    %v3894 = vmax.f32 %v3886, 0.0
    %v3895 = vmax.f32 %v3887, 0.0
    %v3896 = vmax.f32 %v3888, 0.0
    %v3897 = vmax.f32 %v3889, 0.0
    %v3898 = vpack.c.bf16 %v3894, %v3890
    %v3899 = vpack.c.bf16 %v3895, %v3891
    %v3900 = vpack.c.bf16 %v3896, %v3892
    %v3901 = vpack.c.bf16 %v3897, %v3893
    %v3906 = vunpack.c.l.b16 %v3898
    %v3907 = vunpack.c.l.b16 %v3899
    %v3908 = vunpack.c.l.b16 %v3900
    %v3909 = vunpack.c.l.b16 %v3901
    %v3910 = vunpack.c.h.b16 %v3898
    %v3911 = vunpack.c.h.b16 %v3899
    %v3912 = vunpack.c.h.b16 %v3900
    %v3913 = vunpack.c.h.b16 %v3901
    %v3914 = vpack.c.b16 %v3907, %v3906
    %v3915 = vpack.c.b16 %v3909, %v3908
    %v3916 = vpack.c.b16 %v3911, %v3910
    %v3917 = vpack.c.b16 %v3913, %v3912
    %s3922 = scalar_lea.vmem [#allocation5], 32
    %3923 = vst [vmem:[%s3922] sm:$0xff] %v3914
    %3924 = vst [vmem:[%s3922 + $0x8] sm:$0xff] %v3915
    %3925 = vst [vmem:[%s3922 + $0x10] sm:$0xff] %v3916
    %3926 = vst [vmem:[%s3922 + $0x18] sm:$0xff] %v3917
    %v3927 = vadd.f32 %v3890, %v3894
    %v3928 = vrot.slane %v3927, 4
    %v3929 = vadd.f32 %v3927, %v3928
    %v3930 = vrot.slane %v3929, 2
    %v3931 = vadd.f32 %v3929, %v3930
    %v3932 = vrot.slane %v3931, 1
    %v3933 = vadd.f32 %v3931, %v3932
    %v3934 = vadd.f32 %v3891, %v3895
    %v3935 = vrot.slane %v3934, 4
    %v3936 = vadd.f32 %v3934, %v3935
    %v3937 = vrot.slane %v3936, 2
    %v3938 = vadd.f32 %v3936, %v3937
    %v3939 = vrot.slane %v3938, 1
    %v3940 = vadd.f32 %v3938, %v3939
    %v3941 = vadd.f32 %v3892, %v3896
    %v3942 = vrot.slane %v3941, 4
    %v3943 = vadd.f32 %v3941, %v3942
    %v3944 = vrot.slane %v3943, 2
    %v3945 = vadd.f32 %v3943, %v3944
    %v3946 = vrot.slane %v3945, 1
    %v3947 = vadd.f32 %v3945, %v3946
    %v3948 = vadd.f32 %v3893, %v3897
    %v3949 = vrot.slane %v3948, 4
    %v3950 = vadd.f32 %v3948, %v3949
    %v3951 = vrot.slane %v3950, 2
    %v3952 = vadd.f32 %v3950, %v3951
    %v3953 = vrot.slane %v3952, 1
    %v3954 = vadd.f32 %v3952, %v3953
    %v3955 = vld [vmem:[%s3] sm:$0xff]
    %v3956 = vld [vmem:[%s3 + $0x8] sm:$0xff]
    %v3957 = vld [vmem:[%s3 + $0x10] sm:$0xff]
    %v3958 = vld [vmem:[%s3 + $0x18] sm:$0xff]
    %v3959 = vld [vmem:[%s3 + $0x20] sm:$0xff]
    %v3960 = vld [vmem:[%s3 + $0x28] sm:$0xff]
    %v3961 = vld [vmem:[%s3 + $0x30] sm:$0xff]
    %v3962 = vld [vmem:[%s3 + $0x38] sm:$0xff]
    %v3963 = vld [vmem:[%s3 + $0x40] sm:$0xff]
    %v3964 = vld [vmem:[%s3 + $0x48] sm:$0xff]
    %v3965 = vld [vmem:[%s3 + $0x50] sm:$0xff]
    %v3966 = vld [vmem:[%s3 + $0x58] sm:$0xff]
    %v3967 = vld [vmem:[%s3 + $0x60] sm:$0xff]
    %v3968 = vld [vmem:[%s3 + $0x68] sm:$0xff]
    %v3969 = vld [vmem:[%s3 + $0x70] sm:$0xff]
    %v3970 = vld [vmem:[%s3 + $0x78] sm:$0xff]
    %v3971 = vld [vmem:[%s3 + $0x80] sm:$0xff]
    %v3972 = vld [vmem:[%s3 + $0x88] sm:$0xff]
    %v3973 = vld [vmem:[%s3 + $0x90] sm:$0xff]
    %v3974 = vld [vmem:[%s3 + $0x98] sm:$0xff]
    %v3975 = vld [vmem:[%s3 + $0xa0] sm:$0xff]
    %v3976 = vld [vmem:[%s3 + $0xa8] sm:$0xff]
    %v3977 = vld [vmem:[%s3 + $0xb0] sm:$0xff]
    %v3978 = vld [vmem:[%s3 + $0xb8] sm:$0xff]
    %v3979 = vld [vmem:[%s3 + $0xc0] sm:$0xff]
    %v3980 = vld [vmem:[%s3 + $0xc8] sm:$0xff]
    %v3981 = vld [vmem:[%s3 + $0xd0] sm:$0xff]
    %v3982 = vld [vmem:[%s3 + $0xd8] sm:$0xff]
    %v3983 = vld [vmem:[%s3 + $0xe0] sm:$0xff]
    %v3984 = vld [vmem:[%s3 + $0xe8] sm:$0xff]
    %v3985 = vld [vmem:[%s3 + $0xf0] sm:$0xff]
    %v3986 = vld [vmem:[%s3 + $0xf8] sm:$0xff]
    %v3987 = vld [vmem:[%s3 + $0x100] sm:$0xff]
    %v3988 = vld [vmem:[%s3 + $0x108] sm:$0xff]
    %v3989 = vld [vmem:[%s3 + $0x110] sm:$0xff]
    %v3990 = vld [vmem:[%s3 + $0x118] sm:$0xff]
    %v3991 = vld [vmem:[%s3 + $0x120] sm:$0xff]
    %v3992 = vld [vmem:[%s3 + $0x128] sm:$0xff]
    %v3993 = vld [vmem:[%s3 + $0x130] sm:$0xff]
    %v3994 = vld [vmem:[%s3 + $0x138] sm:$0xff]
    %v3995 = vld [vmem:[%s3 + $0x140] sm:$0xff]
    %v3996 = vld [vmem:[%s3 + $0x148] sm:$0xff]
    %v3997 = vld [vmem:[%s3 + $0x150] sm:$0xff]
    %v3998 = vld [vmem:[%s3 + $0x158] sm:$0xff]
    %v3999 = vld [vmem:[%s3 + $0x160] sm:$0xff]
    %v4000 = vld [vmem:[%s3 + $0x168] sm:$0xff]
    %v4001 = vld [vmem:[%s3 + $0x170] sm:$0xff]
    %v4002 = vld [vmem:[%s3 + $0x178] sm:$0xff]
    %v4003 = vld [vmem:[%s3 + $0x180] sm:$0xff]
    %v4004 = vld [vmem:[%s3 + $0x188] sm:$0xff]
    %v4005 = vld [vmem:[%s3 + $0x190] sm:$0xff]
    %v4006 = vld [vmem:[%s3 + $0x198] sm:$0xff]
    %v4007 = vld [vmem:[%s3 + $0x1a0] sm:$0xff]
    %v4008 = vld [vmem:[%s3 + $0x1a8] sm:$0xff]
    %v4009 = vld [vmem:[%s3 + $0x1b0] sm:$0xff]
    %v4010 = vld [vmem:[%s3 + $0x1b8] sm:$0xff]
    %v4011 = vld [vmem:[%s3 + $0x1c0] sm:$0xff]
    %v4012 = vld [vmem:[%s3 + $0x1c8] sm:$0xff]
    %v4013 = vld [vmem:[%s3 + $0x1d0] sm:$0xff]
    %v4014 = vld [vmem:[%s3 + $0x1d8] sm:$0xff]
    %v4015 = vld [vmem:[%s3 + $0x1e0] sm:$0xff]
    %v4016 = vld [vmem:[%s3 + $0x1e8] sm:$0xff]
    %v4017 = vld [vmem:[%s3 + $0x1f0] sm:$0xff]
    %v4018 = vld [vmem:[%s3 + $0x1f8] sm:$0xff]
    %v4019 = vld [vmem:[%s4] sm:$0x1]
    %4020 = vmatprep.subr.mxu0 0.0
    %4021 = vmatpush1.msra.mxu0 %v3955
    %4022 = vmatprep.subr.mxu0 0.0
    %4023 = vmatpush1.msra.mxu0 %v3956
    %4024 = vmatprep.subr.mxu0 0.0
    %4025 = vmatpush1.msra.mxu0 %v3957
    %4026 = vmatprep.subr.mxu0 0.0
    %4027 = vmatpush1.msra.mxu0 %v3958
    %4028 = vmatprep.subr.mxu0 0.0
    %4029 = vmatpush1.msra.mxu0 %v3959
    %4030 = vmatprep.subr.mxu0 0.0
    %4031 = vmatpush1.msra.mxu0 %v3960
    %4032 = vmatprep.subr.mxu0 0.0
    %4033 = vmatpush1.msra.mxu0 %v3961
    %4034 = vmatprep.subr.mxu0 0.0
    %4035 = vmatpush1.msra.mxu0 %v3962
    %4036 = vmatprep.subr.mxu0 0.0
    %4037 = vmatpush1.msra.mxu0 %v3963
    %4038 = vmatprep.subr.mxu0 0.0
    %4039 = vmatpush1.msra.mxu0 %v3964
    %4040 = vmatprep.subr.mxu0 0.0
    %4041 = vmatpush1.msra.mxu0 %v3965
    %4042 = vmatprep.subr.mxu0 0.0
    %4043 = vmatpush1.msra.mxu0 %v3966
    %4044 = vmatprep.subr.mxu0 0.0
    %4045 = vmatpush1.msra.mxu0 %v3967
    %4046 = vmatprep.subr.mxu0 0.0
    %4047 = vmatpush1.msra.mxu0 %v3968
    %4048 = vmatprep.subr.mxu0 0.0
    %4049 = vmatpush1.msra.mxu0 %v3969
    %4050 = vmatprep.subr.mxu0 0.0
    %4051 = vmatpush1.msra.mxu0 %v3970
    %4052 = vmatprep.subr.mxu0 0.0
    %4053 = vmatpush1.msra.mxu0 %v3971
    %4054 = vmatprep.subr.mxu0 0.0
    %4055 = vmatpush1.msra.mxu0 %v3972
    %4056 = vmatprep.subr.mxu0 0.0
    %4057 = vmatpush1.msra.mxu0 %v3973
    %4058 = vmatprep.subr.mxu0 0.0
    %4059 = vmatpush1.msra.mxu0 %v3974
    %4060 = vmatprep.subr.mxu0 0.0
    %4061 = vmatpush1.msra.mxu0 %v3975
    %4062 = vmatprep.subr.mxu0 0.0
    %4063 = vmatpush1.msra.mxu0 %v3976
    %4064 = vmatprep.subr.mxu0 0.0
    %4065 = vmatpush1.msra.mxu0 %v3977
    %4066 = vmatprep.subr.mxu0 0.0
    %4067 = vmatpush1.msra.mxu0 %v3978
    %4068 = vmatprep.subr.mxu0 0.0
    %4069 = vmatpush1.msra.mxu0 %v3979
    %4070 = vmatprep.subr.mxu0 0.0
    %4071 = vmatpush1.msra.mxu0 %v3980
    %4072 = vmatprep.subr.mxu0 0.0
    %4073 = vmatpush1.msra.mxu0 %v3981
    %4074 = vmatprep.subr.mxu0 0.0
    %4075 = vmatpush1.msra.mxu0 %v3982
    %4076 = vmatprep.subr.mxu0 0.0
    %4077 = vmatpush1.msra.mxu0 %v3983
    %4078 = vmatprep.subr.mxu0 0.0
    %4079 = vmatpush1.msra.mxu0 %v3984
    %4080 = vmatprep.subr.mxu0 0.0
    %4081 = vmatpush1.msra.mxu0 %v3985
    %4082 = vmatprep.subr.mxu0 0.0
    %4083 = vmatpush1.msra.mxu0 %v3986
    %4084 = vmatprep.mubr.f32.mxu0 %v3940
    %4085 = vmatmul.mubr.f32.gmra.mrb[0].mxu0 %v3933
    %v4086 = vpop.f32.mrb[0].mxu0
    %v4087 = vadd.f32 %v4019, %v4086
    %v4088 = vpop.f32.mrb[0].mxu0
    %4089 = vdwg.mxu0
    %4090 = vmatprep.subr.mxu0 0.0
    %4091 = vmatpush1.msra.mxu0 %v3987
    %4092 = vmatprep.subr.mxu0 0.0
    %4093 = vmatpush1.msra.mxu0 %v3988
    %4094 = vmatprep.subr.mxu0 0.0
    %4095 = vmatpush1.msra.mxu0 %v3989
    %4096 = vmatprep.subr.mxu0 0.0
    %4097 = vmatpush1.msra.mxu0 %v3990
    %4098 = vmatprep.subr.mxu0 0.0
    %4099 = vmatpush1.msra.mxu0 %v3991
    %4100 = vmatprep.subr.mxu0 0.0
    %4101 = vmatpush1.msra.mxu0 %v3992
    %4102 = vmatprep.subr.mxu0 0.0
    %4103 = vmatpush1.msra.mxu0 %v3993
    %4104 = vmatprep.subr.mxu0 0.0
    %4105 = vmatpush1.msra.mxu0 %v3994
    %4106 = vmatprep.subr.mxu0 0.0
    %4107 = vmatpush1.msra.mxu0 %v3995
    %4108 = vmatprep.subr.mxu0 0.0
    %4109 = vmatpush1.msra.mxu0 %v3996
    %4110 = vmatprep.subr.mxu0 0.0
    %4111 = vmatpush1.msra.mxu0 %v3997
    %4112 = vmatprep.subr.mxu0 0.0
    %4113 = vmatpush1.msra.mxu0 %v3998
    %4114 = vmatprep.subr.mxu0 0.0
    %4115 = vmatpush1.msra.mxu0 %v3999
    %4116 = vmatprep.subr.mxu0 0.0
    %4117 = vmatpush1.msra.mxu0 %v4000
    %4118 = vmatprep.subr.mxu0 0.0
    %4119 = vmatpush1.msra.mxu0 %v4001
    %4120 = vmatprep.subr.mxu0 0.0
    %4121 = vmatpush1.msra.mxu0 %v4002
    %4122 = vmatprep.subr.mxu0 0.0
    %4123 = vmatpush1.msra.mxu0 %v4003
    %4124 = vmatprep.subr.mxu0 0.0
    %4125 = vmatpush1.msra.mxu0 %v4004
    %4126 = vmatprep.subr.mxu0 0.0
    %4127 = vmatpush1.msra.mxu0 %v4005
    %4128 = vmatprep.subr.mxu0 0.0
    %4129 = vmatpush1.msra.mxu0 %v4006
    %4130 = vmatprep.subr.mxu0 0.0
    %4131 = vmatpush1.msra.mxu0 %v4007
    %4132 = vmatprep.subr.mxu0 0.0
    %4133 = vmatpush1.msra.mxu0 %v4008
    %4134 = vmatprep.subr.mxu0 0.0
    %4135 = vmatpush1.msra.mxu0 %v4009
    %4136 = vmatprep.subr.mxu0 0.0
    %4137 = vmatpush1.msra.mxu0 %v4010
    %4138 = vmatprep.subr.mxu0 0.0
    %4139 = vmatpush1.msra.mxu0 %v4011
    %4140 = vmatprep.subr.mxu0 0.0
    %4141 = vmatpush1.msra.mxu0 %v4012
    %4142 = vmatprep.subr.mxu0 0.0
    %4143 = vmatpush1.msra.mxu0 %v4013
    %4144 = vmatprep.subr.mxu0 0.0
    %4145 = vmatpush1.msra.mxu0 %v4014
    %4146 = vmatprep.subr.mxu0 0.0
    %4147 = vmatpush1.msra.mxu0 %v4015
    %4148 = vmatprep.subr.mxu0 0.0
    %4149 = vmatpush1.msra.mxu0 %v4016
    %4150 = vmatprep.subr.mxu0 0.0
    %4151 = vmatpush1.msra.mxu0 %v4017
    %4152 = vmatprep.subr.mxu0 0.0
    %4153 = vmatpush1.msra.mxu0 %v4018
    %4154 = vmatprep.mubr.f32.mxu0 %v3954
    %4155 = vmatmul.mubr.f32.gmra.mrb[0].mxu0 %v3947
    %v4156 = vpop.f32.mrb[0].mxu0
    %v4157 = vadd.f32 %v4087, %v4156
    %v4158 = vpop.f32.mrb[0].mxu0
    %4159 = vdwg.mxu0
    %s4160 = scalar_lea.vmem [#allocation6], 1
    %4161 = vst.msk [vmem:[%s4160] sm:$0x1] %vm2103, %v4157
    // Predicated region
    $region26: #{tpu_custom_call.1} parent=1 // pred_check
      _
    $region27: #{tpu_custom_call.1} parent=1 // pred_check_branch
      %4163 = sbr.rel (0) target = $region29
    $region28: #{tpu_custom_call.1} parent=1 // pred_region
      %s4165 = ssub.s32 1024, 1024
      %4166 = vsyncadd [#allocation4], %s4165
      %s4167 = sshll.u32 [#allocation5], 4
      %s4168 = int_to_ptr.vmem [resolvable:$true] %s4167
      %4173 = dma.vmem_to_hbm [thread:$0]  %s4168, 1024, %s5, [#allocation4], 256, 256, 16
    $region29: #{tpu_custom_call.1} parent=1 // pred_fallthru
      _
    // Predicated region
    $region30: #{tpu_custom_call.1} parent=1 // pred_check
      _
    $region31: #{tpu_custom_call.1} parent=1 // pred_check_branch
      %4175 = sbr.rel (0) target = $region33
    $region32: #{tpu_custom_call.1} parent=1 // pred_region
      %s4177 = ssub.s32 32, 32
      %4178 = vsyncadd [#allocation7], %s4177
      %s4179 = sshll.u32 [#allocation6], 4
      %s4180 = int_to_ptr.vmem [resolvable:$true] %s4179
      %4185 = dma.vmem_to_hbm [thread:$0]  %s4180, 32, %s6, [#allocation7], 16, 16, 1
    $region33: #{tpu_custom_call.1} parent=1 // pred_fallthru
      _
    // Predicated region
    $region34: #{tpu_custom_call.1} parent=1 // pred_check
      _
    $region35: #{tpu_custom_call.1} parent=1 // pred_check_branch
      %4187 = sbr.rel (0) target = $region37
    $region36: #{tpu_custom_call.1} parent=1 // pred_region
      %4188 = dma.done [#allocation4], 1024
    $region37: #{tpu_custom_call.1} parent=1 // pred_fallthru
      _
    // Predicated region
    $region38: #{tpu_custom_call.1} parent=1 // pred_check
      _
    $region39: #{tpu_custom_call.1} parent=1 // pred_check_branch
      %4190 = sbr.rel (0) target = $region41
    $region40: #{tpu_custom_call.1} parent=1 // pred_region
      %4191 = dma.done [#allocation7], 32
    $region41: #{tpu_custom_call.1} parent=1 // pred_fallthru
      _
    %4192 = vsyncpa [#allocation3], 1
    %4193 = vsyncpa [#allocation4], 1
    %4194 = vsyncpa [#allocation7], 1

</llo_original>
